<compile_context>
chip_gen: v5e
topology: v5e:2x2
jax: 0.10.0
libtpu: 0.0.40
codegen_flags: <defaults>
</compile_context>

<pallas_src>
import math
import functools

import jax
import jax.numpy as jnp
from jax.experimental import pallas as pl
from jax.experimental.pallas import tpu as pltpu


# ---------------------------------------------------------------------------
# In-kernel math helpers
# ---------------------------------------------------------------------------
def _gelu_tanh(v):
    # TODO(synk): exact erf-GELU has no guaranteed Mosaic lowering; tanh-approx
    # GELU (EUP tanh) is used instead, max deviation ~1e-3.
    c = math.sqrt(2.0 / math.pi)
    return 0.5 * v * (1.0 + jnp.tanh(c * (v + 0.044715 * v * v * v)))


def _layernorm(v, g, b, eps=1e-6):
    mu = jnp.mean(v, axis=-1, keepdims=True)
    d = v - mu
    var = jnp.mean(d * d, axis=-1, keepdims=True)
    return d * jax.lax.rsqrt(var + eps) * g + b


# ---------------------------------------------------------------------------
# Kernel: one grid step == one batch element, static loop over the layer stack
# ---------------------------------------------------------------------------
def encoder_kernel(x_ref,
                   ln1g_ref, ln1b_ref, wqkv_ref, bqkv_ref, wo_ref, bo_ref,
                   ln2g_ref, ln2b_ref, w1_ref, b1_ref, w2_ref, b2_ref,
                   out_ref,
                   *, num_layers, seq, num_heads, head_dim):
    H = num_heads * head_dim
    bf16, f32 = jnp.bfloat16, jnp.float32

    x = x_ref[...].astype(f32)                          # (S, H) tokens, f32 residual

    def split_heads(t):                                  # (S, H) f32 -> (nh, S, hd) bf16
        t = t.reshape(seq, num_heads, head_dim)
        return jnp.transpose(t, (1, 0, 2)).astype(bf16)

    for l in range(num_layers):                          # static unroll; weights VMEM-resident
        # ---- attention sub-block ------------------------------------------
        xn = _layernorm(x, ln1g_ref[l], ln1b_ref[l])
        # fused QKV projection (1/sqrt(head_dim) pre-folded into Wq/bq; width padded to 128)
        qkv = jnp.dot(xn.astype(bf16), wqkv_ref[l],
                      preferred_element_type=f32) + bqkv_ref[l]        # (S, >=3H)
        qh = split_heads(qkv[:, 0 * H:1 * H])            # (nh, S, hd)
        kh = split_heads(qkv[:, 1 * H:2 * H])
        vh = split_heads(qkv[:, 2 * H:3 * H])

        # batched scores: contraction over hd, no explicit transpose of k
        s = jnp.einsum('hqd,hkd->hqk', qh, kh, preferred_element_type=f32)  # (nh,S,S)
        s = s - jnp.max(s, axis=-1, keepdims=True)
        p = jnp.exp(s)
        p = p / jnp.sum(p, axis=-1, keepdims=True)       # exact divide (matches reference)
        # attn_dropout is identity (inference)
        ctx = jnp.einsum('hqk,hkd->hqd', p.astype(bf16), vh,
                         preferred_element_type=f32)      # (nh, S, hd)
        ctx = jnp.transpose(ctx, (1, 0, 2)).reshape(seq, H)

        attn = jnp.dot(ctx.astype(bf16), wo_ref[l],
                       preferred_element_type=f32) + bo_ref[l]
        # proj_dropout is identity (inference)
        x = x + attn

        # ---- MLP sub-block ---------------------------------------------------
        xn2 = _layernorm(x, ln2g_ref[l], ln2b_ref[l])
        m = jnp.dot(xn2.astype(bf16), w1_ref[l],
                    preferred_element_type=f32) + b1_ref[l]            # (S, >=M)
        m = _gelu_tanh(m)
        # dropout is identity (inference)
        m = jnp.dot(m.astype(bf16), w2_ref[l],
                    preferred_element_type=f32) + b2_ref[l]
        x = x + m

    out_ref[...] = x.astype(out_ref.dtype)


# ---------------------------------------------------------------------------
# Weight packing: stack per-layer params, fuse QKV, fold scale, lane-pad, bf16
# ---------------------------------------------------------------------------
def _pad_axis(a, axis, size):
    pad = size - a.shape[axis]
    if pad <= 0:
        return a
    widths = [(0, 0)] * a.ndim
    widths[axis] = (0, pad)
    return jnp.pad(a, widths)


def pack_params(layer_params, *, num_heads, lane=128):
    H = layer_params[0]["wq"].shape[0]
    M = layer_params[0]["w1"].shape[1]
    hd = H // num_heads
    scale = 1.0 / math.sqrt(hd)
    st = lambda key: jnp.stack([p[key] for p in layer_params], axis=0)

    qkv_n = ((3 * H + lane - 1) // lane) * lane          # lane-dense fused-QKV width
    mlp_n = ((M + lane - 1) // lane) * lane              # lane-dense MLP hidden width

    wq, bq = st("wq") * scale, st("bq") * scale          # fold 1/sqrt(head_dim) into query proj
    wqkv = _pad_axis(jnp.concatenate([wq, st("wk"), st("wv")], axis=-1), -1, qkv_n)
    bqkv = _pad_axis(jnp.concatenate([bq, st("bk"), st("bv")], axis=-1), -1, qkv_n)

    return dict(
        ln1g=st("ln1g"), ln1b=st("ln1b"),
        wqkv=wqkv.astype(jnp.bfloat16), bqkv=bqkv,                       # biases stay f32
        wo=st("wo").astype(jnp.bfloat16), bo=st("bo"),
        ln2g=st("ln2g"), ln2b=st("ln2b"),
        w1=_pad_axis(st("w1"), -1, mlp_n).astype(jnp.bfloat16),
        b1=_pad_axis(st("b1"), -1, mlp_n),
        w2=_pad_axis(st("w2"), 1, mlp_n).astype(jnp.bfloat16),           # pad contraction rows
        b2=st("b2"),
    )


# ---------------------------------------------------------------------------
# Wrapper: single pallas_call, grid over batch ("parallel"), weights resident
# ---------------------------------------------------------------------------
_WEIGHT_ORDER = ["ln1g", "ln1b", "wqkv", "bqkv", "wo", "bo",
                 "ln2g", "ln2b", "w1", "b1", "w2", "b2"]


def encoder_forward(x, layer_params, *, num_heads):
    B, S, H = x.shape
    L = len(layer_params)
    hd = H // num_heads
    packed = pack_params(layer_params, num_heads=num_heads)

    x2d = x.reshape(B * S, H)                            # batch b owns rows [b*S, (b+1)*S)

    kern = functools.partial(encoder_kernel, num_layers=L, seq=S,
                             num_heads=num_heads, head_dim=hd)

    def resident(arr):
        # whole stacked tensor in VMEM; constant block index -> fetched from HBM once
        return pl.BlockSpec(arr.shape, lambda b: (0,) * arr.ndim)

    row_block = pl.BlockSpec((S, H), lambda b: (b, 0))   # one batch element's token slab

    out = pl.pallas_call(
        kern,
        out_shape=jax.ShapeDtypeStruct((B * S, H), x.dtype),
        grid=(B,),
        in_specs=[row_block] + [resident(packed[k]) for k in _WEIGHT_ORDER],
        out_specs=row_block,
        compiler_params=pltpu.CompilerParams(
            # batch elements are fully independent -> v7x's 2 TensorCores split them;
            # default scoped VMEM is ample at these sizes (weights ~50 KB total).
            dimension_semantics=("parallel",),
        ),
    )(x2d, *[packed[k] for k in _WEIGHT_ORDER])

    return out.reshape(B, S, H)


# ---------------------------------------------------------------------------
# Deterministic parameter init (weights stored as (in, out); PyTorch Linear
# computes x @ W.T + b, equivalent with W stored transposed here).
# ---------------------------------------------------------------------------
def init_block_params(key, H, M):
    ks = jax.random.split(key, 16)

    def lin_w(k, din, dout):
        return jax.random.normal(k, (din, dout), jnp.float32) / math.sqrt(din)

    def small(k, dout):
        return 0.02 * jax.random.normal(k, (1, dout), jnp.float32)

    return dict(
        ln1g=1.0 + 0.1 * jax.random.normal(ks[0], (1, H), jnp.float32),
        ln1b=0.1 * jax.random.normal(ks[1], (1, H), jnp.float32),
        wq=lin_w(ks[2], H, H), bq=small(ks[3], H),
        wk=lin_w(ks[4], H, H), bk=small(ks[5], H),
        wv=lin_w(ks[6], H, H), bv=small(ks[7], H),
        wo=lin_w(ks[8], H, H), bo=small(ks[9], H),
        ln2g=1.0 + 0.1 * jax.random.normal(ks[10], (1, H), jnp.float32),
        ln2b=0.1 * jax.random.normal(ks[11], (1, H), jnp.float32),
        w1=lin_w(ks[12], H, M), b1=small(ks[13], M),
        w2=lin_w(ks[14], M, H), b2=small(ks[15], H),
    )


# ---------------------------------------------------------------------------
# References
#   1) numerics-matched: mirrors the kernel's bf16-MXU / padded-QKV / tanh-GELU /
#      exact-divide-softmax math exactly (tight check)
#   2) exact f32 / erf-GELU reference mirroring the PyTorch module (loose sanity)
# ---------------------------------------------------------------------------
def ref_encoder_matched(x, packed, num_heads):
    B, S, H = x.shape
    hd = H // num_heads
    bf16, f32 = jnp.bfloat16, jnp.float32
    mm = lambda a, w: jnp.dot(a.astype(bf16), w, preferred_element_type=f32)

    x2d = x.reshape(B * S, H).astype(f32)
    L = packed["wqkv"].shape[0]
    for l in range(L):
        p = {kk: vv[l] for kk, vv in packed.items()}
        xn = _layernorm(x2d, p["ln1g"], p["ln1b"])
        qkv = mm(xn, p["wqkv"]) + p["bqkv"]
        q, k, v = qkv[:, :H], qkv[:, H:2 * H], qkv[:, 2 * H:3 * H]

        def heads(t):
            return t.reshape(B, S, num_heads, hd).transpose(0, 2, 1, 3).astype(bf16)

        qh, kh, vh = heads(q), heads(k), heads(v)
        s = jnp.einsum("bhqd,bhkd->bhqk", qh, kh, preferred_element_type=f32)
        s = s - jnp.max(s, axis=-1, keepdims=True)
        pr = jnp.exp(s)
        pr = pr / jnp.sum(pr, axis=-1, keepdims=True)
        ctx = jnp.einsum("bhqk,bhkd->bhqd", pr.astype(bf16), vh,
                         preferred_element_type=f32)
        ctx = ctx.transpose(0, 2, 1, 3).reshape(B * S, H)
        x2d = x2d + (mm(ctx, p["wo"]) + p["bo"])

        xn2 = _layernorm(x2d, p["ln2g"], p["ln2b"])
        m = _gelu_tanh(mm(xn2, p["w1"]) + p["b1"])
        m = mm(m, p["w2"]) + p["b2"]
        x2d = x2d + m
    return x2d.reshape(B, S, H)


def ref_block_exact(x, p, num_heads):
    B, S, H = x.shape
    hd = H // num_heads

    def ln(v, g, b):
        mu = v.mean(-1, keepdims=True)
        var = ((v - mu) ** 2).mean(-1, keepdims=True)
        return (v - mu) / jnp.sqrt(var + 1e-6) * g + b

    h = x
    xn = ln(x, p["ln1g"][0], p["ln1b"][0])
    q = xn @ p["wq"] + p["bq"][0]
    k = xn @ p["wk"] + p["bk"][0]
    v = xn @ p["wv"] + p["bv"][0]

    def split(t):
        return t.reshape(B, S, num_heads, hd).transpose(0, 2, 1, 3)

    qh, kh, vh = split(q), split(k), split(v)
    s = jnp.einsum("bhqd,bhkd->bhqk", qh, kh) / math.sqrt(hd)
    pr = jax.nn.softmax(s, axis=-1)
    ctx = jnp.einsum("bhqk,bhkd->bhqd", pr, vh).transpose(0, 2, 1, 3).reshape(B, S, H)
    x = ctx @ p["wo"] + p["bo"][0] + h
    h = x
    xn2 = ln(x, p["ln2g"][0], p["ln2b"][0])
    m = jax.nn.gelu(xn2 @ p["w1"] + p["b1"][0], approximate=False)
    m = m @ p["w2"] + p["b2"][0]
    return m + h


def ref_encoder_exact(x, layer_params, num_heads):
    for p in layer_params:
        x = ref_block_exact(x, p, num_heads)
    return x


# ---------------------------------------------------------------------------
if __name__ == "__main__":
    # toy config: hidden_size=32, num_heads=4, mlp_dim=64, num_layers=2
    # -> Encoder builds num_layers + 1 = 3 Blocks
    B, S, H, M = 2, 8, 32, 64
    NUM_HEADS, NUM_LAYERS = 4, 2

    root = jax.random.PRNGKey(0)
    kx, kp = jax.random.split(root)
    x = jax.random.normal(kx, (B, S, H), jnp.float32)
    layer_keys = jax.random.split(kp, NUM_LAYERS + 1)
    layer_params = [init_block_params(k, H, M) for k in layer_keys]

    out = jax.block_until_ready(encoder_forward(x, layer_params, num_heads=NUM_HEADS))
    assert out.shape == (B, S, H)
    assert bool(jnp.isfinite(out).all())

    # 1) tight check vs the plain-JAX mirror of the kernel's exact numerics
    packed = pack_params(layer_params, num_heads=NUM_HEADS)
    ref_m = ref_encoder_matched(x, packed, NUM_HEADS)
    diff_m = float(jnp.max(jnp.abs(out - ref_m)))
    assert diff_m < 5e-3, f"mismatch vs bf16-matched reference: max|diff|={diff_m}"

    # 2) loose sanity check vs the exact f32 / erf-GELU PyTorch-semantics reference
    #    (difference is accumulated bf16 operand rounding + tanh-GELU approximation)
    ref_e = ref_encoder_exact(x, layer_params, NUM_HEADS)
    diff_e = float(jnp.max(jnp.abs(out - ref_e)))
    assert diff_e < 2.5e-1, f"mismatch vs exact f32 reference: max|diff|={diff_e}"

    print("KERNEL_OK")
</pallas_src>

<mosaic_0001>
module attributes {stable_mosaic.version = 11 : i64} {
  func.func @encoder_kernel(%arg0: i32, %arg1: memref<8x32xf32, #tpu.memory_space<vmem>>, %arg2: memref<3x1x32xf32, #tpu.memory_space<vmem>>, %arg3: memref<3x1x32xf32, #tpu.memory_space<vmem>>, %arg4: memref<3x32x128xbf16, #tpu.memory_space<vmem>>, %arg5: memref<3x1x128xf32, #tpu.memory_space<vmem>>, %arg6: memref<3x32x32xbf16, #tpu.memory_space<vmem>>, %arg7: memref<3x1x32xf32, #tpu.memory_space<vmem>>, %arg8: memref<3x1x32xf32, #tpu.memory_space<vmem>>, %arg9: memref<3x1x32xf32, #tpu.memory_space<vmem>>, %arg10: memref<3x32x128xbf16, #tpu.memory_space<vmem>>, %arg11: memref<3x1x128xf32, #tpu.memory_space<vmem>>, %arg12: memref<3x128x32xbf16, #tpu.memory_space<vmem>>, %arg13: memref<3x1x32xf32, #tpu.memory_space<vmem>>, %arg14: memref<8x32xf32, #tpu.memory_space<vmem>>) attributes {dimension_semantics = [#tpu.dimension_semantics<parallel>], iteration_bounds = array<i64: 2>, scalar_prefetch = 0 : i64, scratch_operands = 0 : i64, tpu.core_type = #tpu.core_type<tc>, window_params = [{transform_indices = @transform_0, window_bounds = array<i64: 8, 32>}, {pipeline_mode = #tpu.pipeline_mode<synchronous>, transform_indices = @transform_1, window_bounds = array<i64: 3, 1, 32>}, {pipeline_mode = #tpu.pipeline_mode<synchronous>, transform_indices = @transform_2, window_bounds = array<i64: 3, 1, 32>}, {pipeline_mode = #tpu.pipeline_mode<synchronous>, transform_indices = @transform_3, window_bounds = array<i64: 3, 32, 128>}, {pipeline_mode = #tpu.pipeline_mode<synchronous>, transform_indices = @transform_4, window_bounds = array<i64: 3, 1, 128>}, {pipeline_mode = #tpu.pipeline_mode<synchronous>, transform_indices = @transform_5, window_bounds = array<i64: 3, 32, 32>}, {pipeline_mode = #tpu.pipeline_mode<synchronous>, transform_indices = @transform_6, window_bounds = array<i64: 3, 1, 32>}, {pipeline_mode = #tpu.pipeline_mode<synchronous>, transform_indices = @transform_7, window_bounds = array<i64: 3, 1, 32>}, {pipeline_mode = #tpu.pipeline_mode<synchronous>, transform_indices = @transform_8, window_bounds = array<i64: 3, 1, 32>}, {pipeline_mode = #tpu.pipeline_mode<synchronous>, transform_indices = @transform_9, window_bounds = array<i64: 3, 32, 128>}, {pipeline_mode = #tpu.pipeline_mode<synchronous>, transform_indices = @transform_10, window_bounds = array<i64: 3, 1, 128>}, {pipeline_mode = #tpu.pipeline_mode<synchronous>, transform_indices = @transform_11, window_bounds = array<i64: 3, 128, 32>}, {pipeline_mode = #tpu.pipeline_mode<synchronous>, transform_indices = @transform_12, window_bounds = array<i64: 3, 1, 32>}, {transform_indices = @transform_13, window_bounds = array<i64: 8, 32>}]} {
    %c0 = arith.constant 0 : index
    %c0_0 = arith.constant 0 : index
    %0 = vector.load %arg1[%c0, %c0_0] : memref<8x32xf32, #tpu.memory_space<vmem>>, vector<8x32xf32>
    %c0_1 = arith.constant 0 : index
    %c0_2 = arith.constant 0 : index
    %c0_3 = arith.constant 0 : index
    %1 = vector.load %arg2[%c0_1, %c0_2, %c0_3] : memref<3x1x32xf32, #tpu.memory_space<vmem>>, vector<1x1x32xf32>
    %2 = vector.shape_cast %1 : vector<1x1x32xf32> to vector<1x32xf32>
    %c0_4 = arith.constant 0 : index
    %c0_5 = arith.constant 0 : index
    %c0_6 = arith.constant 0 : index
    %3 = vector.load %arg3[%c0_4, %c0_5, %c0_6] : memref<3x1x32xf32, #tpu.memory_space<vmem>>, vector<1x1x32xf32>
    %4 = vector.shape_cast %3 : vector<1x1x32xf32> to vector<1x32xf32>
    %cst = arith.constant dense<0.000000e+00> : vector<8xf32>
    %5 = vector.multi_reduction <add>, %0, %cst [1] : vector<8x32xf32> to vector<8xf32>
    %6 = vector.shape_cast %5 : vector<8xf32> to vector<8x1xf32>
    %cst_7 = arith.constant 3.200000e+01 : f32
    %7 = vector.broadcast %cst_7 : f32 to vector<8x1xf32>
    %8 = arith.divf %6, %7 : vector<8x1xf32>
    %9 = vector.broadcast %8 : vector<8x1xf32> to vector<8x32xf32>
    %10 = arith.subf %0, %9 : vector<8x32xf32>
    %11 = arith.mulf %10, %10 : vector<8x32xf32>
    %cst_8 = arith.constant dense<0.000000e+00> : vector<8xf32>
    %12 = vector.multi_reduction <add>, %11, %cst_8 [1] : vector<8x32xf32> to vector<8xf32>
    %13 = vector.shape_cast %12 : vector<8xf32> to vector<8x1xf32>
    %cst_9 = arith.constant 3.200000e+01 : f32
    %14 = vector.broadcast %cst_9 : f32 to vector<8x1xf32>
    %15 = arith.divf %13, %14 : vector<8x1xf32>
    %cst_10 = arith.constant 9.99999997E-7 : f32
    %16 = vector.broadcast %cst_10 : f32 to vector<8x1xf32>
    %17 = arith.addf %15, %16 : vector<8x1xf32>
    %18 = math.rsqrt %17 : vector<8x1xf32>
    %19 = vector.broadcast %18 : vector<8x1xf32> to vector<8x32xf32>
    %20 = arith.mulf %10, %19 : vector<8x32xf32>
    %21 = vector.broadcast %2 : vector<1x32xf32> to vector<8x32xf32>
    %22 = arith.mulf %20, %21 : vector<8x32xf32>
    %23 = vector.broadcast %4 : vector<1x32xf32> to vector<8x32xf32>
    %24 = arith.addf %22, %23 : vector<8x32xf32>
    %25 = arith.truncf %24 : vector<8x32xf32> to vector<8x32xbf16>
    %c0_11 = arith.constant 0 : index
    %c0_12 = arith.constant 0 : index
    %c0_13 = arith.constant 0 : index
    %26 = vector.load %arg4[%c0_11, %c0_12, %c0_13] : memref<3x32x128xbf16, #tpu.memory_space<vmem>>, vector<1x32x128xbf16>
    %27 = vector.shape_cast %26 : vector<1x32x128xbf16> to vector<32x128xbf16>
    %cst_14 = arith.constant dense<0.000000e+00> : vector<8x128xf32>
    %28 = tpu.matmul %25, %27, %cst_14 {dimension_numbers = #tpu.dot_dimension_numbers<[1], [0], [0], [1], [0, 0, 1, 1], [], []>} : vector<8x32xbf16>, vector<32x128xbf16>, vector<8x128xf32> -> vector<8x128xf32>
    %c0_15 = arith.constant 0 : index
    %c0_16 = arith.constant 0 : index
    %c0_17 = arith.constant 0 : index
    %29 = vector.load %arg5[%c0_15, %c0_16, %c0_17] : memref<3x1x128xf32, #tpu.memory_space<vmem>>, vector<1x1x128xf32>
    %30 = vector.shape_cast %29 : vector<1x1x128xf32> to vector<1x128xf32>
    %31 = vector.broadcast %30 : vector<1x128xf32> to vector<8x128xf32>
    %32 = arith.addf %28, %31 : vector<8x128xf32>
    %33 = vector.extract_strided_slice %32 {offsets = [0, 0], sizes = [8, 32], strides = [1, 1]} : vector<8x128xf32> to vector<8x32xf32>
    %34 = vector.shape_cast %33 : vector<8x32xf32> to vector<8x4x8xf32>
    %35 = tpu.transpose %34, [1, 0, 2] : vector<8x4x8xf32> -> vector<4x8x8xf32>
    %36 = arith.truncf %35 : vector<4x8x8xf32> to vector<4x8x8xbf16>
    %37 = vector.extract_strided_slice %32 {offsets = [0, 32], sizes = [8, 32], strides = [1, 1]} : vector<8x128xf32> to vector<8x32xf32>
    %38 = vector.shape_cast %37 : vector<8x32xf32> to vector<8x4x8xf32>
    %39 = tpu.transpose %38, [1, 0, 2] : vector<8x4x8xf32> -> vector<4x8x8xf32>
    %40 = arith.truncf %39 : vector<4x8x8xf32> to vector<4x8x8xbf16>
    %41 = vector.extract_strided_slice %32 {offsets = [0, 64], sizes = [8, 32], strides = [1, 1]} : vector<8x128xf32> to vector<8x32xf32>
    %42 = vector.shape_cast %41 : vector<8x32xf32> to vector<8x4x8xf32>
    %43 = tpu.transpose %42, [1, 0, 2] : vector<8x4x8xf32> -> vector<4x8x8xf32>
    %44 = arith.truncf %43 : vector<4x8x8xf32> to vector<4x8x8xbf16>
    "tpu.trace_start"() <{level = 10 : i32, message = "hqd,hkd->hqk"}> : () -> ()
    %cst_18 = arith.constant dense<0.000000e+00> : vector<4x8x8xf32>
    %45 = tpu.matmul %36, %40, %cst_18 {dimension_numbers = #tpu.dot_dimension_numbers<[2], [2], [1], [1], [0, 0, 0, 1, 1, 1], [0], [0]>} : vector<4x8x8xbf16>, vector<4x8x8xbf16>, vector<4x8x8xf32> -> vector<4x8x8xf32>
    "tpu.trace_stop"() : () -> ()
    %cst_19 = arith.constant dense<0xFF800000> : vector<4x8xf32>
    %46 = vector.multi_reduction <maximumf>, %45, %cst_19 [2] : vector<4x8x8xf32> to vector<4x8xf32>
    %47 = vector.shape_cast %46 : vector<4x8xf32> to vector<4x8x1xf32>
    %48 = vector.broadcast %47 : vector<4x8x1xf32> to vector<4x8x8xf32>
    %49 = arith.subf %45, %48 : vector<4x8x8xf32>
    %50 = math.exp %49 : vector<4x8x8xf32>
    %cst_20 = arith.constant dense<0.000000e+00> : vector<4x8xf32>
    %51 = vector.multi_reduction <add>, %50, %cst_20 [2] : vector<4x8x8xf32> to vector<4x8xf32>
    %52 = vector.shape_cast %51 : vector<4x8xf32> to vector<4x8x1xf32>
    %53 = vector.broadcast %52 : vector<4x8x1xf32> to vector<4x8x8xf32>
    %54 = arith.divf %50, %53 : vector<4x8x8xf32>
    %55 = arith.truncf %54 : vector<4x8x8xf32> to vector<4x8x8xbf16>
    "tpu.trace_start"() <{level = 10 : i32, message = "hqk,hkd->hqd"}> : () -> ()
    %cst_21 = arith.constant dense<0.000000e+00> : vector<4x8x8xf32>
    %56 = tpu.matmul %55, %44, %cst_21 {dimension_numbers = #tpu.dot_dimension_numbers<[2], [1], [1], [2], [0, 0, 0, 1, 1, 2], [0], [0]>} : vector<4x8x8xbf16>, vector<4x8x8xbf16>, vector<4x8x8xf32> -> vector<4x8x8xf32>
    "tpu.trace_stop"() : () -> ()
    %57 = tpu.transpose %56, [1, 0, 2] : vector<4x8x8xf32> -> vector<8x4x8xf32>
    %58 = vector.shape_cast %57 : vector<8x4x8xf32> to vector<8x32xf32>
    %59 = arith.truncf %58 : vector<8x32xf32> to vector<8x32xbf16>
    %c0_22 = arith.constant 0 : index
    %c0_23 = arith.constant 0 : index
    %c0_24 = arith.constant 0 : index
    %60 = vector.load %arg6[%c0_22, %c0_23, %c0_24] : memref<3x32x32xbf16, #tpu.memory_space<vmem>>, vector<1x32x32xbf16>
    %61 = vector.shape_cast %60 : vector<1x32x32xbf16> to vector<32x32xbf16>
    %cst_25 = arith.constant dense<0.000000e+00> : vector<8x32xf32>
    %62 = tpu.matmul %59, %61, %cst_25 {dimension_numbers = #tpu.dot_dimension_numbers<[1], [0], [0], [1], [0, 0, 1, 1], [], []>} : vector<8x32xbf16>, vector<32x32xbf16>, vector<8x32xf32> -> vector<8x32xf32>
    %c0_26 = arith.constant 0 : index
    %c0_27 = arith.constant 0 : index
    %c0_28 = arith.constant 0 : index
    %63 = vector.load %arg7[%c0_26, %c0_27, %c0_28] : memref<3x1x32xf32, #tpu.memory_space<vmem>>, vector<1x1x32xf32>
    %64 = vector.shape_cast %63 : vector<1x1x32xf32> to vector<1x32xf32>
    %65 = vector.broadcast %64 : vector<1x32xf32> to vector<8x32xf32>
    %66 = arith.addf %62, %65 : vector<8x32xf32>
    %67 = arith.addf %0, %66 : vector<8x32xf32>
    %c0_29 = arith.constant 0 : index
    %c0_30 = arith.constant 0 : index
    %c0_31 = arith.constant 0 : index
    %68 = vector.load %arg8[%c0_29, %c0_30, %c0_31] : memref<3x1x32xf32, #tpu.memory_space<vmem>>, vector<1x1x32xf32>
    %69 = vector.shape_cast %68 : vector<1x1x32xf32> to vector<1x32xf32>
    %c0_32 = arith.constant 0 : index
    %c0_33 = arith.constant 0 : index
    %c0_34 = arith.constant 0 : index
    %70 = vector.load %arg9[%c0_32, %c0_33, %c0_34] : memref<3x1x32xf32, #tpu.memory_space<vmem>>, vector<1x1x32xf32>
    %71 = vector.shape_cast %70 : vector<1x1x32xf32> to vector<1x32xf32>
    %cst_35 = arith.constant dense<0.000000e+00> : vector<8xf32>
    %72 = vector.multi_reduction <add>, %67, %cst_35 [1] : vector<8x32xf32> to vector<8xf32>
    %73 = vector.shape_cast %72 : vector<8xf32> to vector<8x1xf32>
    %cst_36 = arith.constant 3.200000e+01 : f32
    %74 = vector.broadcast %cst_36 : f32 to vector<8x1xf32>
    %75 = arith.divf %73, %74 : vector<8x1xf32>
    %76 = vector.broadcast %75 : vector<8x1xf32> to vector<8x32xf32>
    %77 = arith.subf %67, %76 : vector<8x32xf32>
    %78 = arith.mulf %77, %77 : vector<8x32xf32>
    %cst_37 = arith.constant dense<0.000000e+00> : vector<8xf32>
    %79 = vector.multi_reduction <add>, %78, %cst_37 [1] : vector<8x32xf32> to vector<8xf32>
    %80 = vector.shape_cast %79 : vector<8xf32> to vector<8x1xf32>
    %cst_38 = arith.constant 3.200000e+01 : f32
    %81 = vector.broadcast %cst_38 : f32 to vector<8x1xf32>
    %82 = arith.divf %80, %81 : vector<8x1xf32>
    %cst_39 = arith.constant 9.99999997E-7 : f32
    %83 = vector.broadcast %cst_39 : f32 to vector<8x1xf32>
    %84 = arith.addf %82, %83 : vector<8x1xf32>
    %85 = math.rsqrt %84 : vector<8x1xf32>
    %86 = vector.broadcast %85 : vector<8x1xf32> to vector<8x32xf32>
    %87 = arith.mulf %77, %86 : vector<8x32xf32>
    %88 = vector.broadcast %69 : vector<1x32xf32> to vector<8x32xf32>
    %89 = arith.mulf %87, %88 : vector<8x32xf32>
    %90 = vector.broadcast %71 : vector<1x32xf32> to vector<8x32xf32>
    %91 = arith.addf %89, %90 : vector<8x32xf32>
    %92 = arith.truncf %91 : vector<8x32xf32> to vector<8x32xbf16>
    %c0_40 = arith.constant 0 : index
    %c0_41 = arith.constant 0 : index
    %c0_42 = arith.constant 0 : index
    %93 = vector.load %arg10[%c0_40, %c0_41, %c0_42] : memref<3x32x128xbf16, #tpu.memory_space<vmem>>, vector<1x32x128xbf16>
    %94 = vector.shape_cast %93 : vector<1x32x128xbf16> to vector<32x128xbf16>
    %cst_43 = arith.constant dense<0.000000e+00> : vector<8x128xf32>
    %95 = tpu.matmul %92, %94, %cst_43 {dimension_numbers = #tpu.dot_dimension_numbers<[1], [0], [0], [1], [0, 0, 1, 1], [], []>} : vector<8x32xbf16>, vector<32x128xbf16>, vector<8x128xf32> -> vector<8x128xf32>
    %c0_44 = arith.constant 0 : index
    %c0_45 = arith.constant 0 : index
    %c0_46 = arith.constant 0 : index
    %96 = vector.load %arg11[%c0_44, %c0_45, %c0_46] : memref<3x1x128xf32, #tpu.memory_space<vmem>>, vector<1x1x128xf32>
    %97 = vector.shape_cast %96 : vector<1x1x128xf32> to vector<1x128xf32>
    %98 = vector.broadcast %97 : vector<1x128xf32> to vector<8x128xf32>
    %99 = arith.addf %95, %98 : vector<8x128xf32>
    %cst_47 = arith.constant 5.000000e-01 : f32
    %100 = vector.broadcast %cst_47 : f32 to vector<8x128xf32>
    %101 = arith.mulf %100, %99 : vector<8x128xf32>
    %cst_48 = arith.constant 4.471500e-02 : f32
    %102 = vector.broadcast %cst_48 : f32 to vector<8x128xf32>
    %103 = arith.mulf %102, %99 : vector<8x128xf32>
    %104 = arith.mulf %103, %99 : vector<8x128xf32>
    %105 = arith.mulf %104, %99 : vector<8x128xf32>
    %106 = arith.addf %99, %105 : vector<8x128xf32>
    %cst_49 = arith.constant 0.797884583 : f32
    %107 = vector.broadcast %cst_49 : f32 to vector<8x128xf32>
    %108 = arith.mulf %107, %106 : vector<8x128xf32>
    %109 = math.tanh %108 : vector<8x128xf32>
    %cst_50 = arith.constant 1.000000e+00 : f32
    %110 = vector.broadcast %cst_50 : f32 to vector<8x128xf32>
    %111 = arith.addf %110, %109 : vector<8x128xf32>
    %112 = arith.mulf %101, %111 : vector<8x128xf32>
    %113 = arith.truncf %112 : vector<8x128xf32> to vector<8x128xbf16>
    %c0_51 = arith.constant 0 : index
    %c0_52 = arith.constant 0 : index
    %c0_53 = arith.constant 0 : index
    %114 = vector.load %arg12[%c0_51, %c0_52, %c0_53] : memref<3x128x32xbf16, #tpu.memory_space<vmem>>, vector<1x128x32xbf16>
    %115 = vector.shape_cast %114 : vector<1x128x32xbf16> to vector<128x32xbf16>
    %cst_54 = arith.constant dense<0.000000e+00> : vector<8x32xf32>
    %116 = tpu.matmul %113, %115, %cst_54 {dimension_numbers = #tpu.dot_dimension_numbers<[1], [0], [0], [1], [0, 0, 1, 1], [], []>} : vector<8x128xbf16>, vector<128x32xbf16>, vector<8x32xf32> -> vector<8x32xf32>
    %c0_55 = arith.constant 0 : index
    %c0_56 = arith.constant 0 : index
    %c0_57 = arith.constant 0 : index
    %117 = vector.load %arg13[%c0_55, %c0_56, %c0_57] : memref<3x1x32xf32, #tpu.memory_space<vmem>>, vector<1x1x32xf32>
    %118 = vector.shape_cast %117 : vector<1x1x32xf32> to vector<1x32xf32>
    %119 = vector.broadcast %118 : vector<1x32xf32> to vector<8x32xf32>
    %120 = arith.addf %116, %119 : vector<8x32xf32>
    %121 = arith.addf %67, %120 : vector<8x32xf32>
    %c1 = arith.constant 1 : index
    %c0_58 = arith.constant 0 : index
    %c0_59 = arith.constant 0 : index
    %122 = vector.load %arg2[%c1, %c0_58, %c0_59] : memref<3x1x32xf32, #tpu.memory_space<vmem>>, vector<1x1x32xf32>
    %123 = vector.shape_cast %122 : vector<1x1x32xf32> to vector<1x32xf32>
    %c1_60 = arith.constant 1 : index
    %c0_61 = arith.constant 0 : index
    %c0_62 = arith.constant 0 : index
    %124 = vector.load %arg3[%c1_60, %c0_61, %c0_62] : memref<3x1x32xf32, #tpu.memory_space<vmem>>, vector<1x1x32xf32>
    %125 = vector.shape_cast %124 : vector<1x1x32xf32> to vector<1x32xf32>
    %cst_63 = arith.constant dense<0.000000e+00> : vector<8xf32>
    %126 = vector.multi_reduction <add>, %121, %cst_63 [1] : vector<8x32xf32> to vector<8xf32>
    %127 = vector.shape_cast %126 : vector<8xf32> to vector<8x1xf32>
    %cst_64 = arith.constant 3.200000e+01 : f32
    %128 = vector.broadcast %cst_64 : f32 to vector<8x1xf32>
    %129 = arith.divf %127, %128 : vector<8x1xf32>
    %130 = vector.broadcast %129 : vector<8x1xf32> to vector<8x32xf32>
    %131 = arith.subf %121, %130 : vector<8x32xf32>
    %132 = arith.mulf %131, %131 : vector<8x32xf32>
    %cst_65 = arith.constant dense<0.000000e+00> : vector<8xf32>
    %133 = vector.multi_reduction <add>, %132, %cst_65 [1] : vector<8x32xf32> to vector<8xf32>
    %134 = vector.shape_cast %133 : vector<8xf32> to vector<8x1xf32>
    %cst_66 = arith.constant 3.200000e+01 : f32
    %135 = vector.broadcast %cst_66 : f32 to vector<8x1xf32>
    %136 = arith.divf %134, %135 : vector<8x1xf32>
    %cst_67 = arith.constant 9.99999997E-7 : f32
    %137 = vector.broadcast %cst_67 : f32 to vector<8x1xf32>
    %138 = arith.addf %136, %137 : vector<8x1xf32>
    %139 = math.rsqrt %138 : vector<8x1xf32>
    %140 = vector.broadcast %139 : vector<8x1xf32> to vector<8x32xf32>
    %141 = arith.mulf %131, %140 : vector<8x32xf32>
    %142 = vector.broadcast %123 : vector<1x32xf32> to vector<8x32xf32>
    %143 = arith.mulf %141, %142 : vector<8x32xf32>
    %144 = vector.broadcast %125 : vector<1x32xf32> to vector<8x32xf32>
    %145 = arith.addf %143, %144 : vector<8x32xf32>
    %146 = arith.truncf %145 : vector<8x32xf32> to vector<8x32xbf16>
    %c1_68 = arith.constant 1 : index
    %c0_69 = arith.constant 0 : index
    %c0_70 = arith.constant 0 : index
    %147 = vector.load %arg4[%c1_68, %c0_69, %c0_70] : memref<3x32x128xbf16, #tpu.memory_space<vmem>>, vector<1x32x128xbf16>
    %148 = vector.shape_cast %147 : vector<1x32x128xbf16> to vector<32x128xbf16>
    %cst_71 = arith.constant dense<0.000000e+00> : vector<8x128xf32>
    %149 = tpu.matmul %146, %148, %cst_71 {dimension_numbers = #tpu.dot_dimension_numbers<[1], [0], [0], [1], [0, 0, 1, 1], [], []>} : vector<8x32xbf16>, vector<32x128xbf16>, vector<8x128xf32> -> vector<8x128xf32>
    %c1_72 = arith.constant 1 : index
    %c0_73 = arith.constant 0 : index
    %c0_74 = arith.constant 0 : index
    %150 = vector.load %arg5[%c1_72, %c0_73, %c0_74] : memref<3x1x128xf32, #tpu.memory_space<vmem>>, vector<1x1x128xf32>
    %151 = vector.shape_cast %150 : vector<1x1x128xf32> to vector<1x128xf32>
    %152 = vector.broadcast %151 : vector<1x128xf32> to vector<8x128xf32>
    %153 = arith.addf %149, %152 : vector<8x128xf32>
    %154 = vector.extract_strided_slice %153 {offsets = [0, 0], sizes = [8, 32], strides = [1, 1]} : vector<8x128xf32> to vector<8x32xf32>
    %155 = vector.shape_cast %154 : vector<8x32xf32> to vector<8x4x8xf32>
    %156 = tpu.transpose %155, [1, 0, 2] : vector<8x4x8xf32> -> vector<4x8x8xf32>
    %157 = arith.truncf %156 : vector<4x8x8xf32> to vector<4x8x8xbf16>
    %158 = vector.extract_strided_slice %153 {offsets = [0, 32], sizes = [8, 32], strides = [1, 1]} : vector<8x128xf32> to vector<8x32xf32>
    %159 = vector.shape_cast %158 : vector<8x32xf32> to vector<8x4x8xf32>
    %160 = tpu.transpose %159, [1, 0, 2] : vector<8x4x8xf32> -> vector<4x8x8xf32>
    %161 = arith.truncf %160 : vector<4x8x8xf32> to vector<4x8x8xbf16>
    %162 = vector.extract_strided_slice %153 {offsets = [0, 64], sizes = [8, 32], strides = [1, 1]} : vector<8x128xf32> to vector<8x32xf32>
    %163 = vector.shape_cast %162 : vector<8x32xf32> to vector<8x4x8xf32>
    %164 = tpu.transpose %163, [1, 0, 2] : vector<8x4x8xf32> -> vector<4x8x8xf32>
    %165 = arith.truncf %164 : vector<4x8x8xf32> to vector<4x8x8xbf16>
    "tpu.trace_start"() <{level = 10 : i32, message = "hqd,hkd->hqk"}> : () -> ()
    %cst_75 = arith.constant dense<0.000000e+00> : vector<4x8x8xf32>
    %166 = tpu.matmul %157, %161, %cst_75 {dimension_numbers = #tpu.dot_dimension_numbers<[2], [2], [1], [1], [0, 0, 0, 1, 1, 1], [0], [0]>} : vector<4x8x8xbf16>, vector<4x8x8xbf16>, vector<4x8x8xf32> -> vector<4x8x8xf32>
    "tpu.trace_stop"() : () -> ()
    %cst_76 = arith.constant dense<0xFF800000> : vector<4x8xf32>
    %167 = vector.multi_reduction <maximumf>, %166, %cst_76 [2] : vector<4x8x8xf32> to vector<4x8xf32>
    %168 = vector.shape_cast %167 : vector<4x8xf32> to vector<4x8x1xf32>
    %169 = vector.broadcast %168 : vector<4x8x1xf32> to vector<4x8x8xf32>
    %170 = arith.subf %166, %169 : vector<4x8x8xf32>
    %171 = math.exp %170 : vector<4x8x8xf32>
    %cst_77 = arith.constant dense<0.000000e+00> : vector<4x8xf32>
    %172 = vector.multi_reduction <add>, %171, %cst_77 [2] : vector<4x8x8xf32> to vector<4x8xf32>
    %173 = vector.shape_cast %172 : vector<4x8xf32> to vector<4x8x1xf32>
    %174 = vector.broadcast %173 : vector<4x8x1xf32> to vector<4x8x8xf32>
    %175 = arith.divf %171, %174 : vector<4x8x8xf32>
    %176 = arith.truncf %175 : vector<4x8x8xf32> to vector<4x8x8xbf16>
    "tpu.trace_start"() <{level = 10 : i32, message = "hqk,hkd->hqd"}> : () -> ()
    %cst_78 = arith.constant dense<0.000000e+00> : vector<4x8x8xf32>
    %177 = tpu.matmul %176, %165, %cst_78 {dimension_numbers = #tpu.dot_dimension_numbers<[2], [1], [1], [2], [0, 0, 0, 1, 1, 2], [0], [0]>} : vector<4x8x8xbf16>, vector<4x8x8xbf16>, vector<4x8x8xf32> -> vector<4x8x8xf32>
    "tpu.trace_stop"() : () -> ()
    %178 = tpu.transpose %177, [1, 0, 2] : vector<4x8x8xf32> -> vector<8x4x8xf32>
    %179 = vector.shape_cast %178 : vector<8x4x8xf32> to vector<8x32xf32>
    %180 = arith.truncf %179 : vector<8x32xf32> to vector<8x32xbf16>
    %c1_79 = arith.constant 1 : index
    %c0_80 = arith.constant 0 : index
    %c0_81 = arith.constant 0 : index
    %181 = vector.load %arg6[%c1_79, %c0_80, %c0_81] : memref<3x32x32xbf16, #tpu.memory_space<vmem>>, vector<1x32x32xbf16>
    %182 = vector.shape_cast %181 : vector<1x32x32xbf16> to vector<32x32xbf16>
    %cst_82 = arith.constant dense<0.000000e+00> : vector<8x32xf32>
    %183 = tpu.matmul %180, %182, %cst_82 {dimension_numbers = #tpu.dot_dimension_numbers<[1], [0], [0], [1], [0, 0, 1, 1], [], []>} : vector<8x32xbf16>, vector<32x32xbf16>, vector<8x32xf32> -> vector<8x32xf32>
    %c1_83 = arith.constant 1 : index
    %c0_84 = arith.constant 0 : index
    %c0_85 = arith.constant 0 : index
    %184 = vector.load %arg7[%c1_83, %c0_84, %c0_85] : memref<3x1x32xf32, #tpu.memory_space<vmem>>, vector<1x1x32xf32>
    %185 = vector.shape_cast %184 : vector<1x1x32xf32> to vector<1x32xf32>
    %186 = vector.broadcast %185 : vector<1x32xf32> to vector<8x32xf32>
    %187 = arith.addf %183, %186 : vector<8x32xf32>
    %188 = arith.addf %121, %187 : vector<8x32xf32>
    %c1_86 = arith.constant 1 : index
    %c0_87 = arith.constant 0 : index
    %c0_88 = arith.constant 0 : index
    %189 = vector.load %arg8[%c1_86, %c0_87, %c0_88] : memref<3x1x32xf32, #tpu.memory_space<vmem>>, vector<1x1x32xf32>
    %190 = vector.shape_cast %189 : vector<1x1x32xf32> to vector<1x32xf32>
    %c1_89 = arith.constant 1 : index
    %c0_90 = arith.constant 0 : index
    %c0_91 = arith.constant 0 : index
    %191 = vector.load %arg9[%c1_89, %c0_90, %c0_91] : memref<3x1x32xf32, #tpu.memory_space<vmem>>, vector<1x1x32xf32>
    %192 = vector.shape_cast %191 : vector<1x1x32xf32> to vector<1x32xf32>
    %cst_92 = arith.constant dense<0.000000e+00> : vector<8xf32>
    %193 = vector.multi_reduction <add>, %188, %cst_92 [1] : vector<8x32xf32> to vector<8xf32>
    %194 = vector.shape_cast %193 : vector<8xf32> to vector<8x1xf32>
    %cst_93 = arith.constant 3.200000e+01 : f32
    %195 = vector.broadcast %cst_93 : f32 to vector<8x1xf32>
    %196 = arith.divf %194, %195 : vector<8x1xf32>
    %197 = vector.broadcast %196 : vector<8x1xf32> to vector<8x32xf32>
    %198 = arith.subf %188, %197 : vector<8x32xf32>
    %199 = arith.mulf %198, %198 : vector<8x32xf32>
    %cst_94 = arith.constant dense<0.000000e+00> : vector<8xf32>
    %200 = vector.multi_reduction <add>, %199, %cst_94 [1] : vector<8x32xf32> to vector<8xf32>
    %201 = vector.shape_cast %200 : vector<8xf32> to vector<8x1xf32>
    %cst_95 = arith.constant 3.200000e+01 : f32
    %202 = vector.broadcast %cst_95 : f32 to vector<8x1xf32>
    %203 = arith.divf %201, %202 : vector<8x1xf32>
    %cst_96 = arith.constant 9.99999997E-7 : f32
    %204 = vector.broadcast %cst_96 : f32 to vector<8x1xf32>
    %205 = arith.addf %203, %204 : vector<8x1xf32>
    %206 = math.rsqrt %205 : vector<8x1xf32>
    %207 = vector.broadcast %206 : vector<8x1xf32> to vector<8x32xf32>
    %208 = arith.mulf %198, %207 : vector<8x32xf32>
    %209 = vector.broadcast %190 : vector<1x32xf32> to vector<8x32xf32>
    %210 = arith.mulf %208, %209 : vector<8x32xf32>
    %211 = vector.broadcast %192 : vector<1x32xf32> to vector<8x32xf32>
    %212 = arith.addf %210, %211 : vector<8x32xf32>
    %213 = arith.truncf %212 : vector<8x32xf32> to vector<8x32xbf16>
    %c1_97 = arith.constant 1 : index
    %c0_98 = arith.constant 0 : index
    %c0_99 = arith.constant 0 : index
    %214 = vector.load %arg10[%c1_97, %c0_98, %c0_99] : memref<3x32x128xbf16, #tpu.memory_space<vmem>>, vector<1x32x128xbf16>
    %215 = vector.shape_cast %214 : vector<1x32x128xbf16> to vector<32x128xbf16>
    %cst_100 = arith.constant dense<0.000000e+00> : vector<8x128xf32>
    %216 = tpu.matmul %213, %215, %cst_100 {dimension_numbers = #tpu.dot_dimension_numbers<[1], [0], [0], [1], [0, 0, 1, 1], [], []>} : vector<8x32xbf16>, vector<32x128xbf16>, vector<8x128xf32> -> vector<8x128xf32>
    %c1_101 = arith.constant 1 : index
    %c0_102 = arith.constant 0 : index
    %c0_103 = arith.constant 0 : index
    %217 = vector.load %arg11[%c1_101, %c0_102, %c0_103] : memref<3x1x128xf32, #tpu.memory_space<vmem>>, vector<1x1x128xf32>
    %218 = vector.shape_cast %217 : vector<1x1x128xf32> to vector<1x128xf32>
    %219 = vector.broadcast %218 : vector<1x128xf32> to vector<8x128xf32>
    %220 = arith.addf %216, %219 : vector<8x128xf32>
    %cst_104 = arith.constant 5.000000e-01 : f32
    %221 = vector.broadcast %cst_104 : f32 to vector<8x128xf32>
    %222 = arith.mulf %221, %220 : vector<8x128xf32>
    %cst_105 = arith.constant 4.471500e-02 : f32
    %223 = vector.broadcast %cst_105 : f32 to vector<8x128xf32>
    %224 = arith.mulf %223, %220 : vector<8x128xf32>
    %225 = arith.mulf %224, %220 : vector<8x128xf32>
    %226 = arith.mulf %225, %220 : vector<8x128xf32>
    %227 = arith.addf %220, %226 : vector<8x128xf32>
    %cst_106 = arith.constant 0.797884583 : f32
    %228 = vector.broadcast %cst_106 : f32 to vector<8x128xf32>
    %229 = arith.mulf %228, %227 : vector<8x128xf32>
    %230 = math.tanh %229 : vector<8x128xf32>
    %cst_107 = arith.constant 1.000000e+00 : f32
    %231 = vector.broadcast %cst_107 : f32 to vector<8x128xf32>
    %232 = arith.addf %231, %230 : vector<8x128xf32>
    %233 = arith.mulf %222, %232 : vector<8x128xf32>
    %234 = arith.truncf %233 : vector<8x128xf32> to vector<8x128xbf16>
    %c1_108 = arith.constant 1 : index
    %c0_109 = arith.constant 0 : index
    %c0_110 = arith.constant 0 : index
    %235 = vector.load %arg12[%c1_108, %c0_109, %c0_110] : memref<3x128x32xbf16, #tpu.memory_space<vmem>>, vector<1x128x32xbf16>
    %236 = vector.shape_cast %235 : vector<1x128x32xbf16> to vector<128x32xbf16>
    %cst_111 = arith.constant dense<0.000000e+00> : vector<8x32xf32>
    %237 = tpu.matmul %234, %236, %cst_111 {dimension_numbers = #tpu.dot_dimension_numbers<[1], [0], [0], [1], [0, 0, 1, 1], [], []>} : vector<8x128xbf16>, vector<128x32xbf16>, vector<8x32xf32> -> vector<8x32xf32>
    %c1_112 = arith.constant 1 : index
    %c0_113 = arith.constant 0 : index
    %c0_114 = arith.constant 0 : index
    %238 = vector.load %arg13[%c1_112, %c0_113, %c0_114] : memref<3x1x32xf32, #tpu.memory_space<vmem>>, vector<1x1x32xf32>
    %239 = vector.shape_cast %238 : vector<1x1x32xf32> to vector<1x32xf32>
    %240 = vector.broadcast %239 : vector<1x32xf32> to vector<8x32xf32>
    %241 = arith.addf %237, %240 : vector<8x32xf32>
    %242 = arith.addf %188, %241 : vector<8x32xf32>
    %c2 = arith.constant 2 : index
    %c0_115 = arith.constant 0 : index
    %c0_116 = arith.constant 0 : index
    %243 = vector.load %arg2[%c2, %c0_115, %c0_116] : memref<3x1x32xf32, #tpu.memory_space<vmem>>, vector<1x1x32xf32>
    %244 = vector.shape_cast %243 : vector<1x1x32xf32> to vector<1x32xf32>
    %c2_117 = arith.constant 2 : index
    %c0_118 = arith.constant 0 : index
    %c0_119 = arith.constant 0 : index
    %245 = vector.load %arg3[%c2_117, %c0_118, %c0_119] : memref<3x1x32xf32, #tpu.memory_space<vmem>>, vector<1x1x32xf32>
    %246 = vector.shape_cast %245 : vector<1x1x32xf32> to vector<1x32xf32>
    %cst_120 = arith.constant dense<0.000000e+00> : vector<8xf32>
    %247 = vector.multi_reduction <add>, %242, %cst_120 [1] : vector<8x32xf32> to vector<8xf32>
    %248 = vector.shape_cast %247 : vector<8xf32> to vector<8x1xf32>
    %cst_121 = arith.constant 3.200000e+01 : f32
    %249 = vector.broadcast %cst_121 : f32 to vector<8x1xf32>
    %250 = arith.divf %248, %249 : vector<8x1xf32>
    %251 = vector.broadcast %250 : vector<8x1xf32> to vector<8x32xf32>
    %252 = arith.subf %242, %251 : vector<8x32xf32>
    %253 = arith.mulf %252, %252 : vector<8x32xf32>
    %cst_122 = arith.constant dense<0.000000e+00> : vector<8xf32>
    %254 = vector.multi_reduction <add>, %253, %cst_122 [1] : vector<8x32xf32> to vector<8xf32>
    %255 = vector.shape_cast %254 : vector<8xf32> to vector<8x1xf32>
    %cst_123 = arith.constant 3.200000e+01 : f32
    %256 = vector.broadcast %cst_123 : f32 to vector<8x1xf32>
    %257 = arith.divf %255, %256 : vector<8x1xf32>
    %cst_124 = arith.constant 9.99999997E-7 : f32
    %258 = vector.broadcast %cst_124 : f32 to vector<8x1xf32>
    %259 = arith.addf %257, %258 : vector<8x1xf32>
    %260 = math.rsqrt %259 : vector<8x1xf32>
    %261 = vector.broadcast %260 : vector<8x1xf32> to vector<8x32xf32>
    %262 = arith.mulf %252, %261 : vector<8x32xf32>
    %263 = vector.broadcast %244 : vector<1x32xf32> to vector<8x32xf32>
    %264 = arith.mulf %262, %263 : vector<8x32xf32>
    %265 = vector.broadcast %246 : vector<1x32xf32> to vector<8x32xf32>
    %266 = arith.addf %264, %265 : vector<8x32xf32>
    %267 = arith.truncf %266 : vector<8x32xf32> to vector<8x32xbf16>
    %c2_125 = arith.constant 2 : index
    %c0_126 = arith.constant 0 : index
    %c0_127 = arith.constant 0 : index
    %268 = vector.load %arg4[%c2_125, %c0_126, %c0_127] : memref<3x32x128xbf16, #tpu.memory_space<vmem>>, vector<1x32x128xbf16>
    %269 = vector.shape_cast %268 : vector<1x32x128xbf16> to vector<32x128xbf16>
    %cst_128 = arith.constant dense<0.000000e+00> : vector<8x128xf32>
    %270 = tpu.matmul %267, %269, %cst_128 {dimension_numbers = #tpu.dot_dimension_numbers<[1], [0], [0], [1], [0, 0, 1, 1], [], []>} : vector<8x32xbf16>, vector<32x128xbf16>, vector<8x128xf32> -> vector<8x128xf32>
    %c2_129 = arith.constant 2 : index
    %c0_130 = arith.constant 0 : index
    %c0_131 = arith.constant 0 : index
    %271 = vector.load %arg5[%c2_129, %c0_130, %c0_131] : memref<3x1x128xf32, #tpu.memory_space<vmem>>, vector<1x1x128xf32>
    %272 = vector.shape_cast %271 : vector<1x1x128xf32> to vector<1x128xf32>
    %273 = vector.broadcast %272 : vector<1x128xf32> to vector<8x128xf32>
    %274 = arith.addf %270, %273 : vector<8x128xf32>
    %275 = vector.extract_strided_slice %274 {offsets = [0, 0], sizes = [8, 32], strides = [1, 1]} : vector<8x128xf32> to vector<8x32xf32>
    %276 = vector.shape_cast %275 : vector<8x32xf32> to vector<8x4x8xf32>
    %277 = tpu.transpose %276, [1, 0, 2] : vector<8x4x8xf32> -> vector<4x8x8xf32>
    %278 = arith.truncf %277 : vector<4x8x8xf32> to vector<4x8x8xbf16>
    %279 = vector.extract_strided_slice %274 {offsets = [0, 32], sizes = [8, 32], strides = [1, 1]} : vector<8x128xf32> to vector<8x32xf32>
    %280 = vector.shape_cast %279 : vector<8x32xf32> to vector<8x4x8xf32>
    %281 = tpu.transpose %280, [1, 0, 2] : vector<8x4x8xf32> -> vector<4x8x8xf32>
    %282 = arith.truncf %281 : vector<4x8x8xf32> to vector<4x8x8xbf16>
    %283 = vector.extract_strided_slice %274 {offsets = [0, 64], sizes = [8, 32], strides = [1, 1]} : vector<8x128xf32> to vector<8x32xf32>
    %284 = vector.shape_cast %283 : vector<8x32xf32> to vector<8x4x8xf32>
    %285 = tpu.transpose %284, [1, 0, 2] : vector<8x4x8xf32> -> vector<4x8x8xf32>
    %286 = arith.truncf %285 : vector<4x8x8xf32> to vector<4x8x8xbf16>
    "tpu.trace_start"() <{level = 10 : i32, message = "hqd,hkd->hqk"}> : () -> ()
    %cst_132 = arith.constant dense<0.000000e+00> : vector<4x8x8xf32>
    %287 = tpu.matmul %278, %282, %cst_132 {dimension_numbers = #tpu.dot_dimension_numbers<[2], [2], [1], [1], [0, 0, 0, 1, 1, 1], [0], [0]>} : vector<4x8x8xbf16>, vector<4x8x8xbf16>, vector<4x8x8xf32> -> vector<4x8x8xf32>
    "tpu.trace_stop"() : () -> ()
    %cst_133 = arith.constant dense<0xFF800000> : vector<4x8xf32>
    %288 = vector.multi_reduction <maximumf>, %287, %cst_133 [2] : vector<4x8x8xf32> to vector<4x8xf32>
    %289 = vector.shape_cast %288 : vector<4x8xf32> to vector<4x8x1xf32>
    %290 = vector.broadcast %289 : vector<4x8x1xf32> to vector<4x8x8xf32>
    %291 = arith.subf %287, %290 : vector<4x8x8xf32>
    %292 = math.exp %291 : vector<4x8x8xf32>
    %cst_134 = arith.constant dense<0.000000e+00> : vector<4x8xf32>
    %293 = vector.multi_reduction <add>, %292, %cst_134 [2] : vector<4x8x8xf32> to vector<4x8xf32>
    %294 = vector.shape_cast %293 : vector<4x8xf32> to vector<4x8x1xf32>
    %295 = vector.broadcast %294 : vector<4x8x1xf32> to vector<4x8x8xf32>
    %296 = arith.divf %292, %295 : vector<4x8x8xf32>
    %297 = arith.truncf %296 : vector<4x8x8xf32> to vector<4x8x8xbf16>
    "tpu.trace_start"() <{level = 10 : i32, message = "hqk,hkd->hqd"}> : () -> ()
    %cst_135 = arith.constant dense<0.000000e+00> : vector<4x8x8xf32>
    %298 = tpu.matmul %297, %286, %cst_135 {dimension_numbers = #tpu.dot_dimension_numbers<[2], [1], [1], [2], [0, 0, 0, 1, 1, 2], [0], [0]>} : vector<4x8x8xbf16>, vector<4x8x8xbf16>, vector<4x8x8xf32> -> vector<4x8x8xf32>
    "tpu.trace_stop"() : () -> ()
    %299 = tpu.transpose %298, [1, 0, 2] : vector<4x8x8xf32> -> vector<8x4x8xf32>
    %300 = vector.shape_cast %299 : vector<8x4x8xf32> to vector<8x32xf32>
    %301 = arith.truncf %300 : vector<8x32xf32> to vector<8x32xbf16>
    %c2_136 = arith.constant 2 : index
    %c0_137 = arith.constant 0 : index
    %c0_138 = arith.constant 0 : index
    %302 = vector.load %arg6[%c2_136, %c0_137, %c0_138] : memref<3x32x32xbf16, #tpu.memory_space<vmem>>, vector<1x32x32xbf16>
    %303 = vector.shape_cast %302 : vector<1x32x32xbf16> to vector<32x32xbf16>
    %cst_139 = arith.constant dense<0.000000e+00> : vector<8x32xf32>
    %304 = tpu.matmul %301, %303, %cst_139 {dimension_numbers = #tpu.dot_dimension_numbers<[1], [0], [0], [1], [0, 0, 1, 1], [], []>} : vector<8x32xbf16>, vector<32x32xbf16>, vector<8x32xf32> -> vector<8x32xf32>
    %c2_140 = arith.constant 2 : index
    %c0_141 = arith.constant 0 : index
    %c0_142 = arith.constant 0 : index
    %305 = vector.load %arg7[%c2_140, %c0_141, %c0_142] : memref<3x1x32xf32, #tpu.memory_space<vmem>>, vector<1x1x32xf32>
    %306 = vector.shape_cast %305 : vector<1x1x32xf32> to vector<1x32xf32>
    %307 = vector.broadcast %306 : vector<1x32xf32> to vector<8x32xf32>
    %308 = arith.addf %304, %307 : vector<8x32xf32>
    %309 = arith.addf %242, %308 : vector<8x32xf32>
    %c2_143 = arith.constant 2 : index
    %c0_144 = arith.constant 0 : index
    %c0_145 = arith.constant 0 : index
    %310 = vector.load %arg8[%c2_143, %c0_144, %c0_145] : memref<3x1x32xf32, #tpu.memory_space<vmem>>, vector<1x1x32xf32>
    %311 = vector.shape_cast %310 : vector<1x1x32xf32> to vector<1x32xf32>
    %c2_146 = arith.constant 2 : index
    %c0_147 = arith.constant 0 : index
    %c0_148 = arith.constant 0 : index
    %312 = vector.load %arg9[%c2_146, %c0_147, %c0_148] : memref<3x1x32xf32, #tpu.memory_space<vmem>>, vector<1x1x32xf32>
    %313 = vector.shape_cast %312 : vector<1x1x32xf32> to vector<1x32xf32>
    %cst_149 = arith.constant dense<0.000000e+00> : vector<8xf32>
    %314 = vector.multi_reduction <add>, %309, %cst_149 [1] : vector<8x32xf32> to vector<8xf32>
    %315 = vector.shape_cast %314 : vector<8xf32> to vector<8x1xf32>
    %cst_150 = arith.constant 3.200000e+01 : f32
    %316 = vector.broadcast %cst_150 : f32 to vector<8x1xf32>
    %317 = arith.divf %315, %316 : vector<8x1xf32>
    %318 = vector.broadcast %317 : vector<8x1xf32> to vector<8x32xf32>
    %319 = arith.subf %309, %318 : vector<8x32xf32>
    %320 = arith.mulf %319, %319 : vector<8x32xf32>
    %cst_151 = arith.constant dense<0.000000e+00> : vector<8xf32>
    %321 = vector.multi_reduction <add>, %320, %cst_151 [1] : vector<8x32xf32> to vector<8xf32>
    %322 = vector.shape_cast %321 : vector<8xf32> to vector<8x1xf32>
    %cst_152 = arith.constant 3.200000e+01 : f32
    %323 = vector.broadcast %cst_152 : f32 to vector<8x1xf32>
    %324 = arith.divf %322, %323 : vector<8x1xf32>
    %cst_153 = arith.constant 9.99999997E-7 : f32
    %325 = vector.broadcast %cst_153 : f32 to vector<8x1xf32>
    %326 = arith.addf %324, %325 : vector<8x1xf32>
    %327 = math.rsqrt %326 : vector<8x1xf32>
    %328 = vector.broadcast %327 : vector<8x1xf32> to vector<8x32xf32>
    %329 = arith.mulf %319, %328 : vector<8x32xf32>
    %330 = vector.broadcast %311 : vector<1x32xf32> to vector<8x32xf32>
    %331 = arith.mulf %329, %330 : vector<8x32xf32>
    %332 = vector.broadcast %313 : vector<1x32xf32> to vector<8x32xf32>
    %333 = arith.addf %331, %332 : vector<8x32xf32>
    %334 = arith.truncf %333 : vector<8x32xf32> to vector<8x32xbf16>
    %c2_154 = arith.constant 2 : index
    %c0_155 = arith.constant 0 : index
    %c0_156 = arith.constant 0 : index
    %335 = vector.load %arg10[%c2_154, %c0_155, %c0_156] : memref<3x32x128xbf16, #tpu.memory_space<vmem>>, vector<1x32x128xbf16>
    %336 = vector.shape_cast %335 : vector<1x32x128xbf16> to vector<32x128xbf16>
    %cst_157 = arith.constant dense<0.000000e+00> : vector<8x128xf32>
    %337 = tpu.matmul %334, %336, %cst_157 {dimension_numbers = #tpu.dot_dimension_numbers<[1], [0], [0], [1], [0, 0, 1, 1], [], []>} : vector<8x32xbf16>, vector<32x128xbf16>, vector<8x128xf32> -> vector<8x128xf32>
    %c2_158 = arith.constant 2 : index
    %c0_159 = arith.constant 0 : index
    %c0_160 = arith.constant 0 : index
    %338 = vector.load %arg11[%c2_158, %c0_159, %c0_160] : memref<3x1x128xf32, #tpu.memory_space<vmem>>, vector<1x1x128xf32>
    %339 = vector.shape_cast %338 : vector<1x1x128xf32> to vector<1x128xf32>
    %340 = vector.broadcast %339 : vector<1x128xf32> to vector<8x128xf32>
    %341 = arith.addf %337, %340 : vector<8x128xf32>
    %cst_161 = arith.constant 5.000000e-01 : f32
    %342 = vector.broadcast %cst_161 : f32 to vector<8x128xf32>
    %343 = arith.mulf %342, %341 : vector<8x128xf32>
    %cst_162 = arith.constant 4.471500e-02 : f32
    %344 = vector.broadcast %cst_162 : f32 to vector<8x128xf32>
    %345 = arith.mulf %344, %341 : vector<8x128xf32>
    %346 = arith.mulf %345, %341 : vector<8x128xf32>
    %347 = arith.mulf %346, %341 : vector<8x128xf32>
    %348 = arith.addf %341, %347 : vector<8x128xf32>
    %cst_163 = arith.constant 0.797884583 : f32
    %349 = vector.broadcast %cst_163 : f32 to vector<8x128xf32>
    %350 = arith.mulf %349, %348 : vector<8x128xf32>
    %351 = math.tanh %350 : vector<8x128xf32>
    %cst_164 = arith.constant 1.000000e+00 : f32
    %352 = vector.broadcast %cst_164 : f32 to vector<8x128xf32>
    %353 = arith.addf %352, %351 : vector<8x128xf32>
    %354 = arith.mulf %343, %353 : vector<8x128xf32>
    %355 = arith.truncf %354 : vector<8x128xf32> to vector<8x128xbf16>
    %c2_165 = arith.constant 2 : index
    %c0_166 = arith.constant 0 : index
    %c0_167 = arith.constant 0 : index
    %356 = vector.load %arg12[%c2_165, %c0_166, %c0_167] : memref<3x128x32xbf16, #tpu.memory_space<vmem>>, vector<1x128x32xbf16>
    %357 = vector.shape_cast %356 : vector<1x128x32xbf16> to vector<128x32xbf16>
    %cst_168 = arith.constant dense<0.000000e+00> : vector<8x32xf32>
    %358 = tpu.matmul %355, %357, %cst_168 {dimension_numbers = #tpu.dot_dimension_numbers<[1], [0], [0], [1], [0, 0, 1, 1], [], []>} : vector<8x128xbf16>, vector<128x32xbf16>, vector<8x32xf32> -> vector<8x32xf32>
    %c2_169 = arith.constant 2 : index
    %c0_170 = arith.constant 0 : index
    %c0_171 = arith.constant 0 : index
    %359 = vector.load %arg13[%c2_169, %c0_170, %c0_171] : memref<3x1x32xf32, #tpu.memory_space<vmem>>, vector<1x1x32xf32>
    %360 = vector.shape_cast %359 : vector<1x1x32xf32> to vector<1x32xf32>
    %361 = vector.broadcast %360 : vector<1x32xf32> to vector<8x32xf32>
    %362 = arith.addf %358, %361 : vector<8x32xf32>
    %363 = arith.addf %309, %362 : vector<8x32xf32>
    %c0_172 = arith.constant 0 : index
    %c0_173 = arith.constant 0 : index
    %364 = vector.load %arg14[%c0_172, %c0_173] : memref<8x32xf32, #tpu.memory_space<vmem>>, vector<8x32xf32>
    tpu.vector_store %arg14[%c0_172, %c0_173], %363 {strides = array<i32>} : memref<8x32xf32, #tpu.memory_space<vmem>>, vector<8x32xf32>,
    return
  }
  func.func @transform_0(%arg0: i32) -> (i32, i32) {
    %c0_i32 = arith.constant 0 : i32
    %c0_i32_0 = arith.constant 0 : i32
    return %arg0, %c0_i32 : i32, i32
  }
  func.func @transform_1(%arg0: i32) -> (i32, i32, i32) {
    %c0_i32 = arith.constant 0 : i32
    %c0_i32_0 = arith.constant 0 : i32
    %c0_i32_1 = arith.constant 0 : i32
    %c0_i32_2 = arith.constant 0 : i32
    return %c0_i32, %c0_i32_0, %c0_i32_1 : i32, i32, i32
  }
  func.func @transform_2(%arg0: i32) -> (i32, i32, i32) {
    %c0_i32 = arith.constant 0 : i32
    %c0_i32_0 = arith.constant 0 : i32
    %c0_i32_1 = arith.constant 0 : i32
    %c0_i32_2 = arith.constant 0 : i32
    return %c0_i32, %c0_i32_0, %c0_i32_1 : i32, i32, i32
  }
  func.func @transform_3(%arg0: i32) -> (i32, i32, i32) {
    %c0_i32 = arith.constant 0 : i32
    %c0_i32_0 = arith.constant 0 : i32
    %c0_i32_1 = arith.constant 0 : i32
    %c0_i32_2 = arith.constant 0 : i32
    return %c0_i32, %c0_i32_0, %c0_i32_1 : i32, i32, i32
  }
  func.func @transform_4(%arg0: i32) -> (i32, i32, i32) {
    %c0_i32 = arith.constant 0 : i32
    %c0_i32_0 = arith.constant 0 : i32
    %c0_i32_1 = arith.constant 0 : i32
    %c0_i32_2 = arith.constant 0 : i32
    return %c0_i32, %c0_i32_0, %c0_i32_1 : i32, i32, i32
  }
  func.func @transform_5(%arg0: i32) -> (i32, i32, i32) {
    %c0_i32 = arith.constant 0 : i32
    %c0_i32_0 = arith.constant 0 : i32
    %c0_i32_1 = arith.constant 0 : i32
    %c0_i32_2 = arith.constant 0 : i32
    return %c0_i32, %c0_i32_0, %c0_i32_1 : i32, i32, i32
  }
  func.func @transform_6(%arg0: i32) -> (i32, i32, i32) {
    %c0_i32 = arith.constant 0 : i32
    %c0_i32_0 = arith.constant 0 : i32
    %c0_i32_1 = arith.constant 0 : i32
    %c0_i32_2 = arith.constant 0 : i32
    return %c0_i32, %c0_i32_0, %c0_i32_1 : i32, i32, i32
  }
  func.func @transform_7(%arg0: i32) -> (i32, i32, i32) {
    %c0_i32 = arith.constant 0 : i32
    %c0_i32_0 = arith.constant 0 : i32
    %c0_i32_1 = arith.constant 0 : i32
    %c0_i32_2 = arith.constant 0 : i32
    return %c0_i32, %c0_i32_0, %c0_i32_1 : i32, i32, i32
  }
  func.func @transform_8(%arg0: i32) -> (i32, i32, i32) {
    %c0_i32 = arith.constant 0 : i32
    %c0_i32_0 = arith.constant 0 : i32
    %c0_i32_1 = arith.constant 0 : i32
    %c0_i32_2 = arith.constant 0 : i32
    return %c0_i32, %c0_i32_0, %c0_i32_1 : i32, i32, i32
  }
  func.func @transform_9(%arg0: i32) -> (i32, i32, i32) {
    %c0_i32 = arith.constant 0 : i32
    %c0_i32_0 = arith.constant 0 : i32
    %c0_i32_1 = arith.constant 0 : i32
    %c0_i32_2 = arith.constant 0 : i32
    return %c0_i32, %c0_i32_0, %c0_i32_1 : i32, i32, i32
  }
  func.func @transform_10(%arg0: i32) -> (i32, i32, i32) {
    %c0_i32 = arith.constant 0 : i32
    %c0_i32_0 = arith.constant 0 : i32
    %c0_i32_1 = arith.constant 0 : i32
    %c0_i32_2 = arith.constant 0 : i32
    return %c0_i32, %c0_i32_0, %c0_i32_1 : i32, i32, i32
  }
  func.func @transform_11(%arg0: i32) -> (i32, i32, i32) {
    %c0_i32 = arith.constant 0 : i32
    %c0_i32_0 = arith.constant 0 : i32
    %c0_i32_1 = arith.constant 0 : i32
    %c0_i32_2 = arith.constant 0 : i32
    return %c0_i32, %c0_i32_0, %c0_i32_1 : i32, i32, i32
  }
  func.func @transform_12(%arg0: i32) -> (i32, i32, i32) {
    %c0_i32 = arith.constant 0 : i32
    %c0_i32_0 = arith.constant 0 : i32
    %c0_i32_1 = arith.constant 0 : i32
    %c0_i32_2 = arith.constant 0 : i32
    return %c0_i32, %c0_i32_0, %c0_i32_1 : i32, i32, i32
  }
  func.func @transform_13(%arg0: i32) -> (i32, i32) {
    %c0_i32 = arith.constant 0 : i32
    %c0_i32_0 = arith.constant 0 : i32
    return %arg0, %c0_i32 : i32, i32
  }
}

</mosaic_0001>

<llo_original>
// kernel: tpu_custom_call.1
$region0: #{tpu_custom_call.1}
  #allocation0 [shape = 'u32[]', space=smem, size = 0x4, offset = 0x4, fixed_abs, tag = 'smem constant byte address 0x4 - core index']
  #allocation1 [shape = 'u32[72,128]{1,0:T(1,128)}', space=vmem, size = 0x9000, scoped, tag = 'internal scratch']
  %s0 = inlined_call_operand.vmem [shape: f32[16,32], index: 0, kind: input, shape index: {}]
  %s1 = inlined_call_operand.vmem [shape: f32[3,1,32], index: 1, kind: input, shape index: {}]
  %s2 = inlined_call_operand.vmem [shape: f32[3,1,32], index: 2, kind: input, shape index: {}]
  %s3 = inlined_call_operand.vmem [shape: bf16[3,32,128], index: 3, kind: input, shape index: {}]
  %s4 = inlined_call_operand.vmem [shape: f32[3,1,128], index: 4, kind: input, shape index: {}]
  %s5 = inlined_call_operand.vmem [shape: bf16[3,32,32], index: 5, kind: input, shape index: {}]
  %s6 = inlined_call_operand.vmem [shape: f32[3,1,32], index: 6, kind: input, shape index: {}]
  %s7 = inlined_call_operand.vmem [shape: f32[3,1,32], index: 7, kind: input, shape index: {}]
  %s8 = inlined_call_operand.vmem [shape: f32[3,1,32], index: 8, kind: input, shape index: {}]
  %s9 = inlined_call_operand.vmem [shape: bf16[3,32,128], index: 9, kind: input, shape index: {}]
  %s10 = inlined_call_operand.vmem [shape: f32[3,1,128], index: 10, kind: input, shape index: {}]
  %s11 = inlined_call_operand.vmem [shape: bf16[3,128,32], index: 11, kind: input, shape index: {}]
  %s12 = inlined_call_operand.vmem [shape: f32[3,1,32], index: 12, kind: input, shape index: {}]
  %s13 = inlined_call_operand.hbm [shape: f32[16,32], index: 13, kind: output, shape index: {}]
  %s14 = sld [smem:[#allocation0]]
  $region85: #{tpu_custom_call.1} parent=0
    _
  %s16 = ssub.s32 1, %s14
  %s17 = scalar_select 0, %s16, %s14
  $region1: #{tpu_custom_call.1} parent=0
    #allocation2 [shape = 'u8[8192]{0}', space=vmem, size = 0x2000, scoped, tag = 'output window, operand 0']
    #allocation3 [shape = 's32[2]{0}', space=sflag, size = 0x8, scoped, tag = 'scoped memory for tpu_custom_call.1']
    %18 = vsyncpa [#allocation3], 0
    %s19 = scalar_lea.sflag [#allocation3], 1
    %20 = vsyncpa %s19, 0
    loop: start=0, step=1, limit=4
    $region2: #{tpu_custom_call.1} parent=1 // loop_pre_header
      _
    $region3: #{tpu_custom_call.1} parent=1 // loop_header
      %s22 = sphi 0, %s26
      %p23 = scmp.ge.s32.totalorder %s22, 4
      %s32 = sphi 0, %s34
      %s35 = sphi 0, %s32
      %s36 = sphi 0, %s35
      %s52 = sphi 0, %s36
      %s56 = sphi 0, %s56
      %s58 = sphi 0, %s56
      %s59 = sphi 0, %s58
      %s73 = sphi 0, %s59
      %s77 = sphi 0, %s77
      %s79 = sphi 0, %s77
      %s80 = sphi 0, %s79
      %s94 = sphi 0, %s80
      %s98 = sphi 0, %s98
      %s100 = sphi 0, %s98
      %s101 = sphi 0, %s100
      %s115 = sphi 0, %s101
      %s119 = sphi 0, %s119
      %s121 = sphi 0, %s119
      %s122 = sphi 0, %s121
      %s136 = sphi 0, %s122
      %s140 = sphi 0, %s140
      %s142 = sphi 0, %s140
      %s143 = sphi 0, %s142
      %s157 = sphi 0, %s143
      %s161 = sphi 0, %s161
      %s163 = sphi 0, %s161
      %s164 = sphi 0, %s163
      %s178 = sphi 0, %s164
      %s182 = sphi 0, %s182
      %s184 = sphi 0, %s182
      %s185 = sphi 0, %s184
      %s199 = sphi 0, %s185
      %s203 = sphi 0, %s203
      %s205 = sphi 0, %s203
      %s206 = sphi 0, %s205
      %s220 = sphi 0, %s206
      %s224 = sphi 0, %s224
      %s226 = sphi 0, %s224
      %s227 = sphi 0, %s226
      %s241 = sphi 0, %s227
      %s245 = sphi 0, %s245
      %s247 = sphi 0, %s245
      %s248 = sphi 0, %s247
      %s262 = sphi 0, %s248
      %s266 = sphi 0, %s266
      %s268 = sphi 0, %s266
      %s269 = sphi 0, %s268
      %s283 = sphi 0, %s269
      %s287 = sphi 0, %s287
      %s289 = sphi 0, %s287
      %s290 = sphi 0, %s289
      %s304 = sphi 0, %s290
      %s310 = sphi 0, %s312
      %s313 = sphi 0, %s310
      %s314 = sphi 0, %s313
      %s330 = sphi 0, %s314
    $region4: #{tpu_custom_call.1} parent=1 // loop_header_branch
      %25 = sbr.rel (%p23) target = $region8
    $region5: #{tpu_custom_call.1} parent=1 // loop_body
      %s27 = ssub.s32 %s22, 1
      %s28 = ssub.s32 %s22, 2
      %s29 = sadd.s32 %s22, 1
      %s30 = ssub.s32 %s22, %s29
      %p31 = scmp.eq.s32.totalorder %s30, 0
      %s33 = sadd.s32 %s32, 1
      %s34 = scalar_select %p31, %s32, %s33
      %p37 = pneg %p31
      %p38 = scmp.eq.s32.totalorder %s22, 1
      %p39 = por %p37, %p38
      %p40 = scmp.ne.s32.totalorder %s32, %s35
      %p41 = scmp.eq.s32.totalorder %s22, 0
      %p42 = por %p40, %p41
      %p43 = scmp.ne.s32.totalorder %s32, %s35
      %p44 = scmp.eq.s32.totalorder %s27, 1
      %p45 = por %p43, %p44
      %p46 = scmp.ne.s32.totalorder %s35, %s36
      %p47 = scmp.eq.s32.totalorder %s27, 0
      %p48 = por %p46, %p47
      %p49 = scmp.ne.s32.totalorder %s35, %s36
      %p50 = scmp.eq.s32.totalorder %s28, 1
      %p51 = por %p49, %p50
      %p53 = scmp.ne.s32.totalorder %s36, %s52
      %p54 = scmp.eq.s32.totalorder %s28, 0
      %p55 = por %p53, %p54
      %s57 = sadd.s32 %s56, 1
      %p60 = scmp.eq.s32.totalorder %s22, 1
      %p61 = scmp.ne.s32.totalorder %s56, %s58
      %p62 = scmp.eq.s32.totalorder %s22, 0
      %p63 = por %p61, %p62
      %p64 = scmp.ne.s32.totalorder %s56, %s58
      %p65 = scmp.eq.s32.totalorder %s27, 1
      %p66 = por %p64, %p65
      %p67 = scmp.ne.s32.totalorder %s58, %s59
      %p68 = scmp.eq.s32.totalorder %s27, 0
      %p69 = por %p67, %p68
      %p70 = scmp.ne.s32.totalorder %s58, %s59
      %p71 = scmp.eq.s32.totalorder %s28, 1
      %p72 = por %p70, %p71
      %p74 = scmp.ne.s32.totalorder %s59, %s73
      %p75 = scmp.eq.s32.totalorder %s28, 0
      %p76 = por %p74, %p75
      %s78 = sadd.s32 %s77, 1
      %p81 = scmp.eq.s32.totalorder %s22, 1
      %p82 = scmp.ne.s32.totalorder %s77, %s79
      %p83 = scmp.eq.s32.totalorder %s22, 0
      %p84 = por %p82, %p83
      %p85 = scmp.ne.s32.totalorder %s77, %s79
      %p86 = scmp.eq.s32.totalorder %s27, 1
      %p87 = por %p85, %p86
      %p88 = scmp.ne.s32.totalorder %s79, %s80
      %p89 = scmp.eq.s32.totalorder %s27, 0
      %p90 = por %p88, %p89
      %p91 = scmp.ne.s32.totalorder %s79, %s80
      %p92 = scmp.eq.s32.totalorder %s28, 1
      %p93 = por %p91, %p92
      %p95 = scmp.ne.s32.totalorder %s80, %s94
      %p96 = scmp.eq.s32.totalorder %s28, 0
      %p97 = por %p95, %p96
      %s99 = sadd.s32 %s98, 1
      %p102 = scmp.eq.s32.totalorder %s22, 1
      %p103 = scmp.ne.s32.totalorder %s98, %s100
      %p104 = scmp.eq.s32.totalorder %s22, 0
      %p105 = por %p103, %p104
      %p106 = scmp.ne.s32.totalorder %s98, %s100
      %p107 = scmp.eq.s32.totalorder %s27, 1
      %p108 = por %p106, %p107
      %p109 = scmp.ne.s32.totalorder %s100, %s101
      %p110 = scmp.eq.s32.totalorder %s27, 0
      %p111 = por %p109, %p110
      %p112 = scmp.ne.s32.totalorder %s100, %s101
      %p113 = scmp.eq.s32.totalorder %s28, 1
      %p114 = por %p112, %p113
      %p116 = scmp.ne.s32.totalorder %s101, %s115
      %p117 = scmp.eq.s32.totalorder %s28, 0
      %p118 = por %p116, %p117
      %s120 = sadd.s32 %s119, 1
      %p123 = scmp.eq.s32.totalorder %s22, 1
      %p124 = scmp.ne.s32.totalorder %s119, %s121
      %p125 = scmp.eq.s32.totalorder %s22, 0
      %p126 = por %p124, %p125
      %p127 = scmp.ne.s32.totalorder %s119, %s121
      %p128 = scmp.eq.s32.totalorder %s27, 1
      %p129 = por %p127, %p128
      %p130 = scmp.ne.s32.totalorder %s121, %s122
      %p131 = scmp.eq.s32.totalorder %s27, 0
      %p132 = por %p130, %p131
      %p133 = scmp.ne.s32.totalorder %s121, %s122
      %p134 = scmp.eq.s32.totalorder %s28, 1
      %p135 = por %p133, %p134
      %p137 = scmp.ne.s32.totalorder %s122, %s136
      %p138 = scmp.eq.s32.totalorder %s28, 0
      %p139 = por %p137, %p138
      %s141 = sadd.s32 %s140, 1
      %p144 = scmp.eq.s32.totalorder %s22, 1
      %p145 = scmp.ne.s32.totalorder %s140, %s142
      %p146 = scmp.eq.s32.totalorder %s22, 0
      %p147 = por %p145, %p146
      %p148 = scmp.ne.s32.totalorder %s140, %s142
      %p149 = scmp.eq.s32.totalorder %s27, 1
      %p150 = por %p148, %p149
      %p151 = scmp.ne.s32.totalorder %s142, %s143
      %p152 = scmp.eq.s32.totalorder %s27, 0
      %p153 = por %p151, %p152
      %p154 = scmp.ne.s32.totalorder %s142, %s143
      %p155 = scmp.eq.s32.totalorder %s28, 1
      %p156 = por %p154, %p155
      %p158 = scmp.ne.s32.totalorder %s143, %s157
      %p159 = scmp.eq.s32.totalorder %s28, 0
      %p160 = por %p158, %p159
      %s162 = sadd.s32 %s161, 1
      %p165 = scmp.eq.s32.totalorder %s22, 1
      %p166 = scmp.ne.s32.totalorder %s161, %s163
      %p167 = scmp.eq.s32.totalorder %s22, 0
      %p168 = por %p166, %p167
      %p169 = scmp.ne.s32.totalorder %s161, %s163
      %p170 = scmp.eq.s32.totalorder %s27, 1
      %p171 = por %p169, %p170
      %p172 = scmp.ne.s32.totalorder %s163, %s164
      %p173 = scmp.eq.s32.totalorder %s27, 0
      %p174 = por %p172, %p173
      %p175 = scmp.ne.s32.totalorder %s163, %s164
      %p176 = scmp.eq.s32.totalorder %s28, 1
      %p177 = por %p175, %p176
      %p179 = scmp.ne.s32.totalorder %s164, %s178
      %p180 = scmp.eq.s32.totalorder %s28, 0
      %p181 = por %p179, %p180
      %s183 = sadd.s32 %s182, 1
      %p186 = scmp.eq.s32.totalorder %s22, 1
      %p187 = scmp.ne.s32.totalorder %s182, %s184
      %p188 = scmp.eq.s32.totalorder %s22, 0
      %p189 = por %p187, %p188
      %p190 = scmp.ne.s32.totalorder %s182, %s184
      %p191 = scmp.eq.s32.totalorder %s27, 1
      %p192 = por %p190, %p191
      %p193 = scmp.ne.s32.totalorder %s184, %s185
      %p194 = scmp.eq.s32.totalorder %s27, 0
      %p195 = por %p193, %p194
      %p196 = scmp.ne.s32.totalorder %s184, %s185
      %p197 = scmp.eq.s32.totalorder %s28, 1
      %p198 = por %p196, %p197
      %p200 = scmp.ne.s32.totalorder %s185, %s199
      %p201 = scmp.eq.s32.totalorder %s28, 0
      %p202 = por %p200, %p201
      %s204 = sadd.s32 %s203, 1
      %p207 = scmp.eq.s32.totalorder %s22, 1
      %p208 = scmp.ne.s32.totalorder %s203, %s205
      %p209 = scmp.eq.s32.totalorder %s22, 0
      %p210 = por %p208, %p209
      %p211 = scmp.ne.s32.totalorder %s203, %s205
      %p212 = scmp.eq.s32.totalorder %s27, 1
      %p213 = por %p211, %p212
      %p214 = scmp.ne.s32.totalorder %s205, %s206
      %p215 = scmp.eq.s32.totalorder %s27, 0
      %p216 = por %p214, %p215
      %p217 = scmp.ne.s32.totalorder %s205, %s206
      %p218 = scmp.eq.s32.totalorder %s28, 1
      %p219 = por %p217, %p218
      %p221 = scmp.ne.s32.totalorder %s206, %s220
      %p222 = scmp.eq.s32.totalorder %s28, 0
      %p223 = por %p221, %p222
      %s225 = sadd.s32 %s224, 1
      %p228 = scmp.eq.s32.totalorder %s22, 1
      %p229 = scmp.ne.s32.totalorder %s224, %s226
      %p230 = scmp.eq.s32.totalorder %s22, 0
      %p231 = por %p229, %p230
      %p232 = scmp.ne.s32.totalorder %s224, %s226
      %p233 = scmp.eq.s32.totalorder %s27, 1
      %p234 = por %p232, %p233
      %p235 = scmp.ne.s32.totalorder %s226, %s227
      %p236 = scmp.eq.s32.totalorder %s27, 0
      %p237 = por %p235, %p236
      %p238 = scmp.ne.s32.totalorder %s226, %s227
      %p239 = scmp.eq.s32.totalorder %s28, 1
      %p240 = por %p238, %p239
      %p242 = scmp.ne.s32.totalorder %s227, %s241
      %p243 = scmp.eq.s32.totalorder %s28, 0
      %p244 = por %p242, %p243
      %s246 = sadd.s32 %s245, 1
      %p249 = scmp.eq.s32.totalorder %s22, 1
      %p250 = scmp.ne.s32.totalorder %s245, %s247
      %p251 = scmp.eq.s32.totalorder %s22, 0
      %p252 = por %p250, %p251
      %p253 = scmp.ne.s32.totalorder %s245, %s247
      %p254 = scmp.eq.s32.totalorder %s27, 1
      %p255 = por %p253, %p254
      %p256 = scmp.ne.s32.totalorder %s247, %s248
      %p257 = scmp.eq.s32.totalorder %s27, 0
      %p258 = por %p256, %p257
      %p259 = scmp.ne.s32.totalorder %s247, %s248
      %p260 = scmp.eq.s32.totalorder %s28, 1
      %p261 = por %p259, %p260
      %p263 = scmp.ne.s32.totalorder %s248, %s262
      %p264 = scmp.eq.s32.totalorder %s28, 0
      %p265 = por %p263, %p264
      %s267 = sadd.s32 %s266, 1
      %p270 = scmp.eq.s32.totalorder %s22, 1
      %p271 = scmp.ne.s32.totalorder %s266, %s268
      %p272 = scmp.eq.s32.totalorder %s22, 0
      %p273 = por %p271, %p272
      %p274 = scmp.ne.s32.totalorder %s266, %s268
      %p275 = scmp.eq.s32.totalorder %s27, 1
      %p276 = por %p274, %p275
      %p277 = scmp.ne.s32.totalorder %s268, %s269
      %p278 = scmp.eq.s32.totalorder %s27, 0
      %p279 = por %p277, %p278
      %p280 = scmp.ne.s32.totalorder %s268, %s269
      %p281 = scmp.eq.s32.totalorder %s28, 1
      %p282 = por %p280, %p281
      %p284 = scmp.ne.s32.totalorder %s269, %s283
      %p285 = scmp.eq.s32.totalorder %s28, 0
      %p286 = por %p284, %p285
      %s288 = sadd.s32 %s287, 1
      %p291 = scmp.eq.s32.totalorder %s22, 1
      %p292 = scmp.ne.s32.totalorder %s287, %s289
      %p293 = scmp.eq.s32.totalorder %s22, 0
      %p294 = por %p292, %p293
      %p295 = scmp.ne.s32.totalorder %s287, %s289
      %p296 = scmp.eq.s32.totalorder %s27, 1
      %p297 = por %p295, %p296
      %p298 = scmp.ne.s32.totalorder %s289, %s290
      %p299 = scmp.eq.s32.totalorder %s27, 0
      %p300 = por %p298, %p299
      %p301 = scmp.ne.s32.totalorder %s289, %s290
      %p302 = scmp.eq.s32.totalorder %s28, 1
      %p303 = por %p301, %p302
      %p305 = scmp.ne.s32.totalorder %s290, %s304
      %p306 = scmp.eq.s32.totalorder %s28, 0
      %p307 = por %p305, %p306
      %s308 = ssub.s32 %s22, %s29
      %p309 = scmp.eq.s32.totalorder %s308, 0
      %s311 = sadd.s32 %s310, 1
      %s312 = scalar_select %p309, %s310, %s311
      %p315 = pneg %p309
      %p316 = scmp.eq.s32.totalorder %s22, 1
      %p317 = por %p315, %p316
      %p318 = scmp.ne.s32.totalorder %s310, %s313
      %p319 = scmp.eq.s32.totalorder %s22, 0
      %p320 = por %p318, %p319
      %p321 = scmp.ne.s32.totalorder %s310, %s313
      %p322 = scmp.eq.s32.totalorder %s27, 1
      %p323 = por %p321, %p322
      %p324 = scmp.ne.s32.totalorder %s313, %s314
      %p325 = scmp.eq.s32.totalorder %s27, 0
      %p326 = por %p324, %p325
      %p327 = scmp.ne.s32.totalorder %s313, %s314
      %p328 = scmp.eq.s32.totalorder %s28, 1
      %p329 = por %p327, %p328
      %p331 = scmp.ne.s32.totalorder %s314, %s330
      %p332 = scmp.eq.s32.totalorder %s28, 0
      %p333 = por %p331, %p332
      %p334 = scmp.le.s32.totalorder 1, %s22
      %p335 = scmp.lt.s32.totalorder %s22, 3
      %p336 = pnand %p334, %p335
      %p337 = pneg %p336
      // Predicated region
      $region9: #{tpu_custom_call.1} parent=5 // pred_check
        _
      $region10: #{tpu_custom_call.1} parent=5 // pred_check_branch
        %339 = sbr.rel (%p336) target = $region12
      $region11: #{tpu_custom_call.1} parent=5 // pred_region
        %s340 = ssub.s32 %s22, 1
        // Predicated region
        $region13: #{tpu_custom_call.1} parent=11 // pred_check
          %p341 = pneg %p69
        $region14: #{tpu_custom_call.1} parent=11 // pred_check_branch
          %343 = sbr.rel (%p341) target = $region16
        $region15: #{tpu_custom_call.1} parent=11 // pred_region
          _
        $region16: #{tpu_custom_call.1} parent=11 // pred_fallthru
          _
        // Predicated region
        $region17: #{tpu_custom_call.1} parent=11 // pred_check
          %p344 = pneg %p90
        $region18: #{tpu_custom_call.1} parent=11 // pred_check_branch
          %346 = sbr.rel (%p344) target = $region20
        $region19: #{tpu_custom_call.1} parent=11 // pred_region
          _
        $region20: #{tpu_custom_call.1} parent=11 // pred_fallthru
          _
        // Predicated region
        $region21: #{tpu_custom_call.1} parent=11 // pred_check
          %p347 = pneg %p111
        $region22: #{tpu_custom_call.1} parent=11 // pred_check_branch
          %349 = sbr.rel (%p347) target = $region24
        $region23: #{tpu_custom_call.1} parent=11 // pred_region
          _
        $region24: #{tpu_custom_call.1} parent=11 // pred_fallthru
          _
        // Predicated region
        $region25: #{tpu_custom_call.1} parent=11 // pred_check
          %p350 = pneg %p132
        $region26: #{tpu_custom_call.1} parent=11 // pred_check_branch
          %352 = sbr.rel (%p350) target = $region28
        $region27: #{tpu_custom_call.1} parent=11 // pred_region
          _
        $region28: #{tpu_custom_call.1} parent=11 // pred_fallthru
          _
        // Predicated region
        $region29: #{tpu_custom_call.1} parent=11 // pred_check
          %p353 = pneg %p153
        $region30: #{tpu_custom_call.1} parent=11 // pred_check_branch
          %355 = sbr.rel (%p353) target = $region32
        $region31: #{tpu_custom_call.1} parent=11 // pred_region
          _
        $region32: #{tpu_custom_call.1} parent=11 // pred_fallthru
          _
        // Predicated region
        $region33: #{tpu_custom_call.1} parent=11 // pred_check
          %p356 = pneg %p174
        $region34: #{tpu_custom_call.1} parent=11 // pred_check_branch
          %358 = sbr.rel (%p356) target = $region36
        $region35: #{tpu_custom_call.1} parent=11 // pred_region
          _
        $region36: #{tpu_custom_call.1} parent=11 // pred_fallthru
          _
        // Predicated region
        $region37: #{tpu_custom_call.1} parent=11 // pred_check
          %p359 = pneg %p195
        $region38: #{tpu_custom_call.1} parent=11 // pred_check_branch
          %361 = sbr.rel (%p359) target = $region40
        $region39: #{tpu_custom_call.1} parent=11 // pred_region
          _
        $region40: #{tpu_custom_call.1} parent=11 // pred_fallthru
          _
        // Predicated region
        $region41: #{tpu_custom_call.1} parent=11 // pred_check
          %p362 = pneg %p216
        $region42: #{tpu_custom_call.1} parent=11 // pred_check_branch
          %364 = sbr.rel (%p362) target = $region44
        $region43: #{tpu_custom_call.1} parent=11 // pred_region
          _
        $region44: #{tpu_custom_call.1} parent=11 // pred_fallthru
          _
        // Predicated region
        $region45: #{tpu_custom_call.1} parent=11 // pred_check
          %p365 = pneg %p237
        $region46: #{tpu_custom_call.1} parent=11 // pred_check_branch
          %367 = sbr.rel (%p365) target = $region48
        $region47: #{tpu_custom_call.1} parent=11 // pred_region
          _
        $region48: #{tpu_custom_call.1} parent=11 // pred_fallthru
          _
        // Predicated region
        $region49: #{tpu_custom_call.1} parent=11 // pred_check
          %p368 = pneg %p258
        $region50: #{tpu_custom_call.1} parent=11 // pred_check_branch
          %370 = sbr.rel (%p368) target = $region52
        $region51: #{tpu_custom_call.1} parent=11 // pred_region
          _
        $region52: #{tpu_custom_call.1} parent=11 // pred_fallthru
          _
        // Predicated region
        $region53: #{tpu_custom_call.1} parent=11 // pred_check
          %p371 = pneg %p279
        $region54: #{tpu_custom_call.1} parent=11 // pred_check_branch
          %373 = sbr.rel (%p371) target = $region56
        $region55: #{tpu_custom_call.1} parent=11 // pred_region
          _
        $region56: #{tpu_custom_call.1} parent=11 // pred_fallthru
          _
        // Predicated region
        $region57: #{tpu_custom_call.1} parent=11 // pred_check
          %p374 = pneg %p300
        $region58: #{tpu_custom_call.1} parent=11 // pred_check_branch
          %376 = sbr.rel (%p374) target = $region60
        $region59: #{tpu_custom_call.1} parent=11 // pred_region
          _
        $region60: #{tpu_custom_call.1} parent=11 // pred_fallthru
          _
      $region12: #{tpu_custom_call.1} parent=5 // pred_fallthru
        _
      %p377 = scmp.lt.s32.totalorder %s22, 2
      // Predicated region
      $region61: #{tpu_custom_call.1} parent=5 // pred_check
        %p378 = pneg %p377
      $region62: #{tpu_custom_call.1} parent=5 // pred_check_branch
        %380 = sbr.rel (%p378) target = $region64
      $region63: #{tpu_custom_call.1} parent=5 // pred_region
        // Predicated region
        $region65: #{tpu_custom_call.1} parent=63 // pred_check
          %p381 = pneg %p42
        $region66: #{tpu_custom_call.1} parent=63 // pred_check_branch
          %383 = sbr.rel (%p381) target = $region68
        $region67: #{tpu_custom_call.1} parent=63 // pred_region
          %p384 = scmp.lt.s32.totalorder %s22, 1
          %s385 = scalar_select %p384, %s22, 1
          %s386 = smul.addr %s385, 8
          %s387 = scalar_lea.vmem %s0, %s386
        $region68: #{tpu_custom_call.1} parent=63 // pred_fallthru
          _
      $region64: #{tpu_custom_call.1} parent=5 // pred_fallthru
        _
      %p388 = scmp.le.s32.totalorder 1, %s22
      %p389 = scmp.lt.s32.totalorder %s22, 3
      %p390 = pnand %p388, %p389
      %p391 = pneg %p390
      // Predicated region
      $region69: #{tpu_custom_call.1} parent=5 // pred_check
        _
      $region70: #{tpu_custom_call.1} parent=5 // pred_check_branch
        %393 = sbr.rel (%p390) target = $region72
      $region71: #{tpu_custom_call.1} parent=5 // pred_region
        %s394 = ssub.s32 %s22, 1
        %p395 = scmp.lt.s32.totalorder %s27, 1
        %s396 = scalar_select %p395, %s27, 1
        %s397 = smul.addr %s396, 8
        %s398 = scalar_lea.vmem %s0, %s397
        %p399 = pneg %p48
        %p400 = pneg %p45
        %p401 = pneg %p69
        %p402 = pneg %p66
        %p403 = pneg %p90
        %p404 = pneg %p87
        %p405 = pneg %p111
        %p406 = pneg %p108
        %p407 = pneg %p132
        %p408 = pneg %p129
        %p409 = pneg %p153
        %p410 = pneg %p150
        %p411 = pneg %p174
        %p412 = pneg %p171
        %p413 = pneg %p195
        %p414 = pneg %p192
        %p415 = pneg %p216
        %p416 = pneg %p213
        %p417 = pneg %p237
        %p418 = pneg %p234
        %p419 = pneg %p258
        %p420 = pneg %p255
        %p421 = pneg %p279
        %p422 = pneg %p276
        %p423 = pneg %p300
        %p424 = pneg %p297
        %p425 = pneg %p326
        %p426 = pneg %p323
        %s427 = sand.u32 %s313, 1
        %s428 = scalar_lea.sflag [#allocation3], %s427
        %s429 = sand.u32 %s313, 1
        %s430 = smul.addr %s429, 8
        %s431 = scalar_lea.vmem [#allocation2], %s430
        %p432 = scmp.lt.s32.totalorder %s27, 1
        %s433 = scalar_select %p432, %s27, 1
        %s434 = smul.addr %s433, 8
        %s435 = scalar_lea.vmem %s0, %s434
        %v437 = vld [vmem:[%s435] sm:$0xff]
        %v438 = vld [vmem:[%s1] sm:$0x1]
        %v439 = vld [vmem:[%s2] sm:$0x1]
        %vm440 = vcmask 261120
        %v441 = vsel %vm440, %v437, 0.0
        %442 = vadd.xlane.f32.xlu0 %v441
        %v443 = vpop.xlane.xlu0 %442
        %v444 = vrcp.pop 32.0
        %v445 = vmul.f32 32.0, %v444
        %v446 = vsub.f32 1.0, %v445
        %v447 = vmul.f32 %v444, %v446
        %v448 = vadd.f32 %v444, %v447
        %vm449 = vweird.f32 %v444
        %v450 = vsel %vm449, %v444, %v448
        %v451 = vmul.f32 %v443, %v450
        %v452 = vsub.f32 %v437, %v451
        %v453 = vmul.f32 %v452, %v452
        %v454 = vsel %vm440, %v453, 0.0
        %455 = vadd.xlane.f32.xlu0 %v454
        %v456 = vpop.xlane.xlu0 %455
        %v457 = vmul.f32 %v456, %v450
        %v458 = vadd.f32 %v457, 1e-06
        %v459 = vrsqrt.pop %v458
        %v460 = vmul.f32 %v459, %v458
        %v461 = vmul.f32 %v460, %v459
        %v462 = vmul.f32 0.5, %v461
        %v463 = vsub.f32 1.5, %v462
        %v464 = vmul.f32 %v459, %v463
        %vm465 = vweird.f32 %v458
        %vm466 = vweird.f32 %v459
        %vm467 = vmor %vm465, %vm466
        %v468 = vsel %vm467, %v459, %v464
        %v469 = vmul.f32 %v452, %v468
        %v471 = vperm.slane %v438, 0
        %v473 = vmul.f32 %v469, %v471
        %v475 = vperm.slane %v439, 0
        %v477 = vadd.f32 %v473, %v475
        %v478 = vpack.c.bf16 %v477, %v477
        %v479 = vld [vmem:[%s3] sm:$0xf]
        %v480 = vld [vmem:[%s3 + $0x4] sm:$0xf]
        %v481 = vld [vmem:[%s3 + $0x8] sm:$0xf]
        %v482 = vld [vmem:[%s3 + $0xc] sm:$0xf]
        %v483 = vld [vmem:[%s4] sm:$0x1]
        %v485 = vperm.slane %v483, 0
        %v491 = vunpack.c.l.b16 %v479
        %v492 = vunpack.c.l.b16 %v480
        %v493 = vunpack.c.l.b16 %v481
        %v494 = vunpack.c.l.b16 %v482
        %v495 = vpack.c.b16 %v492, %v491
        %v496 = vpack.c.b16 %v494, %v493
        %v500 = vsel %vm440, %v478, 0
        %502 = vmatpush.bf16.msra.mxu0 0
        %503 = vmatpush.bf16.msra.mxu0 0
        %504 = vmatpush.bf16.msra.mxu0 0
        %505 = vmatpush.bf16.msra.mxu0 0
        %506 = vmatpush.bf16.msra.mxu0 0
        %507 = vmatpush.bf16.msra.mxu0 0
        %508 = vmatpush.bf16.msra.mxu0 %v496
        %509 = vmatpush.bf16.msra.mxu0 %v495
        %510 = vmatmul.bf16.gmra.mxu0 %v500
        %v511 = vpop.f32.mrf.mxu0
        %v512 = vadd.f32 %v485, %v511
        %v513 = vpop.f32.mrf.mxu0
        %514 = vdwg.mxu0
        %516 = vrot.lane.b32.xlu0 %v512, 120
        %v517 = vpop.permute.xlu0 %516
        %519 = vrot.lane.b32.xlu0 %v512, 112
        %v520 = vpop.permute.xlu0 %519
        %522 = vrot.lane.b32.xlu0 %v512, 104
        %v523 = vpop.permute.xlu0 %522
        %v525 = vrot.slane %v520, 4
        %vm526 = vcmask 1047556
        %v527 = vsel %vm526, %v525, %v512
        %v528 = vrot.slane %v512, 4
        %v529 = vsel %vm526, %v520, %v528
        %v531 = vunpack.c.l.s4 1983009808
        %v532 = vunpack.c.0.s8 %v531
        %v533 = vperm.slane %v527, %v532
        %v535 = vunpack.c.l.s4 1983009808
        %v536 = vunpack.c.0.s8 %v535
        %v537 = vperm.slane %v529, %v536
        %v538 = vrot.slane %v523, 4
        %v539 = vsel %vm526, %v538, %v517
        %v540 = vrot.slane %v517, 4
        %v541 = vsel %vm526, %v523, %v540
        %v543 = vunpack.c.l.s4 1983009808
        %v544 = vunpack.c.0.s8 %v543
        %v545 = vperm.slane %v539, %v544
        %v547 = vunpack.c.l.s4 1983009808
        %v548 = vunpack.c.0.s8 %v547
        %v549 = vperm.slane %v541, %v548
        %v550 = vrot.slane %v545, 4
        %v551 = vsel %vm526, %v550, %v533
        %v552 = vrot.slane %v533, 4
        %v553 = vsel %vm526, %v545, %v552
        %v555 = vunpack.c.l.s4 1934713408
        %v556 = vunpack.c.0.s8 %v555
        %v557 = vperm.slane %v551, %v556
        %v559 = vunpack.c.l.s4 1934713408
        %v560 = vunpack.c.0.s8 %v559
        %v561 = vperm.slane %v553, %v560
        %v562 = vrot.slane %v549, 4
        %v563 = vsel %vm526, %v562, %v537
        %v564 = vrot.slane %v537, 4
        %v565 = vsel %vm526, %v549, %v564
        %v567 = vunpack.c.l.s4 1934713408
        %v568 = vunpack.c.0.s8 %v567
        %v569 = vperm.slane %v563, %v568
        %v571 = vunpack.c.l.s4 1934713408
        %v572 = vunpack.c.0.s8 %v571
        %v573 = vperm.slane %v565, %v572
        %v574 = vrot.slane %v557, 4
        %v575 = vsel %vm526, 0.0, %v574
        %v576 = vrot.slane %v561, 4
        %v577 = vsel %vm526, 0.0, %v576
        %v578 = vrot.slane %v569, 4
        %v579 = vsel %vm526, 0.0, %v578
        %v580 = vrot.slane %v573, 4
        %v581 = vsel %vm526, 0.0, %v580
        %v582 = vsel %vm526, %v576, %v557
        %v584 = vunpack.c.l.s4 1983009808
        %v585 = vunpack.c.0.s8 %v584
        %v586 = vperm.slane %v582, %v585
        %v587 = vrot.slane %v577, 4
        %v588 = vsel %vm526, %v587, %v575
        %v590 = vunpack.c.l.s4 1983009808
        %v591 = vunpack.c.0.s8 %v590
        %v592 = vperm.slane %v588, %v591
        %v593 = vsel %vm526, %v580, %v569
        %v595 = vunpack.c.l.s4 1983009808
        %v596 = vunpack.c.0.s8 %v595
        %v597 = vperm.slane %v593, %v596
        %v598 = vrot.slane %v581, 4
        %v599 = vsel %vm526, %v598, %v579
        %v601 = vunpack.c.l.s4 1983009808
        %v602 = vunpack.c.0.s8 %v601
        %v603 = vperm.slane %v599, %v602
        %v604 = vrot.slane %v592, 4
        %v605 = vsel %vm526, %v604, %v586
        %v606 = vrot.slane %v586, 4
        %v607 = vsel %vm526, %v592, %v606
        %v609 = vunpack.c.l.s4 1934713408
        %v610 = vunpack.c.0.s8 %v609
        %v611 = vperm.slane %v605, %v610
        %v613 = vunpack.c.l.s4 1934713408
        %v614 = vunpack.c.0.s8 %v613
        %v615 = vperm.slane %v607, %v614
        %v616 = vrot.slane %v603, 4
        %v617 = vsel %vm526, %v616, %v597
        %v618 = vrot.slane %v597, 4
        %v619 = vsel %vm526, %v603, %v618
        %v621 = vunpack.c.l.s4 1934713408
        %v622 = vunpack.c.0.s8 %v621
        %v623 = vperm.slane %v617, %v622
        %v625 = vunpack.c.l.s4 1934713408
        %v626 = vunpack.c.0.s8 %v625
        %v627 = vperm.slane %v619, %v626
        %v628 = vrot.slane %v623, 4
        %v629 = vsel %vm526, %v628, %v611
        %v630 = vrot.slane %v611, 4
        %v631 = vsel %vm526, %v623, %v630
        %v632 = vrot.slane %v627, 4
        %v633 = vsel %vm526, %v632, %v615
        %v634 = vrot.slane %v615, 4
        %v635 = vsel %vm526, %v627, %v634
        %v636 = vpack.c.bf16 %v629, %v629
        %v637 = vpack.c.bf16 %v631, %v631
        %v638 = vpack.c.bf16 %v633, %v633
        %v639 = vpack.c.bf16 %v635, %v635
        %640 = vrot.lane.b32.xlu0 %v512, 96
        %v641 = vpop.permute.xlu0 %640
        %642 = vrot.lane.b32.xlu0 %v517, 96
        %v643 = vpop.permute.xlu0 %642
        %644 = vrot.lane.b32.xlu0 %v520, 96
        %v645 = vpop.permute.xlu0 %644
        %646 = vrot.lane.b32.xlu0 %v523, 96
        %v647 = vpop.permute.xlu0 %646
        %v652 = vrot.slane %v645, 4
        %v653 = vsel %vm526, %v652, %v641
        %v654 = vrot.slane %v641, 4
        %v655 = vsel %vm526, %v645, %v654
        %v657 = vunpack.c.l.s4 1983009808
        %v658 = vunpack.c.0.s8 %v657
        %v659 = vperm.slane %v653, %v658
        %v661 = vunpack.c.l.s4 1983009808
        %v662 = vunpack.c.0.s8 %v661
        %v663 = vperm.slane %v655, %v662
        %v664 = vrot.slane %v647, 4
        %v665 = vsel %vm526, %v664, %v643
        %v666 = vrot.slane %v643, 4
        %v667 = vsel %vm526, %v647, %v666
        %v669 = vunpack.c.l.s4 1983009808
        %v670 = vunpack.c.0.s8 %v669
        %v671 = vperm.slane %v665, %v670
        %v673 = vunpack.c.l.s4 1983009808
        %v674 = vunpack.c.0.s8 %v673
        %v675 = vperm.slane %v667, %v674
        %v676 = vrot.slane %v671, 4
        %v677 = vsel %vm526, %v676, %v659
        %v678 = vrot.slane %v659, 4
        %v679 = vsel %vm526, %v671, %v678
        %v681 = vunpack.c.l.s4 1934713408
        %v682 = vunpack.c.0.s8 %v681
        %v683 = vperm.slane %v677, %v682
        %v685 = vunpack.c.l.s4 1934713408
        %v686 = vunpack.c.0.s8 %v685
        %v687 = vperm.slane %v679, %v686
        %v688 = vrot.slane %v675, 4
        %v689 = vsel %vm526, %v688, %v663
        %v690 = vrot.slane %v663, 4
        %v691 = vsel %vm526, %v675, %v690
        %v693 = vunpack.c.l.s4 1934713408
        %v694 = vunpack.c.0.s8 %v693
        %v695 = vperm.slane %v689, %v694
        %v697 = vunpack.c.l.s4 1934713408
        %v698 = vunpack.c.0.s8 %v697
        %v699 = vperm.slane %v691, %v698
        %v700 = vrot.slane %v683, 4
        %v701 = vsel %vm526, 0.0, %v700
        %v702 = vrot.slane %v687, 4
        %v703 = vsel %vm526, 0.0, %v702
        %v704 = vrot.slane %v695, 4
        %v705 = vsel %vm526, 0.0, %v704
        %v706 = vrot.slane %v699, 4
        %v707 = vsel %vm526, 0.0, %v706
        %v708 = vsel %vm526, %v702, %v683
        %v710 = vunpack.c.l.s4 1983009808
        %v711 = vunpack.c.0.s8 %v710
        %v712 = vperm.slane %v708, %v711
        %v713 = vrot.slane %v703, 4
        %v714 = vsel %vm526, %v713, %v701
        %v716 = vunpack.c.l.s4 1983009808
        %v717 = vunpack.c.0.s8 %v716
        %v718 = vperm.slane %v714, %v717
        %v719 = vsel %vm526, %v706, %v695
        %v721 = vunpack.c.l.s4 1983009808
        %v722 = vunpack.c.0.s8 %v721
        %v723 = vperm.slane %v719, %v722
        %v724 = vrot.slane %v707, 4
        %v725 = vsel %vm526, %v724, %v705
        %v727 = vunpack.c.l.s4 1983009808
        %v728 = vunpack.c.0.s8 %v727
        %v729 = vperm.slane %v725, %v728
        %v730 = vrot.slane %v718, 4
        %v731 = vsel %vm526, %v730, %v712
        %v732 = vrot.slane %v712, 4
        %v733 = vsel %vm526, %v718, %v732
        %v735 = vunpack.c.l.s4 1934713408
        %v736 = vunpack.c.0.s8 %v735
        %v737 = vperm.slane %v731, %v736
        %v739 = vunpack.c.l.s4 1934713408
        %v740 = vunpack.c.0.s8 %v739
        %v741 = vperm.slane %v733, %v740
        %v742 = vrot.slane %v729, 4
        %v743 = vsel %vm526, %v742, %v723
        %v744 = vrot.slane %v723, 4
        %v745 = vsel %vm526, %v729, %v744
        %v747 = vunpack.c.l.s4 1934713408
        %v748 = vunpack.c.0.s8 %v747
        %v749 = vperm.slane %v743, %v748
        %v751 = vunpack.c.l.s4 1934713408
        %v752 = vunpack.c.0.s8 %v751
        %v753 = vperm.slane %v745, %v752
        %v754 = vrot.slane %v749, 4
        %v755 = vsel %vm526, %v754, %v737
        %v756 = vrot.slane %v737, 4
        %v757 = vsel %vm526, %v749, %v756
        %v758 = vrot.slane %v753, 4
        %v759 = vsel %vm526, %v758, %v741
        %v760 = vrot.slane %v741, 4
        %v761 = vsel %vm526, %v753, %v760
        %v762 = vpack.c.bf16 %v755, %v755
        %v763 = vpack.c.bf16 %v757, %v757
        %v764 = vpack.c.bf16 %v759, %v759
        %v765 = vpack.c.bf16 %v761, %v761
        %766 = vrot.lane.b32.xlu0 %v512, 64
        %v767 = vpop.permute.xlu0 %766
        %768 = vrot.lane.b32.xlu0 %v517, 64
        %v769 = vpop.permute.xlu0 %768
        %770 = vrot.lane.b32.xlu0 %v520, 64
        %v771 = vpop.permute.xlu0 %770
        %772 = vrot.lane.b32.xlu0 %v523, 64
        %v773 = vpop.permute.xlu0 %772
        %v778 = vrot.slane %v771, 4
        %v779 = vsel %vm526, %v778, %v767
        %v780 = vrot.slane %v767, 4
        %v781 = vsel %vm526, %v771, %v780
        %v783 = vunpack.c.l.s4 1983009808
        %v784 = vunpack.c.0.s8 %v783
        %v785 = vperm.slane %v779, %v784
        %v787 = vunpack.c.l.s4 1983009808
        %v788 = vunpack.c.0.s8 %v787
        %v789 = vperm.slane %v781, %v788
        %v790 = vrot.slane %v773, 4
        %v791 = vsel %vm526, %v790, %v769
        %v792 = vrot.slane %v769, 4
        %v793 = vsel %vm526, %v773, %v792
        %v795 = vunpack.c.l.s4 1983009808
        %v796 = vunpack.c.0.s8 %v795
        %v797 = vperm.slane %v791, %v796
        %v799 = vunpack.c.l.s4 1983009808
        %v800 = vunpack.c.0.s8 %v799
        %v801 = vperm.slane %v793, %v800
        %v802 = vrot.slane %v797, 4
        %v803 = vsel %vm526, %v802, %v785
        %v804 = vrot.slane %v785, 4
        %v805 = vsel %vm526, %v797, %v804
        %v807 = vunpack.c.l.s4 1934713408
        %v808 = vunpack.c.0.s8 %v807
        %v809 = vperm.slane %v803, %v808
        %v811 = vunpack.c.l.s4 1934713408
        %v812 = vunpack.c.0.s8 %v811
        %v813 = vperm.slane %v805, %v812
        %v814 = vrot.slane %v801, 4
        %v815 = vsel %vm526, %v814, %v789
        %v816 = vrot.slane %v789, 4
        %v817 = vsel %vm526, %v801, %v816
        %v819 = vunpack.c.l.s4 1934713408
        %v820 = vunpack.c.0.s8 %v819
        %v821 = vperm.slane %v815, %v820
        %v823 = vunpack.c.l.s4 1934713408
        %v824 = vunpack.c.0.s8 %v823
        %v825 = vperm.slane %v817, %v824
        %v826 = vrot.slane %v809, 4
        %v827 = vsel %vm526, 0.0, %v826
        %v828 = vrot.slane %v813, 4
        %v829 = vsel %vm526, 0.0, %v828
        %v830 = vrot.slane %v821, 4
        %v831 = vsel %vm526, 0.0, %v830
        %v832 = vrot.slane %v825, 4
        %v833 = vsel %vm526, 0.0, %v832
        %v834 = vsel %vm526, %v828, %v809
        %v836 = vunpack.c.l.s4 1983009808
        %v837 = vunpack.c.0.s8 %v836
        %v838 = vperm.slane %v834, %v837
        %v839 = vrot.slane %v829, 4
        %v840 = vsel %vm526, %v839, %v827
        %v842 = vunpack.c.l.s4 1983009808
        %v843 = vunpack.c.0.s8 %v842
        %v844 = vperm.slane %v840, %v843
        %v845 = vsel %vm526, %v832, %v821
        %v847 = vunpack.c.l.s4 1983009808
        %v848 = vunpack.c.0.s8 %v847
        %v849 = vperm.slane %v845, %v848
        %v850 = vrot.slane %v833, 4
        %v851 = vsel %vm526, %v850, %v831
        %v853 = vunpack.c.l.s4 1983009808
        %v854 = vunpack.c.0.s8 %v853
        %v855 = vperm.slane %v851, %v854
        %v856 = vrot.slane %v844, 4
        %v857 = vsel %vm526, %v856, %v838
        %v858 = vrot.slane %v838, 4
        %v859 = vsel %vm526, %v844, %v858
        %v861 = vunpack.c.l.s4 1934713408
        %v862 = vunpack.c.0.s8 %v861
        %v863 = vperm.slane %v857, %v862
        %v865 = vunpack.c.l.s4 1934713408
        %v866 = vunpack.c.0.s8 %v865
        %v867 = vperm.slane %v859, %v866
        %v868 = vrot.slane %v855, 4
        %v869 = vsel %vm526, %v868, %v849
        %v870 = vrot.slane %v849, 4
        %v871 = vsel %vm526, %v855, %v870
        %v873 = vunpack.c.l.s4 1934713408
        %v874 = vunpack.c.0.s8 %v873
        %v875 = vperm.slane %v869, %v874
        %v877 = vunpack.c.l.s4 1934713408
        %v878 = vunpack.c.0.s8 %v877
        %v879 = vperm.slane %v871, %v878
        %v880 = vrot.slane %v875, 4
        %v881 = vsel %vm526, %v880, %v863
        %v882 = vrot.slane %v863, 4
        %v883 = vsel %vm526, %v875, %v882
        %v884 = vrot.slane %v879, 4
        %v885 = vsel %vm526, %v884, %v867
        %v886 = vrot.slane %v867, 4
        %v887 = vsel %vm526, %v879, %v886
        %v888 = vpack.c.bf16 %v881, %v881
        %v889 = vpack.c.bf16 %v883, %v883
        %v890 = vpack.c.bf16 %v885, %v885
        %v891 = vpack.c.bf16 %v887, %v887
        %vm892 = vcmask 64512
        %v894 = vsel %vm892, %v636, 0
        %v897 = vsel %vm892, %v762, 0
        %899 = vmatpush.bf16.xpose.msra.mxu0 0
        %900 = vmatpush.bf16.xpose.msra.mxu0 0
        %901 = vmatpush.bf16.xpose.msra.mxu0 0
        %902 = vmatpush.bf16.xpose.msra.mxu0 0
        %903 = vmatpush.bf16.xpose.msra.mxu0 0
        %904 = vmatpush.bf16.xpose.msra.mxu0 0
        %905 = vmatpush.bf16.xpose.msra.mxu0 0
        %906 = vmatpush.bf16.xpose.msra.mxu0 %v897
        %907 = vmatmul.bf16.gmra.mxu0 %v894
        %v908 = vpop.f32.mrf.mxu0
        %v909 = vadd.f32 0.0, %v908
        %v910 = vpop.f32.mrf.mxu0
        %911 = vdwg.mxu0
        %v913 = vsel %vm892, %v637, 0
        %v916 = vsel %vm892, %v763, 0
        %918 = vmatpush.bf16.xpose.msra.mxu0 0
        %919 = vmatpush.bf16.xpose.msra.mxu0 0
        %920 = vmatpush.bf16.xpose.msra.mxu0 0
        %921 = vmatpush.bf16.xpose.msra.mxu0 0
        %922 = vmatpush.bf16.xpose.msra.mxu0 0
        %923 = vmatpush.bf16.xpose.msra.mxu0 0
        %924 = vmatpush.bf16.xpose.msra.mxu0 0
        %925 = vmatpush.bf16.xpose.msra.mxu0 %v916
        %926 = vmatmul.bf16.gmra.mxu0 %v913
        %v927 = vpop.f32.mrf.mxu0
        %v928 = vadd.f32 0.0, %v927
        %v929 = vpop.f32.mrf.mxu0
        %930 = vdwg.mxu0
        %v932 = vsel %vm892, %v638, 0
        %v935 = vsel %vm892, %v764, 0
        %937 = vmatpush.bf16.xpose.msra.mxu0 0
        %938 = vmatpush.bf16.xpose.msra.mxu0 0
        %939 = vmatpush.bf16.xpose.msra.mxu0 0
        %940 = vmatpush.bf16.xpose.msra.mxu0 0
        %941 = vmatpush.bf16.xpose.msra.mxu0 0
        %942 = vmatpush.bf16.xpose.msra.mxu0 0
        %943 = vmatpush.bf16.xpose.msra.mxu0 0
        %944 = vmatpush.bf16.xpose.msra.mxu0 %v935
        %945 = vmatmul.bf16.gmra.mxu0 %v932
        %v946 = vpop.f32.mrf.mxu0
        %v947 = vadd.f32 0.0, %v946
        %v948 = vpop.f32.mrf.mxu0
        %949 = vdwg.mxu0
        %v951 = vsel %vm892, %v639, 0
        %v954 = vsel %vm892, %v765, 0
        %956 = vmatpush.bf16.xpose.msra.mxu0 0
        %957 = vmatpush.bf16.xpose.msra.mxu0 0
        %958 = vmatpush.bf16.xpose.msra.mxu0 0
        %959 = vmatpush.bf16.xpose.msra.mxu0 0
        %960 = vmatpush.bf16.xpose.msra.mxu0 0
        %961 = vmatpush.bf16.xpose.msra.mxu0 0
        %962 = vmatpush.bf16.xpose.msra.mxu0 0
        %963 = vmatpush.bf16.xpose.msra.mxu0 %v954
        %964 = vmatmul.bf16.gmra.mxu0 %v951
        %v965 = vpop.f32.mrf.mxu0
        %v966 = vadd.f32 0.0, %v965
        %v967 = vpop.f32.mrf.mxu0
        %968 = vdwg.mxu0
        %v969 = vsel %vm892, %v909, -inf
        %970 = vmax.xlane.f32.xlu0 %v969
        %v971 = vpop.xlane.xlu0 %970
        %v972 = vsel %vm892, %v928, -inf
        %973 = vmax.xlane.f32.xlu0 %v972
        %v974 = vpop.xlane.xlu0 %973
        %v975 = vsel %vm892, %v947, -inf
        %976 = vmax.xlane.f32.xlu0 %v975
        %v977 = vpop.xlane.xlu0 %976
        %v978 = vsel %vm892, %v966, -inf
        %979 = vmax.xlane.f32.xlu0 %v978
        %v980 = vpop.xlane.xlu0 %979
        %v981 = vsub.f32 %v909, %v971
        %v982 = vsub.f32 %v928, %v974
        %v983 = vsub.f32 %v947, %v977
        %v984 = vsub.f32 %v966, %v980
        %v985 = vmul.f32 %v981, 1.442695
        %v986 = vpow.pop %v985
        %v987 = vmul.f32 %v982, 1.442695
        %v988 = vpow.pop %v987
        %v989 = vmul.f32 %v983, 1.442695
        %v990 = vpow.pop %v989
        %v991 = vmul.f32 %v984, 1.442695
        %v992 = vpow.pop %v991
        %v993 = vsel %vm892, %v986, 0.0
        %994 = vadd.xlane.f32.xlu0 %v993
        %v995 = vpop.xlane.xlu0 %994
        %v996 = vsel %vm892, %v988, 0.0
        %997 = vadd.xlane.f32.xlu0 %v996
        %v998 = vpop.xlane.xlu0 %997
        %v999 = vsel %vm892, %v990, 0.0
        %1000 = vadd.xlane.f32.xlu0 %v999
        %v1001 = vpop.xlane.xlu0 %1000
        %v1002 = vsel %vm892, %v992, 0.0
        %1003 = vadd.xlane.f32.xlu0 %v1002
        %v1004 = vpop.xlane.xlu0 %1003
        %v1005 = vrcp.pop %v995
        %v1006 = vmul.f32 %v995, %v1005
        %v1007 = vsub.f32 1.0, %v1006
        %v1008 = vmul.f32 %v1005, %v1007
        %v1009 = vadd.f32 %v1005, %v1008
        %vm1010 = vweird.f32 %v995
        %vm1011 = vweird.f32 %v1005
        %vm1012 = vmor %vm1010, %vm1011
        %v1013 = vsel %vm1012, %v1005, %v1009
        %v1014 = vand.u32 2147483647, %v995
        %vm1015 = vcmp.eq.f32.partialorder %v1014, 8.507059e+37
        %v1016 = vand.u32 %v995, 2147483648
        %v1017 = vor.u32 1.1754944e-38, %v1016
        %v1018 = vsel %vm1015, %v1017, %v1013
        %v1019 = vmul.f32 %v986, %v1018
        %v1020 = vrcp.pop %v998
        %v1021 = vmul.f32 %v998, %v1020
        %v1022 = vsub.f32 1.0, %v1021
        %v1023 = vmul.f32 %v1020, %v1022
        %v1024 = vadd.f32 %v1020, %v1023
        %vm1025 = vweird.f32 %v998
        %vm1026 = vweird.f32 %v1020
        %vm1027 = vmor %vm1025, %vm1026
        %v1028 = vsel %vm1027, %v1020, %v1024
        %v1029 = vand.u32 2147483647, %v998
        %vm1030 = vcmp.eq.f32.partialorder %v1029, 8.507059e+37
        %v1031 = vand.u32 %v998, 2147483648
        %v1032 = vor.u32 1.1754944e-38, %v1031
        %v1033 = vsel %vm1030, %v1032, %v1028
        %v1034 = vmul.f32 %v988, %v1033
        %v1035 = vrcp.pop %v1001
        %v1036 = vmul.f32 %v1001, %v1035
        %v1037 = vsub.f32 1.0, %v1036
        %v1038 = vmul.f32 %v1035, %v1037
        %v1039 = vadd.f32 %v1035, %v1038
        %vm1040 = vweird.f32 %v1001
        %vm1041 = vweird.f32 %v1035
        %vm1042 = vmor %vm1040, %vm1041
        %v1043 = vsel %vm1042, %v1035, %v1039
        %v1044 = vand.u32 2147483647, %v1001
        %vm1045 = vcmp.eq.f32.partialorder %v1044, 8.507059e+37
        %v1046 = vand.u32 %v1001, 2147483648
        %v1047 = vor.u32 1.1754944e-38, %v1046
        %v1048 = vsel %vm1045, %v1047, %v1043
        %v1049 = vmul.f32 %v990, %v1048
        %v1050 = vrcp.pop %v1004
        %v1051 = vmul.f32 %v1004, %v1050
        %v1052 = vsub.f32 1.0, %v1051
        %v1053 = vmul.f32 %v1050, %v1052
        %v1054 = vadd.f32 %v1050, %v1053
        %vm1055 = vweird.f32 %v1004
        %vm1056 = vweird.f32 %v1050
        %vm1057 = vmor %vm1055, %vm1056
        %v1058 = vsel %vm1057, %v1050, %v1054
        %v1059 = vand.u32 2147483647, %v1004
        %vm1060 = vcmp.eq.f32.partialorder %v1059, 8.507059e+37
        %v1061 = vand.u32 %v1004, 2147483648
        %v1062 = vor.u32 1.1754944e-38, %v1061
        %v1063 = vsel %vm1060, %v1062, %v1058
        %v1064 = vmul.f32 %v992, %v1063
        %v1065 = vpack.c.bf16 %v1019, %v1019
        %v1066 = vpack.c.bf16 %v1034, %v1034
        %v1067 = vpack.c.bf16 %v1049, %v1049
        %v1068 = vpack.c.bf16 %v1064, %v1064
        %v1070 = vsel %vm892, %v1065, 0
        %vm1072 = vcmask 1043456
        %v1074 = vsel %vm1072, %v888, 0
        %1076 = vmatpush.bf16.msra.mxu0 0
        %1077 = vmatpush.bf16.msra.mxu0 0
        %1078 = vmatpush.bf16.msra.mxu0 0
        %1079 = vmatpush.bf16.msra.mxu0 0
        %1080 = vmatpush.bf16.msra.mxu0 0
        %1081 = vmatpush.bf16.msra.mxu0 0
        %1082 = vmatpush.bf16.msra.mxu0 0
        %1083 = vmatpush.bf16.msra.mxu0 %v1074
        %1084 = vmatmul.bf16.gmra.mxu0 %v1070
        %v1085 = vpop.f32.mrf.mxu0
        %v1086 = vadd.f32 0.0, %v1085
        %v1087 = vpop.f32.mrf.mxu0
        %1088 = vdwg.mxu0
        %v1090 = vsel %vm892, %v1066, 0
        %v1093 = vsel %vm1072, %v889, 0
        %1095 = vmatpush.bf16.msra.mxu0 0
        %1096 = vmatpush.bf16.msra.mxu0 0
        %1097 = vmatpush.bf16.msra.mxu0 0
        %1098 = vmatpush.bf16.msra.mxu0 0
        %1099 = vmatpush.bf16.msra.mxu0 0
        %1100 = vmatpush.bf16.msra.mxu0 0
        %1101 = vmatpush.bf16.msra.mxu0 0
        %1102 = vmatpush.bf16.msra.mxu0 %v1093
        %1103 = vmatmul.bf16.gmra.mxu0 %v1090
        %v1104 = vpop.f32.mrf.mxu0
        %v1105 = vadd.f32 0.0, %v1104
        %v1106 = vpop.f32.mrf.mxu0
        %1107 = vdwg.mxu0
        %v1109 = vsel %vm892, %v1067, 0
        %v1112 = vsel %vm1072, %v890, 0
        %1114 = vmatpush.bf16.msra.mxu0 0
        %1115 = vmatpush.bf16.msra.mxu0 0
        %1116 = vmatpush.bf16.msra.mxu0 0
        %1117 = vmatpush.bf16.msra.mxu0 0
        %1118 = vmatpush.bf16.msra.mxu0 0
        %1119 = vmatpush.bf16.msra.mxu0 0
        %1120 = vmatpush.bf16.msra.mxu0 0
        %1121 = vmatpush.bf16.msra.mxu0 %v1112
        %1122 = vmatmul.bf16.gmra.mxu0 %v1109
        %v1123 = vpop.f32.mrf.mxu0
        %v1124 = vadd.f32 0.0, %v1123
        %v1125 = vpop.f32.mrf.mxu0
        %1126 = vdwg.mxu0
        %v1128 = vsel %vm892, %v1068, 0
        %v1131 = vsel %vm1072, %v891, 0
        %1133 = vmatpush.bf16.msra.mxu0 0
        %1134 = vmatpush.bf16.msra.mxu0 0
        %1135 = vmatpush.bf16.msra.mxu0 0
        %1136 = vmatpush.bf16.msra.mxu0 0
        %1137 = vmatpush.bf16.msra.mxu0 0
        %1138 = vmatpush.bf16.msra.mxu0 0
        %1139 = vmatpush.bf16.msra.mxu0 0
        %1140 = vmatpush.bf16.msra.mxu0 %v1131
        %1141 = vmatmul.bf16.gmra.mxu0 %v1128
        %v1142 = vpop.f32.mrf.mxu0
        %v1143 = vadd.f32 0.0, %v1142
        %v1144 = vpop.f32.mrf.mxu0
        %1145 = vdwg.mxu0
        %v1146 = vrot.slane %v1124, 4
        %v1147 = vsel %vm526, %v1146, %v1086
        %v1148 = vrot.slane %v1086, 4
        %v1149 = vsel %vm526, %v1124, %v1148
        %v1151 = vunpack.c.l.s4 1983009808
        %v1152 = vunpack.c.0.s8 %v1151
        %v1153 = vperm.slane %v1147, %v1152
        %v1155 = vunpack.c.l.s4 1983009808
        %v1156 = vunpack.c.0.s8 %v1155
        %v1157 = vperm.slane %v1149, %v1156
        %v1158 = vrot.slane %v1143, 4
        %v1159 = vsel %vm526, %v1158, %v1105
        %v1160 = vrot.slane %v1105, 4
        %v1161 = vsel %vm526, %v1143, %v1160
        %v1163 = vunpack.c.l.s4 1983009808
        %v1164 = vunpack.c.0.s8 %v1163
        %v1165 = vperm.slane %v1159, %v1164
        %v1167 = vunpack.c.l.s4 1983009808
        %v1168 = vunpack.c.0.s8 %v1167
        %v1169 = vperm.slane %v1161, %v1168
        %v1170 = vrot.slane %v1165, 4
        %v1171 = vsel %vm526, %v1170, %v1153
        %v1172 = vrot.slane %v1153, 4
        %v1173 = vsel %vm526, %v1165, %v1172
        %v1175 = vunpack.c.l.s4 1934713408
        %v1176 = vunpack.c.0.s8 %v1175
        %v1177 = vperm.slane %v1171, %v1176
        %v1179 = vunpack.c.l.s4 1934713408
        %v1180 = vunpack.c.0.s8 %v1179
        %v1181 = vperm.slane %v1173, %v1180
        %v1182 = vrot.slane %v1169, 4
        %v1183 = vsel %vm526, %v1182, %v1157
        %v1184 = vrot.slane %v1157, 4
        %v1185 = vsel %vm526, %v1169, %v1184
        %v1187 = vunpack.c.l.s4 1934713408
        %v1188 = vunpack.c.0.s8 %v1187
        %v1189 = vperm.slane %v1183, %v1188
        %v1191 = vunpack.c.l.s4 1934713408
        %v1192 = vunpack.c.0.s8 %v1191
        %v1193 = vperm.slane %v1185, %v1192
        %v1194 = vrot.slane %v1177, 4
        %v1195 = vsel %vm526, 0.0, %v1194
        %v1196 = vrot.slane %v1181, 4
        %v1197 = vsel %vm526, 0.0, %v1196
        %v1198 = vrot.slane %v1189, 4
        %v1199 = vsel %vm526, 0.0, %v1198
        %v1200 = vrot.slane %v1193, 4
        %v1201 = vsel %vm526, 0.0, %v1200
        %v1202 = vsel %vm526, %v1196, %v1177
        %v1204 = vunpack.c.l.s4 1983009808
        %v1205 = vunpack.c.0.s8 %v1204
        %v1206 = vperm.slane %v1202, %v1205
        %v1207 = vrot.slane %v1197, 4
        %v1208 = vsel %vm526, %v1207, %v1195
        %v1210 = vunpack.c.l.s4 1983009808
        %v1211 = vunpack.c.0.s8 %v1210
        %v1212 = vperm.slane %v1208, %v1211
        %v1213 = vsel %vm526, %v1200, %v1189
        %v1215 = vunpack.c.l.s4 1983009808
        %v1216 = vunpack.c.0.s8 %v1215
        %v1217 = vperm.slane %v1213, %v1216
        %v1218 = vrot.slane %v1201, 4
        %v1219 = vsel %vm526, %v1218, %v1199
        %v1221 = vunpack.c.l.s4 1983009808
        %v1222 = vunpack.c.0.s8 %v1221
        %v1223 = vperm.slane %v1219, %v1222
        %v1224 = vrot.slane %v1212, 4
        %v1225 = vsel %vm526, %v1224, %v1206
        %v1226 = vrot.slane %v1206, 4
        %v1227 = vsel %vm526, %v1212, %v1226
        %v1229 = vunpack.c.l.s4 1934713408
        %v1230 = vunpack.c.0.s8 %v1229
        %v1231 = vperm.slane %v1225, %v1230
        %v1233 = vunpack.c.l.s4 1934713408
        %v1234 = vunpack.c.0.s8 %v1233
        %v1235 = vperm.slane %v1227, %v1234
        %v1236 = vrot.slane %v1223, 4
        %v1237 = vsel %vm526, %v1236, %v1217
        %v1238 = vrot.slane %v1217, 4
        %v1239 = vsel %vm526, %v1223, %v1238
        %v1241 = vunpack.c.l.s4 1934713408
        %v1242 = vunpack.c.0.s8 %v1241
        %v1243 = vperm.slane %v1237, %v1242
        %v1245 = vunpack.c.l.s4 1934713408
        %v1246 = vunpack.c.0.s8 %v1245
        %v1247 = vperm.slane %v1239, %v1246
        %v1248 = vrot.slane %v1243, 4
        %v1249 = vsel %vm526, %v1248, %v1231
        %v1250 = vrot.slane %v1231, 4
        %v1251 = vsel %vm526, %v1243, %v1250
        %v1252 = vrot.slane %v1247, 4
        %v1253 = vsel %vm526, %v1252, %v1235
        %v1254 = vrot.slane %v1235, 4
        %v1255 = vsel %vm526, %v1247, %v1254
        %1257 = vrot.lane.b32.xlu0 %v1251, 8
        %v1258 = vpop.permute.xlu0 %1257
        %1261 = vrot.lane.b32.xlu0 %v1253, 16
        %v1262 = vpop.permute.xlu0 %1261
        %1265 = vrot.lane.b32.xlu0 %v1255, 24
        %v1266 = vpop.permute.xlu0 %1265
        %v1268 = vsel %vm892, %v1249, %v1258
        %vm1269 = vcmask 130048
        %v1270 = vsel %vm1269, %v1268, %v1262
        %vm1271 = vcmask 195584
        %v1272 = vsel %vm1271, %v1270, %v1266
        %v1273 = vpack.c.bf16 %v1272, %v1272
        %v1274 = vld [vmem:[%s5] sm:$0xf]
        %v1275 = vld [vmem:[%s5 + $0x4] sm:$0xf]
        %v1276 = vld [vmem:[%s5 + $0x8] sm:$0xf]
        %v1277 = vld [vmem:[%s5 + $0xc] sm:$0xf]
        %v1278 = vld [vmem:[%s6] sm:$0x1]
        %v1280 = vperm.slane %v1278, 0
        %v1286 = vunpack.c.l.b16 %v1274
        %v1287 = vunpack.c.l.b16 %v1275
        %v1288 = vunpack.c.l.b16 %v1276
        %v1289 = vunpack.c.l.b16 %v1277
        %v1290 = vpack.c.b16 %v1287, %v1286
        %v1291 = vpack.c.b16 %v1289, %v1288
        %v1295 = vsel %vm440, %v1273, 0
        %1297 = vmatpush.bf16.msra.mxu0 0
        %1298 = vmatpush.bf16.msra.mxu0 0
        %1299 = vmatpush.bf16.msra.mxu0 0
        %1300 = vmatpush.bf16.msra.mxu0 0
        %1301 = vmatpush.bf16.msra.mxu0 0
        %1302 = vmatpush.bf16.msra.mxu0 0
        %1303 = vmatpush.bf16.msra.mxu0 %v1291
        %1304 = vmatpush.bf16.msra.mxu0 %v1290
        %1305 = vmatmul.bf16.gmra.mxu0 %v1295
        %v1306 = vpop.f32.mrf.mxu0
        %v1307 = vadd.f32 %v1280, %v1306
        %v1308 = vpop.f32.mrf.mxu0
        %1309 = vdwg.mxu0
        %v1310 = vadd.f32 %v437, %v1307
        %v1311 = vld [vmem:[%s7] sm:$0x1]
        %v1312 = vld [vmem:[%s8] sm:$0x1]
        %v1313 = vsel %vm440, %v1310, 0.0
        %1314 = vadd.xlane.f32.xlu0 %v1313
        %v1315 = vpop.xlane.xlu0 %1314
        %v1316 = vmul.f32 %v1315, %v450
        %v1317 = vsub.f32 %v1310, %v1316
        %v1318 = vmul.f32 %v1317, %v1317
        %v1319 = vsel %vm440, %v1318, 0.0
        %1320 = vadd.xlane.f32.xlu0 %v1319
        %v1321 = vpop.xlane.xlu0 %1320
        %v1322 = vmul.f32 %v1321, %v450
        %v1323 = vadd.f32 %v1322, 1e-06
        %v1324 = vrsqrt.pop %v1323
        %v1325 = vmul.f32 %v1324, %v1323
        %v1326 = vmul.f32 %v1325, %v1324
        %v1327 = vmul.f32 0.5, %v1326
        %v1328 = vsub.f32 1.5, %v1327
        %v1329 = vmul.f32 %v1324, %v1328
        %vm1330 = vweird.f32 %v1323
        %vm1331 = vweird.f32 %v1324
        %vm1332 = vmor %vm1330, %vm1331
        %v1333 = vsel %vm1332, %v1324, %v1329
        %v1334 = vmul.f32 %v1317, %v1333
        %v1336 = vperm.slane %v1311, 0
        %v1338 = vmul.f32 %v1334, %v1336
        %v1340 = vperm.slane %v1312, 0
        %v1342 = vadd.f32 %v1338, %v1340
        %v1343 = vpack.c.bf16 %v1342, %v1342
        %v1344 = vld [vmem:[%s9] sm:$0xf]
        %v1345 = vld [vmem:[%s9 + $0x4] sm:$0xf]
        %v1346 = vld [vmem:[%s9 + $0x8] sm:$0xf]
        %v1347 = vld [vmem:[%s9 + $0xc] sm:$0xf]
        %v1348 = vld [vmem:[%s10] sm:$0x1]
        %v1350 = vperm.slane %v1348, 0
        %v1356 = vunpack.c.l.b16 %v1344
        %v1357 = vunpack.c.l.b16 %v1345
        %v1358 = vunpack.c.l.b16 %v1346
        %v1359 = vunpack.c.l.b16 %v1347
        %v1360 = vpack.c.b16 %v1357, %v1356
        %v1361 = vpack.c.b16 %v1359, %v1358
        %v1365 = vsel %vm440, %v1343, 0
        %1367 = vmatpush.bf16.msra.mxu0 0
        %1368 = vmatpush.bf16.msra.mxu0 0
        %1369 = vmatpush.bf16.msra.mxu0 0
        %1370 = vmatpush.bf16.msra.mxu0 0
        %1371 = vmatpush.bf16.msra.mxu0 0
        %1372 = vmatpush.bf16.msra.mxu0 0
        %1373 = vmatpush.bf16.msra.mxu0 %v1361
        %1374 = vmatpush.bf16.msra.mxu0 %v1360
        %1375 = vmatmul.bf16.gmra.mxu0 %v1365
        %v1376 = vpop.f32.mrf.mxu0
        %v1377 = vadd.f32 %v1350, %v1376
        %v1378 = vpop.f32.mrf.mxu0
        %1379 = vdwg.mxu0
        %v1380 = vmul.f32 %v1377, 0.5
        %v1381 = vmul.f32 %v1377, 0.044715
        %v1382 = vmul.f32 %v1381, %v1377
        %v1383 = vmul.f32 %v1382, %v1377
        %v1384 = vadd.f32 %v1377, %v1383
        %v1385 = vmul.f32 %v1384, 0.7978846
        %v1386 = vtanh.pop %v1385
        %v1387 = vadd.f32 %v1386, 1.0
        %v1388 = vmul.f32 %v1380, %v1387
        %v1389 = vpack.c.bf16 %v1388, %v1388
        %v1390 = vld [vmem:[%s11] sm:$0xf]
        %v1391 = vld [vmem:[%s11 + $0x4] sm:$0xf]
        %v1392 = vld [vmem:[%s11 + $0x8] sm:$0xf]
        %v1393 = vld [vmem:[%s11 + $0xc] sm:$0xf]
        %v1394 = vld [vmem:[%s11 + $0x10] sm:$0xf]
        %v1395 = vld [vmem:[%s11 + $0x14] sm:$0xf]
        %v1396 = vld [vmem:[%s11 + $0x18] sm:$0xf]
        %v1397 = vld [vmem:[%s11 + $0x1c] sm:$0xf]
        %v1398 = vld [vmem:[%s11 + $0x20] sm:$0xf]
        %v1399 = vld [vmem:[%s11 + $0x24] sm:$0xf]
        %v1400 = vld [vmem:[%s11 + $0x28] sm:$0xf]
        %v1401 = vld [vmem:[%s11 + $0x2c] sm:$0xf]
        %v1402 = vld [vmem:[%s11 + $0x30] sm:$0xf]
        %v1403 = vld [vmem:[%s11 + $0x34] sm:$0xf]
        %v1404 = vld [vmem:[%s11 + $0x38] sm:$0xf]
        %v1405 = vld [vmem:[%s11 + $0x3c] sm:$0xf]
        %v1406 = vld [vmem:[%s12] sm:$0x1]
        %v1408 = vperm.slane %v1406, 0
        %v1426 = vunpack.c.l.b16 %v1390
        %v1427 = vunpack.c.l.b16 %v1391
        %v1428 = vunpack.c.l.b16 %v1392
        %v1429 = vunpack.c.l.b16 %v1393
        %v1430 = vunpack.c.l.b16 %v1394
        %v1431 = vunpack.c.l.b16 %v1395
        %v1432 = vunpack.c.l.b16 %v1396
        %v1433 = vunpack.c.l.b16 %v1397
        %v1434 = vunpack.c.l.b16 %v1398
        %v1435 = vunpack.c.l.b16 %v1399
        %v1436 = vunpack.c.l.b16 %v1400
        %v1437 = vunpack.c.l.b16 %v1401
        %v1438 = vunpack.c.l.b16 %v1402
        %v1439 = vunpack.c.l.b16 %v1403
        %v1440 = vunpack.c.l.b16 %v1404
        %v1441 = vunpack.c.l.b16 %v1405
        %v1442 = vpack.c.b16 %v1427, %v1426
        %v1443 = vpack.c.b16 %v1429, %v1428
        %v1444 = vpack.c.b16 %v1431, %v1430
        %v1445 = vpack.c.b16 %v1433, %v1432
        %v1446 = vpack.c.b16 %v1435, %v1434
        %v1447 = vpack.c.b16 %v1437, %v1436
        %v1448 = vpack.c.b16 %v1439, %v1438
        %v1449 = vpack.c.b16 %v1441, %v1440
        %1458 = vmatpush.bf16.msra.mxu0 %v1449
        %1459 = vmatpush.bf16.msra.mxu0 %v1448
        %1460 = vmatpush.bf16.msra.mxu0 %v1447
        %1461 = vmatpush.bf16.msra.mxu0 %v1446
        %1462 = vmatpush.bf16.msra.mxu0 %v1445
        %1463 = vmatpush.bf16.msra.mxu0 %v1444
        %1464 = vmatpush.bf16.msra.mxu0 %v1443
        %1465 = vmatpush.bf16.msra.mxu0 %v1442
        %1466 = vmatmul.bf16.gmra.mxu0 %v1389
        %v1467 = vpop.f32.mrf.mxu0
        %v1468 = vadd.f32 %v1408, %v1467
        %v1469 = vpop.f32.mrf.mxu0
        %1470 = vdwg.mxu0
        %v1471 = vadd.f32 %v1310, %v1468
        %s1472 = scalar_lea.vmem %s1, 1
        %v1473 = vld [vmem:[%s1472] sm:$0x1]
        %s1474 = scalar_lea.vmem %s2, 1
        %v1475 = vld [vmem:[%s1474] sm:$0x1]
        %v1476 = vsel %vm440, %v1471, 0.0
        %1477 = vadd.xlane.f32.xlu0 %v1476
        %v1478 = vpop.xlane.xlu0 %1477
        %v1479 = vmul.f32 %v1478, %v450
        %v1480 = vsub.f32 %v1471, %v1479
        %v1481 = vmul.f32 %v1480, %v1480
        %v1482 = vsel %vm440, %v1481, 0.0
        %1483 = vadd.xlane.f32.xlu0 %v1482
        %v1484 = vpop.xlane.xlu0 %1483
        %v1485 = vmul.f32 %v1484, %v450
        %v1486 = vadd.f32 %v1485, 1e-06
        %v1487 = vrsqrt.pop %v1486
        %v1488 = vmul.f32 %v1487, %v1486
        %v1489 = vmul.f32 %v1488, %v1487
        %v1490 = vmul.f32 0.5, %v1489
        %v1491 = vsub.f32 1.5, %v1490
        %v1492 = vmul.f32 %v1487, %v1491
        %vm1493 = vweird.f32 %v1486
        %vm1494 = vweird.f32 %v1487
        %vm1495 = vmor %vm1493, %vm1494
        %v1496 = vsel %vm1495, %v1487, %v1492
        %v1497 = vmul.f32 %v1480, %v1496
        %v1499 = vperm.slane %v1473, 0
        %v1501 = vmul.f32 %v1497, %v1499
        %v1503 = vperm.slane %v1475, 0
        %v1505 = vadd.f32 %v1501, %v1503
        %v1506 = vpack.c.bf16 %v1505, %v1505
        %s1507 = scalar_lea.vmem %s3, 16
        %v1508 = vld [vmem:[%s1507] sm:$0xf]
        %v1509 = vld [vmem:[%s1507 + $0x4] sm:$0xf]
        %v1510 = vld [vmem:[%s1507 + $0x8] sm:$0xf]
        %v1511 = vld [vmem:[%s1507 + $0xc] sm:$0xf]
        %s1512 = scalar_lea.vmem %s4, 1
        %v1513 = vld [vmem:[%s1512] sm:$0x1]
        %v1515 = vperm.slane %v1513, 0
        %v1521 = vunpack.c.l.b16 %v1508
        %v1522 = vunpack.c.l.b16 %v1509
        %v1523 = vunpack.c.l.b16 %v1510
        %v1524 = vunpack.c.l.b16 %v1511
        %v1525 = vpack.c.b16 %v1522, %v1521
        %v1526 = vpack.c.b16 %v1524, %v1523
        %v1530 = vsel %vm440, %v1506, 0
        %1532 = vmatpush.bf16.msra.mxu0 0
        %1533 = vmatpush.bf16.msra.mxu0 0
        %1534 = vmatpush.bf16.msra.mxu0 0
        %1535 = vmatpush.bf16.msra.mxu0 0
        %1536 = vmatpush.bf16.msra.mxu0 0
        %1537 = vmatpush.bf16.msra.mxu0 0
        %1538 = vmatpush.bf16.msra.mxu0 %v1526
        %1539 = vmatpush.bf16.msra.mxu0 %v1525
        %1540 = vmatmul.bf16.gmra.mxu0 %v1530
        %v1541 = vpop.f32.mrf.mxu0
        %v1542 = vadd.f32 %v1515, %v1541
        %v1543 = vpop.f32.mrf.mxu0
        %1544 = vdwg.mxu0
        %1546 = vrot.lane.b32.xlu0 %v1542, 120
        %v1547 = vpop.permute.xlu0 %1546
        %1549 = vrot.lane.b32.xlu0 %v1542, 112
        %v1550 = vpop.permute.xlu0 %1549
        %1552 = vrot.lane.b32.xlu0 %v1542, 104
        %v1553 = vpop.permute.xlu0 %1552
        %v1555 = vrot.slane %v1550, 4
        %v1556 = vsel %vm526, %v1555, %v1542
        %v1557 = vrot.slane %v1542, 4
        %v1558 = vsel %vm526, %v1550, %v1557
        %v1560 = vunpack.c.l.s4 1983009808
        %v1561 = vunpack.c.0.s8 %v1560
        %v1562 = vperm.slane %v1556, %v1561
        %v1564 = vunpack.c.l.s4 1983009808
        %v1565 = vunpack.c.0.s8 %v1564
        %v1566 = vperm.slane %v1558, %v1565
        %v1567 = vrot.slane %v1553, 4
        %v1568 = vsel %vm526, %v1567, %v1547
        %v1569 = vrot.slane %v1547, 4
        %v1570 = vsel %vm526, %v1553, %v1569
        %v1572 = vunpack.c.l.s4 1983009808
        %v1573 = vunpack.c.0.s8 %v1572
        %v1574 = vperm.slane %v1568, %v1573
        %v1576 = vunpack.c.l.s4 1983009808
        %v1577 = vunpack.c.0.s8 %v1576
        %v1578 = vperm.slane %v1570, %v1577
        %v1579 = vrot.slane %v1574, 4
        %v1580 = vsel %vm526, %v1579, %v1562
        %v1581 = vrot.slane %v1562, 4
        %v1582 = vsel %vm526, %v1574, %v1581
        %v1584 = vunpack.c.l.s4 1934713408
        %v1585 = vunpack.c.0.s8 %v1584
        %v1586 = vperm.slane %v1580, %v1585
        %v1588 = vunpack.c.l.s4 1934713408
        %v1589 = vunpack.c.0.s8 %v1588
        %v1590 = vperm.slane %v1582, %v1589
        %v1591 = vrot.slane %v1578, 4
        %v1592 = vsel %vm526, %v1591, %v1566
        %v1593 = vrot.slane %v1566, 4
        %v1594 = vsel %vm526, %v1578, %v1593
        %v1596 = vunpack.c.l.s4 1934713408
        %v1597 = vunpack.c.0.s8 %v1596
        %v1598 = vperm.slane %v1592, %v1597
        %v1600 = vunpack.c.l.s4 1934713408
        %v1601 = vunpack.c.0.s8 %v1600
        %v1602 = vperm.slane %v1594, %v1601
        %v1603 = vrot.slane %v1586, 4
        %v1604 = vsel %vm526, 0.0, %v1603
        %v1605 = vrot.slane %v1590, 4
        %v1606 = vsel %vm526, 0.0, %v1605
        %v1607 = vrot.slane %v1598, 4
        %v1608 = vsel %vm526, 0.0, %v1607
        %v1609 = vrot.slane %v1602, 4
        %v1610 = vsel %vm526, 0.0, %v1609
        %v1611 = vsel %vm526, %v1605, %v1586
        %v1613 = vunpack.c.l.s4 1983009808
        %v1614 = vunpack.c.0.s8 %v1613
        %v1615 = vperm.slane %v1611, %v1614
        %v1616 = vrot.slane %v1606, 4
        %v1617 = vsel %vm526, %v1616, %v1604
        %v1619 = vunpack.c.l.s4 1983009808
        %v1620 = vunpack.c.0.s8 %v1619
        %v1621 = vperm.slane %v1617, %v1620
        %v1622 = vsel %vm526, %v1609, %v1598
        %v1624 = vunpack.c.l.s4 1983009808
        %v1625 = vunpack.c.0.s8 %v1624
        %v1626 = vperm.slane %v1622, %v1625
        %v1627 = vrot.slane %v1610, 4
        %v1628 = vsel %vm526, %v1627, %v1608
        %v1630 = vunpack.c.l.s4 1983009808
        %v1631 = vunpack.c.0.s8 %v1630
        %v1632 = vperm.slane %v1628, %v1631
        %v1633 = vrot.slane %v1621, 4
        %v1634 = vsel %vm526, %v1633, %v1615
        %v1635 = vrot.slane %v1615, 4
        %v1636 = vsel %vm526, %v1621, %v1635
        %v1638 = vunpack.c.l.s4 1934713408
        %v1639 = vunpack.c.0.s8 %v1638
        %v1640 = vperm.slane %v1634, %v1639
        %v1642 = vunpack.c.l.s4 1934713408
        %v1643 = vunpack.c.0.s8 %v1642
        %v1644 = vperm.slane %v1636, %v1643
        %v1645 = vrot.slane %v1632, 4
        %v1646 = vsel %vm526, %v1645, %v1626
        %v1647 = vrot.slane %v1626, 4
        %v1648 = vsel %vm526, %v1632, %v1647
        %v1650 = vunpack.c.l.s4 1934713408
        %v1651 = vunpack.c.0.s8 %v1650
        %v1652 = vperm.slane %v1646, %v1651
        %v1654 = vunpack.c.l.s4 1934713408
        %v1655 = vunpack.c.0.s8 %v1654
        %v1656 = vperm.slane %v1648, %v1655
        %v1657 = vrot.slane %v1652, 4
        %v1658 = vsel %vm526, %v1657, %v1640
        %v1659 = vrot.slane %v1640, 4
        %v1660 = vsel %vm526, %v1652, %v1659
        %v1661 = vrot.slane %v1656, 4
        %v1662 = vsel %vm526, %v1661, %v1644
        %v1663 = vrot.slane %v1644, 4
        %v1664 = vsel %vm526, %v1656, %v1663
        %v1665 = vpack.c.bf16 %v1658, %v1658
        %v1666 = vpack.c.bf16 %v1660, %v1660
        %v1667 = vpack.c.bf16 %v1662, %v1662
        %v1668 = vpack.c.bf16 %v1664, %v1664
        %1669 = vrot.lane.b32.xlu0 %v1542, 96
        %v1670 = vpop.permute.xlu0 %1669
        %1671 = vrot.lane.b32.xlu0 %v1547, 96
        %v1672 = vpop.permute.xlu0 %1671
        %1673 = vrot.lane.b32.xlu0 %v1550, 96
        %v1674 = vpop.permute.xlu0 %1673
        %1675 = vrot.lane.b32.xlu0 %v1553, 96
        %v1676 = vpop.permute.xlu0 %1675
        %v1681 = vrot.slane %v1674, 4
        %v1682 = vsel %vm526, %v1681, %v1670
        %v1683 = vrot.slane %v1670, 4
        %v1684 = vsel %vm526, %v1674, %v1683
        %v1686 = vunpack.c.l.s4 1983009808
        %v1687 = vunpack.c.0.s8 %v1686
        %v1688 = vperm.slane %v1682, %v1687
        %v1690 = vunpack.c.l.s4 1983009808
        %v1691 = vunpack.c.0.s8 %v1690
        %v1692 = vperm.slane %v1684, %v1691
        %v1693 = vrot.slane %v1676, 4
        %v1694 = vsel %vm526, %v1693, %v1672
        %v1695 = vrot.slane %v1672, 4
        %v1696 = vsel %vm526, %v1676, %v1695
        %v1698 = vunpack.c.l.s4 1983009808
        %v1699 = vunpack.c.0.s8 %v1698
        %v1700 = vperm.slane %v1694, %v1699
        %v1702 = vunpack.c.l.s4 1983009808
        %v1703 = vunpack.c.0.s8 %v1702
        %v1704 = vperm.slane %v1696, %v1703
        %v1705 = vrot.slane %v1700, 4
        %v1706 = vsel %vm526, %v1705, %v1688
        %v1707 = vrot.slane %v1688, 4
        %v1708 = vsel %vm526, %v1700, %v1707
        %v1710 = vunpack.c.l.s4 1934713408
        %v1711 = vunpack.c.0.s8 %v1710
        %v1712 = vperm.slane %v1706, %v1711
        %v1714 = vunpack.c.l.s4 1934713408
        %v1715 = vunpack.c.0.s8 %v1714
        %v1716 = vperm.slane %v1708, %v1715
        %v1717 = vrot.slane %v1704, 4
        %v1718 = vsel %vm526, %v1717, %v1692
        %v1719 = vrot.slane %v1692, 4
        %v1720 = vsel %vm526, %v1704, %v1719
        %v1722 = vunpack.c.l.s4 1934713408
        %v1723 = vunpack.c.0.s8 %v1722
        %v1724 = vperm.slane %v1718, %v1723
        %v1726 = vunpack.c.l.s4 1934713408
        %v1727 = vunpack.c.0.s8 %v1726
        %v1728 = vperm.slane %v1720, %v1727
        %v1729 = vrot.slane %v1712, 4
        %v1730 = vsel %vm526, 0.0, %v1729
        %v1731 = vrot.slane %v1716, 4
        %v1732 = vsel %vm526, 0.0, %v1731
        %v1733 = vrot.slane %v1724, 4
        %v1734 = vsel %vm526, 0.0, %v1733
        %v1735 = vrot.slane %v1728, 4
        %v1736 = vsel %vm526, 0.0, %v1735
        %v1737 = vsel %vm526, %v1731, %v1712
        %v1739 = vunpack.c.l.s4 1983009808
        %v1740 = vunpack.c.0.s8 %v1739
        %v1741 = vperm.slane %v1737, %v1740
        %v1742 = vrot.slane %v1732, 4
        %v1743 = vsel %vm526, %v1742, %v1730
        %v1745 = vunpack.c.l.s4 1983009808
        %v1746 = vunpack.c.0.s8 %v1745
        %v1747 = vperm.slane %v1743, %v1746
        %v1748 = vsel %vm526, %v1735, %v1724
        %v1750 = vunpack.c.l.s4 1983009808
        %v1751 = vunpack.c.0.s8 %v1750
        %v1752 = vperm.slane %v1748, %v1751
        %v1753 = vrot.slane %v1736, 4
        %v1754 = vsel %vm526, %v1753, %v1734
        %v1756 = vunpack.c.l.s4 1983009808
        %v1757 = vunpack.c.0.s8 %v1756
        %v1758 = vperm.slane %v1754, %v1757
        %v1759 = vrot.slane %v1747, 4
        %v1760 = vsel %vm526, %v1759, %v1741
        %v1761 = vrot.slane %v1741, 4
        %v1762 = vsel %vm526, %v1747, %v1761
        %v1764 = vunpack.c.l.s4 1934713408
        %v1765 = vunpack.c.0.s8 %v1764
        %v1766 = vperm.slane %v1760, %v1765
        %v1768 = vunpack.c.l.s4 1934713408
        %v1769 = vunpack.c.0.s8 %v1768
        %v1770 = vperm.slane %v1762, %v1769
        %v1771 = vrot.slane %v1758, 4
        %v1772 = vsel %vm526, %v1771, %v1752
        %v1773 = vrot.slane %v1752, 4
        %v1774 = vsel %vm526, %v1758, %v1773
        %v1776 = vunpack.c.l.s4 1934713408
        %v1777 = vunpack.c.0.s8 %v1776
        %v1778 = vperm.slane %v1772, %v1777
        %v1780 = vunpack.c.l.s4 1934713408
        %v1781 = vunpack.c.0.s8 %v1780
        %v1782 = vperm.slane %v1774, %v1781
        %v1783 = vrot.slane %v1778, 4
        %v1784 = vsel %vm526, %v1783, %v1766
        %v1785 = vrot.slane %v1766, 4
        %v1786 = vsel %vm526, %v1778, %v1785
        %v1787 = vrot.slane %v1782, 4
        %v1788 = vsel %vm526, %v1787, %v1770
        %v1789 = vrot.slane %v1770, 4
        %v1790 = vsel %vm526, %v1782, %v1789
        %v1791 = vpack.c.bf16 %v1784, %v1784
        %v1792 = vpack.c.bf16 %v1786, %v1786
        %v1793 = vpack.c.bf16 %v1788, %v1788
        %v1794 = vpack.c.bf16 %v1790, %v1790
        %1795 = vrot.lane.b32.xlu0 %v1542, 64
        %v1796 = vpop.permute.xlu0 %1795
        %1797 = vrot.lane.b32.xlu0 %v1547, 64
        %v1798 = vpop.permute.xlu0 %1797
        %1799 = vrot.lane.b32.xlu0 %v1550, 64
        %v1800 = vpop.permute.xlu0 %1799
        %1801 = vrot.lane.b32.xlu0 %v1553, 64
        %v1802 = vpop.permute.xlu0 %1801
        %v1807 = vrot.slane %v1800, 4
        %v1808 = vsel %vm526, %v1807, %v1796
        %v1809 = vrot.slane %v1796, 4
        %v1810 = vsel %vm526, %v1800, %v1809
        %v1812 = vunpack.c.l.s4 1983009808
        %v1813 = vunpack.c.0.s8 %v1812
        %v1814 = vperm.slane %v1808, %v1813
        %v1816 = vunpack.c.l.s4 1983009808
        %v1817 = vunpack.c.0.s8 %v1816
        %v1818 = vperm.slane %v1810, %v1817
        %v1819 = vrot.slane %v1802, 4
        %v1820 = vsel %vm526, %v1819, %v1798
        %v1821 = vrot.slane %v1798, 4
        %v1822 = vsel %vm526, %v1802, %v1821
        %v1824 = vunpack.c.l.s4 1983009808
        %v1825 = vunpack.c.0.s8 %v1824
        %v1826 = vperm.slane %v1820, %v1825
        %v1828 = vunpack.c.l.s4 1983009808
        %v1829 = vunpack.c.0.s8 %v1828
        %v1830 = vperm.slane %v1822, %v1829
        %v1831 = vrot.slane %v1826, 4
        %v1832 = vsel %vm526, %v1831, %v1814
        %v1833 = vrot.slane %v1814, 4
        %v1834 = vsel %vm526, %v1826, %v1833
        %v1836 = vunpack.c.l.s4 1934713408
        %v1837 = vunpack.c.0.s8 %v1836
        %v1838 = vperm.slane %v1832, %v1837
        %v1840 = vunpack.c.l.s4 1934713408
        %v1841 = vunpack.c.0.s8 %v1840
        %v1842 = vperm.slane %v1834, %v1841
        %v1843 = vrot.slane %v1830, 4
        %v1844 = vsel %vm526, %v1843, %v1818
        %v1845 = vrot.slane %v1818, 4
        %v1846 = vsel %vm526, %v1830, %v1845
        %v1848 = vunpack.c.l.s4 1934713408
        %v1849 = vunpack.c.0.s8 %v1848
        %v1850 = vperm.slane %v1844, %v1849
        %v1852 = vunpack.c.l.s4 1934713408
        %v1853 = vunpack.c.0.s8 %v1852
        %v1854 = vperm.slane %v1846, %v1853
        %v1855 = vrot.slane %v1838, 4
        %v1856 = vsel %vm526, 0.0, %v1855
        %v1857 = vrot.slane %v1842, 4
        %v1858 = vsel %vm526, 0.0, %v1857
        %v1859 = vrot.slane %v1850, 4
        %v1860 = vsel %vm526, 0.0, %v1859
        %v1861 = vrot.slane %v1854, 4
        %v1862 = vsel %vm526, 0.0, %v1861
        %v1863 = vsel %vm526, %v1857, %v1838
        %v1865 = vunpack.c.l.s4 1983009808
        %v1866 = vunpack.c.0.s8 %v1865
        %v1867 = vperm.slane %v1863, %v1866
        %v1868 = vrot.slane %v1858, 4
        %v1869 = vsel %vm526, %v1868, %v1856
        %v1871 = vunpack.c.l.s4 1983009808
        %v1872 = vunpack.c.0.s8 %v1871
        %v1873 = vperm.slane %v1869, %v1872
        %v1874 = vsel %vm526, %v1861, %v1850
        %v1876 = vunpack.c.l.s4 1983009808
        %v1877 = vunpack.c.0.s8 %v1876
        %v1878 = vperm.slane %v1874, %v1877
        %v1879 = vrot.slane %v1862, 4
        %v1880 = vsel %vm526, %v1879, %v1860
        %v1882 = vunpack.c.l.s4 1983009808
        %v1883 = vunpack.c.0.s8 %v1882
        %v1884 = vperm.slane %v1880, %v1883
        %v1885 = vrot.slane %v1873, 4
        %v1886 = vsel %vm526, %v1885, %v1867
        %v1887 = vrot.slane %v1867, 4
        %v1888 = vsel %vm526, %v1873, %v1887
        %v1890 = vunpack.c.l.s4 1934713408
        %v1891 = vunpack.c.0.s8 %v1890
        %v1892 = vperm.slane %v1886, %v1891
        %v1894 = vunpack.c.l.s4 1934713408
        %v1895 = vunpack.c.0.s8 %v1894
        %v1896 = vperm.slane %v1888, %v1895
        %v1897 = vrot.slane %v1884, 4
        %v1898 = vsel %vm526, %v1897, %v1878
        %v1899 = vrot.slane %v1878, 4
        %v1900 = vsel %vm526, %v1884, %v1899
        %v1902 = vunpack.c.l.s4 1934713408
        %v1903 = vunpack.c.0.s8 %v1902
        %v1904 = vperm.slane %v1898, %v1903
        %v1906 = vunpack.c.l.s4 1934713408
        %v1907 = vunpack.c.0.s8 %v1906
        %v1908 = vperm.slane %v1900, %v1907
        %v1909 = vrot.slane %v1904, 4
        %v1910 = vsel %vm526, %v1909, %v1892
        %v1911 = vrot.slane %v1892, 4
        %v1912 = vsel %vm526, %v1904, %v1911
        %v1913 = vrot.slane %v1908, 4
        %v1914 = vsel %vm526, %v1913, %v1896
        %v1915 = vrot.slane %v1896, 4
        %v1916 = vsel %vm526, %v1908, %v1915
        %v1917 = vpack.c.bf16 %v1910, %v1910
        %v1918 = vpack.c.bf16 %v1912, %v1912
        %v1919 = vpack.c.bf16 %v1914, %v1914
        %v1920 = vpack.c.bf16 %v1916, %v1916
        %v1922 = vsel %vm892, %v1665, 0
        %v1925 = vsel %vm892, %v1791, 0
        %1927 = vmatpush.bf16.xpose.msra.mxu0 0
        %1928 = vmatpush.bf16.xpose.msra.mxu0 0
        %1929 = vmatpush.bf16.xpose.msra.mxu0 0
        %1930 = vmatpush.bf16.xpose.msra.mxu0 0
        %1931 = vmatpush.bf16.xpose.msra.mxu0 0
        %1932 = vmatpush.bf16.xpose.msra.mxu0 0
        %1933 = vmatpush.bf16.xpose.msra.mxu0 0
        %1934 = vmatpush.bf16.xpose.msra.mxu0 %v1925
        %1935 = vmatmul.bf16.gmra.mxu0 %v1922
        %v1936 = vpop.f32.mrf.mxu0
        %v1937 = vadd.f32 0.0, %v1936
        %v1938 = vpop.f32.mrf.mxu0
        %1939 = vdwg.mxu0
        %v1941 = vsel %vm892, %v1666, 0
        %v1944 = vsel %vm892, %v1792, 0
        %1946 = vmatpush.bf16.xpose.msra.mxu0 0
        %1947 = vmatpush.bf16.xpose.msra.mxu0 0
        %1948 = vmatpush.bf16.xpose.msra.mxu0 0
        %1949 = vmatpush.bf16.xpose.msra.mxu0 0
        %1950 = vmatpush.bf16.xpose.msra.mxu0 0
        %1951 = vmatpush.bf16.xpose.msra.mxu0 0
        %1952 = vmatpush.bf16.xpose.msra.mxu0 0
        %1953 = vmatpush.bf16.xpose.msra.mxu0 %v1944
        %1954 = vmatmul.bf16.gmra.mxu0 %v1941
        %v1955 = vpop.f32.mrf.mxu0
        %v1956 = vadd.f32 0.0, %v1955
        %v1957 = vpop.f32.mrf.mxu0
        %1958 = vdwg.mxu0
        %v1960 = vsel %vm892, %v1667, 0
        %v1963 = vsel %vm892, %v1793, 0
        %1965 = vmatpush.bf16.xpose.msra.mxu0 0
        %1966 = vmatpush.bf16.xpose.msra.mxu0 0
        %1967 = vmatpush.bf16.xpose.msra.mxu0 0
        %1968 = vmatpush.bf16.xpose.msra.mxu0 0
        %1969 = vmatpush.bf16.xpose.msra.mxu0 0
        %1970 = vmatpush.bf16.xpose.msra.mxu0 0
        %1971 = vmatpush.bf16.xpose.msra.mxu0 0
        %1972 = vmatpush.bf16.xpose.msra.mxu0 %v1963
        %1973 = vmatmul.bf16.gmra.mxu0 %v1960
        %v1974 = vpop.f32.mrf.mxu0
        %v1975 = vadd.f32 0.0, %v1974
        %v1976 = vpop.f32.mrf.mxu0
        %1977 = vdwg.mxu0
        %v1979 = vsel %vm892, %v1668, 0
        %v1982 = vsel %vm892, %v1794, 0
        %1984 = vmatpush.bf16.xpose.msra.mxu0 0
        %1985 = vmatpush.bf16.xpose.msra.mxu0 0
        %1986 = vmatpush.bf16.xpose.msra.mxu0 0
        %1987 = vmatpush.bf16.xpose.msra.mxu0 0
        %1988 = vmatpush.bf16.xpose.msra.mxu0 0
        %1989 = vmatpush.bf16.xpose.msra.mxu0 0
        %1990 = vmatpush.bf16.xpose.msra.mxu0 0
        %1991 = vmatpush.bf16.xpose.msra.mxu0 %v1982
        %1992 = vmatmul.bf16.gmra.mxu0 %v1979
        %v1993 = vpop.f32.mrf.mxu0
        %v1994 = vadd.f32 0.0, %v1993
        %v1995 = vpop.f32.mrf.mxu0
        %1996 = vdwg.mxu0
        %v1997 = vsel %vm892, %v1937, -inf
        %1998 = vmax.xlane.f32.xlu0 %v1997
        %v1999 = vpop.xlane.xlu0 %1998
        %v2000 = vsel %vm892, %v1956, -inf
        %2001 = vmax.xlane.f32.xlu0 %v2000
        %v2002 = vpop.xlane.xlu0 %2001
        %v2003 = vsel %vm892, %v1975, -inf
        %2004 = vmax.xlane.f32.xlu0 %v2003
        %v2005 = vpop.xlane.xlu0 %2004
        %v2006 = vsel %vm892, %v1994, -inf
        %2007 = vmax.xlane.f32.xlu0 %v2006
        %v2008 = vpop.xlane.xlu0 %2007
        %v2009 = vsub.f32 %v1937, %v1999
        %v2010 = vsub.f32 %v1956, %v2002
        %v2011 = vsub.f32 %v1975, %v2005
        %v2012 = vsub.f32 %v1994, %v2008
        %v2013 = vmul.f32 %v2009, 1.442695
        %v2014 = vpow.pop %v2013
        %v2015 = vmul.f32 %v2010, 1.442695
        %v2016 = vpow.pop %v2015
        %v2017 = vmul.f32 %v2011, 1.442695
        %v2018 = vpow.pop %v2017
        %v2019 = vmul.f32 %v2012, 1.442695
        %v2020 = vpow.pop %v2019
        %v2021 = vsel %vm892, %v2014, 0.0
        %2022 = vadd.xlane.f32.xlu0 %v2021
        %v2023 = vpop.xlane.xlu0 %2022
        %v2024 = vsel %vm892, %v2016, 0.0
        %2025 = vadd.xlane.f32.xlu0 %v2024
        %v2026 = vpop.xlane.xlu0 %2025
        %v2027 = vsel %vm892, %v2018, 0.0
        %2028 = vadd.xlane.f32.xlu0 %v2027
        %v2029 = vpop.xlane.xlu0 %2028
        %v2030 = vsel %vm892, %v2020, 0.0
        %2031 = vadd.xlane.f32.xlu0 %v2030
        %v2032 = vpop.xlane.xlu0 %2031
        %v2033 = vrcp.pop %v2023
        %v2034 = vmul.f32 %v2023, %v2033
        %v2035 = vsub.f32 1.0, %v2034
        %v2036 = vmul.f32 %v2033, %v2035
        %v2037 = vadd.f32 %v2033, %v2036
        %vm2038 = vweird.f32 %v2023
        %vm2039 = vweird.f32 %v2033
        %vm2040 = vmor %vm2038, %vm2039
        %v2041 = vsel %vm2040, %v2033, %v2037
        %v2042 = vand.u32 2147483647, %v2023
        %vm2043 = vcmp.eq.f32.partialorder %v2042, 8.507059e+37
        %v2044 = vand.u32 %v2023, 2147483648
        %v2045 = vor.u32 1.1754944e-38, %v2044
        %v2046 = vsel %vm2043, %v2045, %v2041
        %v2047 = vmul.f32 %v2014, %v2046
        %v2048 = vrcp.pop %v2026
        %v2049 = vmul.f32 %v2026, %v2048
        %v2050 = vsub.f32 1.0, %v2049
        %v2051 = vmul.f32 %v2048, %v2050
        %v2052 = vadd.f32 %v2048, %v2051
        %vm2053 = vweird.f32 %v2026
        %vm2054 = vweird.f32 %v2048
        %vm2055 = vmor %vm2053, %vm2054
        %v2056 = vsel %vm2055, %v2048, %v2052
        %v2057 = vand.u32 2147483647, %v2026
        %vm2058 = vcmp.eq.f32.partialorder %v2057, 8.507059e+37
        %v2059 = vand.u32 %v2026, 2147483648
        %v2060 = vor.u32 1.1754944e-38, %v2059
        %v2061 = vsel %vm2058, %v2060, %v2056
        %v2062 = vmul.f32 %v2016, %v2061
        %v2063 = vrcp.pop %v2029
        %v2064 = vmul.f32 %v2029, %v2063
        %v2065 = vsub.f32 1.0, %v2064
        %v2066 = vmul.f32 %v2063, %v2065
        %v2067 = vadd.f32 %v2063, %v2066
        %vm2068 = vweird.f32 %v2029
        %vm2069 = vweird.f32 %v2063
        %vm2070 = vmor %vm2068, %vm2069
        %v2071 = vsel %vm2070, %v2063, %v2067
        %v2072 = vand.u32 2147483647, %v2029
        %vm2073 = vcmp.eq.f32.partialorder %v2072, 8.507059e+37
        %v2074 = vand.u32 %v2029, 2147483648
        %v2075 = vor.u32 1.1754944e-38, %v2074
        %v2076 = vsel %vm2073, %v2075, %v2071
        %v2077 = vmul.f32 %v2018, %v2076
        %v2078 = vrcp.pop %v2032
        %v2079 = vmul.f32 %v2032, %v2078
        %v2080 = vsub.f32 1.0, %v2079
        %v2081 = vmul.f32 %v2078, %v2080
        %v2082 = vadd.f32 %v2078, %v2081
        %vm2083 = vweird.f32 %v2032
        %vm2084 = vweird.f32 %v2078
        %vm2085 = vmor %vm2083, %vm2084
        %v2086 = vsel %vm2085, %v2078, %v2082
        %v2087 = vand.u32 2147483647, %v2032
        %vm2088 = vcmp.eq.f32.partialorder %v2087, 8.507059e+37
        %v2089 = vand.u32 %v2032, 2147483648
        %v2090 = vor.u32 1.1754944e-38, %v2089
        %v2091 = vsel %vm2088, %v2090, %v2086
        %v2092 = vmul.f32 %v2020, %v2091
        %v2093 = vpack.c.bf16 %v2047, %v2047
        %v2094 = vpack.c.bf16 %v2062, %v2062
        %v2095 = vpack.c.bf16 %v2077, %v2077
        %v2096 = vpack.c.bf16 %v2092, %v2092
        %v2098 = vsel %vm892, %v2093, 0
        %v2101 = vsel %vm1072, %v1917, 0
        %2103 = vmatpush.bf16.msra.mxu0 0
        %2104 = vmatpush.bf16.msra.mxu0 0
        %2105 = vmatpush.bf16.msra.mxu0 0
        %2106 = vmatpush.bf16.msra.mxu0 0
        %2107 = vmatpush.bf16.msra.mxu0 0
        %2108 = vmatpush.bf16.msra.mxu0 0
        %2109 = vmatpush.bf16.msra.mxu0 0
        %2110 = vmatpush.bf16.msra.mxu0 %v2101
        %2111 = vmatmul.bf16.gmra.mxu0 %v2098
        %v2112 = vpop.f32.mrf.mxu0
        %v2113 = vadd.f32 0.0, %v2112
        %v2114 = vpop.f32.mrf.mxu0
        %2115 = vdwg.mxu0
        %v2117 = vsel %vm892, %v2094, 0
        %v2120 = vsel %vm1072, %v1918, 0
        %2122 = vmatpush.bf16.msra.mxu0 0
        %2123 = vmatpush.bf16.msra.mxu0 0
        %2124 = vmatpush.bf16.msra.mxu0 0
        %2125 = vmatpush.bf16.msra.mxu0 0
        %2126 = vmatpush.bf16.msra.mxu0 0
        %2127 = vmatpush.bf16.msra.mxu0 0
        %2128 = vmatpush.bf16.msra.mxu0 0
        %2129 = vmatpush.bf16.msra.mxu0 %v2120
        %2130 = vmatmul.bf16.gmra.mxu0 %v2117
        %v2131 = vpop.f32.mrf.mxu0
        %v2132 = vadd.f32 0.0, %v2131
        %v2133 = vpop.f32.mrf.mxu0
        %2134 = vdwg.mxu0
        %v2136 = vsel %vm892, %v2095, 0
        %v2139 = vsel %vm1072, %v1919, 0
        %2141 = vmatpush.bf16.msra.mxu0 0
        %2142 = vmatpush.bf16.msra.mxu0 0
        %2143 = vmatpush.bf16.msra.mxu0 0
        %2144 = vmatpush.bf16.msra.mxu0 0
        %2145 = vmatpush.bf16.msra.mxu0 0
        %2146 = vmatpush.bf16.msra.mxu0 0
        %2147 = vmatpush.bf16.msra.mxu0 0
        %2148 = vmatpush.bf16.msra.mxu0 %v2139
        %2149 = vmatmul.bf16.gmra.mxu0 %v2136
        %v2150 = vpop.f32.mrf.mxu0
        %v2151 = vadd.f32 0.0, %v2150
        %v2152 = vpop.f32.mrf.mxu0
        %2153 = vdwg.mxu0
        %v2155 = vsel %vm892, %v2096, 0
        %v2158 = vsel %vm1072, %v1920, 0
        %2160 = vmatpush.bf16.msra.mxu0 0
        %2161 = vmatpush.bf16.msra.mxu0 0
        %2162 = vmatpush.bf16.msra.mxu0 0
        %2163 = vmatpush.bf16.msra.mxu0 0
        %2164 = vmatpush.bf16.msra.mxu0 0
        %2165 = vmatpush.bf16.msra.mxu0 0
        %2166 = vmatpush.bf16.msra.mxu0 0
        %2167 = vmatpush.bf16.msra.mxu0 %v2158
        %2168 = vmatmul.bf16.gmra.mxu0 %v2155
        %v2169 = vpop.f32.mrf.mxu0
        %v2170 = vadd.f32 0.0, %v2169
        %v2171 = vpop.f32.mrf.mxu0
        %2172 = vdwg.mxu0
        %v2173 = vrot.slane %v2151, 4
        %v2174 = vsel %vm526, %v2173, %v2113
        %v2175 = vrot.slane %v2113, 4
        %v2176 = vsel %vm526, %v2151, %v2175
        %v2178 = vunpack.c.l.s4 1983009808
        %v2179 = vunpack.c.0.s8 %v2178
        %v2180 = vperm.slane %v2174, %v2179
        %v2182 = vunpack.c.l.s4 1983009808
        %v2183 = vunpack.c.0.s8 %v2182
        %v2184 = vperm.slane %v2176, %v2183
        %v2185 = vrot.slane %v2170, 4
        %v2186 = vsel %vm526, %v2185, %v2132
        %v2187 = vrot.slane %v2132, 4
        %v2188 = vsel %vm526, %v2170, %v2187
        %v2190 = vunpack.c.l.s4 1983009808
        %v2191 = vunpack.c.0.s8 %v2190
        %v2192 = vperm.slane %v2186, %v2191
        %v2194 = vunpack.c.l.s4 1983009808
        %v2195 = vunpack.c.0.s8 %v2194
        %v2196 = vperm.slane %v2188, %v2195
        %v2197 = vrot.slane %v2192, 4
        %v2198 = vsel %vm526, %v2197, %v2180
        %v2199 = vrot.slane %v2180, 4
        %v2200 = vsel %vm526, %v2192, %v2199
        %v2202 = vunpack.c.l.s4 1934713408
        %v2203 = vunpack.c.0.s8 %v2202
        %v2204 = vperm.slane %v2198, %v2203
        %v2206 = vunpack.c.l.s4 1934713408
        %v2207 = vunpack.c.0.s8 %v2206
        %v2208 = vperm.slane %v2200, %v2207
        %v2209 = vrot.slane %v2196, 4
        %v2210 = vsel %vm526, %v2209, %v2184
        %v2211 = vrot.slane %v2184, 4
        %v2212 = vsel %vm526, %v2196, %v2211
        %v2214 = vunpack.c.l.s4 1934713408
        %v2215 = vunpack.c.0.s8 %v2214
        %v2216 = vperm.slane %v2210, %v2215
        %v2218 = vunpack.c.l.s4 1934713408
        %v2219 = vunpack.c.0.s8 %v2218
        %v2220 = vperm.slane %v2212, %v2219
        %v2221 = vrot.slane %v2204, 4
        %v2222 = vsel %vm526, 0.0, %v2221
        %v2223 = vrot.slane %v2208, 4
        %v2224 = vsel %vm526, 0.0, %v2223
        %v2225 = vrot.slane %v2216, 4
        %v2226 = vsel %vm526, 0.0, %v2225
        %v2227 = vrot.slane %v2220, 4
        %v2228 = vsel %vm526, 0.0, %v2227
        %v2229 = vsel %vm526, %v2223, %v2204
        %v2231 = vunpack.c.l.s4 1983009808
        %v2232 = vunpack.c.0.s8 %v2231
        %v2233 = vperm.slane %v2229, %v2232
        %v2234 = vrot.slane %v2224, 4
        %v2235 = vsel %vm526, %v2234, %v2222
        %v2237 = vunpack.c.l.s4 1983009808
        %v2238 = vunpack.c.0.s8 %v2237
        %v2239 = vperm.slane %v2235, %v2238
        %v2240 = vsel %vm526, %v2227, %v2216
        %v2242 = vunpack.c.l.s4 1983009808
        %v2243 = vunpack.c.0.s8 %v2242
        %v2244 = vperm.slane %v2240, %v2243
        %v2245 = vrot.slane %v2228, 4
        %v2246 = vsel %vm526, %v2245, %v2226
        %v2248 = vunpack.c.l.s4 1983009808
        %v2249 = vunpack.c.0.s8 %v2248
        %v2250 = vperm.slane %v2246, %v2249
        %v2251 = vrot.slane %v2239, 4
        %v2252 = vsel %vm526, %v2251, %v2233
        %v2253 = vrot.slane %v2233, 4
        %v2254 = vsel %vm526, %v2239, %v2253
        %v2256 = vunpack.c.l.s4 1934713408
        %v2257 = vunpack.c.0.s8 %v2256
        %v2258 = vperm.slane %v2252, %v2257
        %v2260 = vunpack.c.l.s4 1934713408
        %v2261 = vunpack.c.0.s8 %v2260
        %v2262 = vperm.slane %v2254, %v2261
        %v2263 = vrot.slane %v2250, 4
        %v2264 = vsel %vm526, %v2263, %v2244
        %v2265 = vrot.slane %v2244, 4
        %v2266 = vsel %vm526, %v2250, %v2265
        %v2268 = vunpack.c.l.s4 1934713408
        %v2269 = vunpack.c.0.s8 %v2268
        %v2270 = vperm.slane %v2264, %v2269
        %v2272 = vunpack.c.l.s4 1934713408
        %v2273 = vunpack.c.0.s8 %v2272
        %v2274 = vperm.slane %v2266, %v2273
        %v2275 = vrot.slane %v2270, 4
        %v2276 = vsel %vm526, %v2275, %v2258
        %v2277 = vrot.slane %v2258, 4
        %v2278 = vsel %vm526, %v2270, %v2277
        %v2279 = vrot.slane %v2274, 4
        %v2280 = vsel %vm526, %v2279, %v2262
        %v2281 = vrot.slane %v2262, 4
        %v2282 = vsel %vm526, %v2274, %v2281
        %2284 = vrot.lane.b32.xlu0 %v2278, 8
        %v2285 = vpop.permute.xlu0 %2284
        %2288 = vrot.lane.b32.xlu0 %v2280, 16
        %v2289 = vpop.permute.xlu0 %2288
        %2292 = vrot.lane.b32.xlu0 %v2282, 24
        %v2293 = vpop.permute.xlu0 %2292
        %v2295 = vsel %vm892, %v2276, %v2285
        %v2296 = vsel %vm1269, %v2295, %v2289
        %v2297 = vsel %vm1271, %v2296, %v2293
        %v2298 = vpack.c.bf16 %v2297, %v2297
        %s2299 = scalar_lea.vmem %s5, 16
        %v2300 = vld [vmem:[%s2299] sm:$0xf]
        %v2301 = vld [vmem:[%s2299 + $0x4] sm:$0xf]
        %v2302 = vld [vmem:[%s2299 + $0x8] sm:$0xf]
        %v2303 = vld [vmem:[%s2299 + $0xc] sm:$0xf]
        %s2304 = scalar_lea.vmem %s6, 1
        %v2305 = vld [vmem:[%s2304] sm:$0x1]
        %v2307 = vperm.slane %v2305, 0
        %v2313 = vunpack.c.l.b16 %v2300
        %v2314 = vunpack.c.l.b16 %v2301
        %v2315 = vunpack.c.l.b16 %v2302
        %v2316 = vunpack.c.l.b16 %v2303
        %v2317 = vpack.c.b16 %v2314, %v2313
        %v2318 = vpack.c.b16 %v2316, %v2315
        %v2322 = vsel %vm440, %v2298, 0
        %2324 = vmatpush.bf16.msra.mxu0 0
        %2325 = vmatpush.bf16.msra.mxu0 0
        %2326 = vmatpush.bf16.msra.mxu0 0
        %2327 = vmatpush.bf16.msra.mxu0 0
        %2328 = vmatpush.bf16.msra.mxu0 0
        %2329 = vmatpush.bf16.msra.mxu0 0
        %2330 = vmatpush.bf16.msra.mxu0 %v2318
        %2331 = vmatpush.bf16.msra.mxu0 %v2317
        %2332 = vmatmul.bf16.gmra.mxu0 %v2322
        %v2333 = vpop.f32.mrf.mxu0
        %v2334 = vadd.f32 %v2307, %v2333
        %v2335 = vpop.f32.mrf.mxu0
        %2336 = vdwg.mxu0
        %v2337 = vadd.f32 %v1471, %v2334
        %s2338 = scalar_lea.vmem %s7, 1
        %v2339 = vld [vmem:[%s2338] sm:$0x1]
        %s2340 = scalar_lea.vmem %s8, 1
        %v2341 = vld [vmem:[%s2340] sm:$0x1]
        %v2342 = vsel %vm440, %v2337, 0.0
        %2343 = vadd.xlane.f32.xlu0 %v2342
        %v2344 = vpop.xlane.xlu0 %2343
        %v2345 = vmul.f32 %v2344, %v450
        %v2346 = vsub.f32 %v2337, %v2345
        %v2347 = vmul.f32 %v2346, %v2346
        %v2348 = vsel %vm440, %v2347, 0.0
        %2349 = vadd.xlane.f32.xlu0 %v2348
        %v2350 = vpop.xlane.xlu0 %2349
        %v2351 = vmul.f32 %v2350, %v450
        %v2352 = vadd.f32 %v2351, 1e-06
        %v2353 = vrsqrt.pop %v2352
        %v2354 = vmul.f32 %v2353, %v2352
        %v2355 = vmul.f32 %v2354, %v2353
        %v2356 = vmul.f32 0.5, %v2355
        %v2357 = vsub.f32 1.5, %v2356
        %v2358 = vmul.f32 %v2353, %v2357
        %vm2359 = vweird.f32 %v2352
        %vm2360 = vweird.f32 %v2353
        %vm2361 = vmor %vm2359, %vm2360
        %v2362 = vsel %vm2361, %v2353, %v2358
        %v2363 = vmul.f32 %v2346, %v2362
        %v2365 = vperm.slane %v2339, 0
        %v2367 = vmul.f32 %v2363, %v2365
        %v2369 = vperm.slane %v2341, 0
        %v2371 = vadd.f32 %v2367, %v2369
        %v2372 = vpack.c.bf16 %v2371, %v2371
        %s2373 = scalar_lea.vmem %s9, 16
        %v2374 = vld [vmem:[%s2373] sm:$0xf]
        %v2375 = vld [vmem:[%s2373 + $0x4] sm:$0xf]
        %v2376 = vld [vmem:[%s2373 + $0x8] sm:$0xf]
        %v2377 = vld [vmem:[%s2373 + $0xc] sm:$0xf]
        %s2378 = scalar_lea.vmem %s10, 1
        %v2379 = vld [vmem:[%s2378] sm:$0x1]
        %v2381 = vperm.slane %v2379, 0
        %v2387 = vunpack.c.l.b16 %v2374
        %v2388 = vunpack.c.l.b16 %v2375
        %v2389 = vunpack.c.l.b16 %v2376
        %v2390 = vunpack.c.l.b16 %v2377
        %v2391 = vpack.c.b16 %v2388, %v2387
        %v2392 = vpack.c.b16 %v2390, %v2389
        %v2396 = vsel %vm440, %v2372, 0
        %2398 = vmatpush.bf16.msra.mxu0 0
        %2399 = vmatpush.bf16.msra.mxu0 0
        %2400 = vmatpush.bf16.msra.mxu0 0
        %2401 = vmatpush.bf16.msra.mxu0 0
        %2402 = vmatpush.bf16.msra.mxu0 0
        %2403 = vmatpush.bf16.msra.mxu0 0
        %2404 = vmatpush.bf16.msra.mxu0 %v2392
        %2405 = vmatpush.bf16.msra.mxu0 %v2391
        %2406 = vmatmul.bf16.gmra.mxu0 %v2396
        %v2407 = vpop.f32.mrf.mxu0
        %v2408 = vadd.f32 %v2381, %v2407
        %v2409 = vpop.f32.mrf.mxu0
        %2410 = vdwg.mxu0
        %v2411 = vmul.f32 %v2408, 0.5
        %v2412 = vmul.f32 %v2408, 0.044715
        %v2413 = vmul.f32 %v2412, %v2408
        %v2414 = vmul.f32 %v2413, %v2408
        %v2415 = vadd.f32 %v2408, %v2414
        %v2416 = vmul.f32 %v2415, 0.7978846
        %v2417 = vtanh.pop %v2416
        %v2418 = vadd.f32 %v2417, 1.0
        %v2419 = vmul.f32 %v2411, %v2418
        %v2420 = vpack.c.bf16 %v2419, %v2419
        %s2421 = scalar_lea.vmem %s11, 64
        %v2422 = vld [vmem:[%s2421] sm:$0xf]
        %v2423 = vld [vmem:[%s2421 + $0x4] sm:$0xf]
        %v2424 = vld [vmem:[%s2421 + $0x8] sm:$0xf]
        %v2425 = vld [vmem:[%s2421 + $0xc] sm:$0xf]
        %v2426 = vld [vmem:[%s2421 + $0x10] sm:$0xf]
        %v2427 = vld [vmem:[%s2421 + $0x14] sm:$0xf]
        %v2428 = vld [vmem:[%s2421 + $0x18] sm:$0xf]
        %v2429 = vld [vmem:[%s2421 + $0x1c] sm:$0xf]
        %v2430 = vld [vmem:[%s2421 + $0x20] sm:$0xf]
        %v2431 = vld [vmem:[%s2421 + $0x24] sm:$0xf]
        %v2432 = vld [vmem:[%s2421 + $0x28] sm:$0xf]
        %v2433 = vld [vmem:[%s2421 + $0x2c] sm:$0xf]
        %v2434 = vld [vmem:[%s2421 + $0x30] sm:$0xf]
        %v2435 = vld [vmem:[%s2421 + $0x34] sm:$0xf]
        %v2436 = vld [vmem:[%s2421 + $0x38] sm:$0xf]
        %v2437 = vld [vmem:[%s2421 + $0x3c] sm:$0xf]
        %s2438 = scalar_lea.vmem %s12, 1
        %v2439 = vld [vmem:[%s2438] sm:$0x1]
        %v2441 = vperm.slane %v2439, 0
        %v2459 = vunpack.c.l.b16 %v2422
        %v2460 = vunpack.c.l.b16 %v2423
        %v2461 = vunpack.c.l.b16 %v2424
        %v2462 = vunpack.c.l.b16 %v2425
        %v2463 = vunpack.c.l.b16 %v2426
        %v2464 = vunpack.c.l.b16 %v2427
        %v2465 = vunpack.c.l.b16 %v2428
        %v2466 = vunpack.c.l.b16 %v2429
        %v2467 = vunpack.c.l.b16 %v2430
        %v2468 = vunpack.c.l.b16 %v2431
        %v2469 = vunpack.c.l.b16 %v2432
        %v2470 = vunpack.c.l.b16 %v2433
        %v2471 = vunpack.c.l.b16 %v2434
        %v2472 = vunpack.c.l.b16 %v2435
        %v2473 = vunpack.c.l.b16 %v2436
        %v2474 = vunpack.c.l.b16 %v2437
        %v2475 = vpack.c.b16 %v2460, %v2459
        %v2476 = vpack.c.b16 %v2462, %v2461
        %v2477 = vpack.c.b16 %v2464, %v2463
        %v2478 = vpack.c.b16 %v2466, %v2465
        %v2479 = vpack.c.b16 %v2468, %v2467
        %v2480 = vpack.c.b16 %v2470, %v2469
        %v2481 = vpack.c.b16 %v2472, %v2471
        %v2482 = vpack.c.b16 %v2474, %v2473
        %2491 = vmatpush.bf16.msra.mxu0 %v2482
        %2492 = vmatpush.bf16.msra.mxu0 %v2481
        %2493 = vmatpush.bf16.msra.mxu0 %v2480
        %2494 = vmatpush.bf16.msra.mxu0 %v2479
        %2495 = vmatpush.bf16.msra.mxu0 %v2478
        %2496 = vmatpush.bf16.msra.mxu0 %v2477
        %2497 = vmatpush.bf16.msra.mxu0 %v2476
        %2498 = vmatpush.bf16.msra.mxu0 %v2475
        %2499 = vmatmul.bf16.gmra.mxu0 %v2420
        %v2500 = vpop.f32.mrf.mxu0
        %v2501 = vadd.f32 %v2441, %v2500
        %v2502 = vpop.f32.mrf.mxu0
        %2503 = vdwg.mxu0
        %v2504 = vadd.f32 %v2337, %v2501
        %s2505 = scalar_lea.vmem %s1, 2
        %v2506 = vld [vmem:[%s2505] sm:$0x1]
        %s2507 = scalar_lea.vmem %s2, 2
        %v2508 = vld [vmem:[%s2507] sm:$0x1]
        %v2509 = vsel %vm440, %v2504, 0.0
        %2510 = vadd.xlane.f32.xlu0 %v2509
        %v2511 = vpop.xlane.xlu0 %2510
        %v2512 = vmul.f32 %v2511, %v450
        %v2513 = vsub.f32 %v2504, %v2512
        %v2514 = vmul.f32 %v2513, %v2513
        %v2515 = vsel %vm440, %v2514, 0.0
        %2516 = vadd.xlane.f32.xlu0 %v2515
        %v2517 = vpop.xlane.xlu0 %2516
        %v2518 = vmul.f32 %v2517, %v450
        %v2519 = vadd.f32 %v2518, 1e-06
        %v2520 = vrsqrt.pop %v2519
        %v2521 = vmul.f32 %v2520, %v2519
        %v2522 = vmul.f32 %v2521, %v2520
        %v2523 = vmul.f32 0.5, %v2522
        %v2524 = vsub.f32 1.5, %v2523
        %v2525 = vmul.f32 %v2520, %v2524
        %vm2526 = vweird.f32 %v2519
        %vm2527 = vweird.f32 %v2520
        %vm2528 = vmor %vm2526, %vm2527
        %v2529 = vsel %vm2528, %v2520, %v2525
        %v2530 = vmul.f32 %v2513, %v2529
        %v2532 = vperm.slane %v2506, 0
        %v2534 = vmul.f32 %v2530, %v2532
        %v2536 = vperm.slane %v2508, 0
        %v2538 = vadd.f32 %v2534, %v2536
        %v2539 = vpack.c.bf16 %v2538, %v2538
        %s2540 = scalar_lea.vmem %s3, 32
        %v2541 = vld [vmem:[%s2540] sm:$0xf]
        %v2542 = vld [vmem:[%s2540 + $0x4] sm:$0xf]
        %v2543 = vld [vmem:[%s2540 + $0x8] sm:$0xf]
        %v2544 = vld [vmem:[%s2540 + $0xc] sm:$0xf]
        %s2545 = scalar_lea.vmem %s4, 2
        %v2546 = vld [vmem:[%s2545] sm:$0x1]
        %v2548 = vperm.slane %v2546, 0
        %v2554 = vunpack.c.l.b16 %v2541
        %v2555 = vunpack.c.l.b16 %v2542
        %v2556 = vunpack.c.l.b16 %v2543
        %v2557 = vunpack.c.l.b16 %v2544
        %v2558 = vpack.c.b16 %v2555, %v2554
        %v2559 = vpack.c.b16 %v2557, %v2556
        %v2563 = vsel %vm440, %v2539, 0
        %2565 = vmatpush.bf16.msra.mxu0 0
        %2566 = vmatpush.bf16.msra.mxu0 0
        %2567 = vmatpush.bf16.msra.mxu0 0
        %2568 = vmatpush.bf16.msra.mxu0 0
        %2569 = vmatpush.bf16.msra.mxu0 0
        %2570 = vmatpush.bf16.msra.mxu0 0
        %2571 = vmatpush.bf16.msra.mxu0 %v2559
        %2572 = vmatpush.bf16.msra.mxu0 %v2558
        %2573 = vmatmul.bf16.gmra.mxu0 %v2563
        %v2574 = vpop.f32.mrf.mxu0
        %v2575 = vadd.f32 %v2548, %v2574
        %v2576 = vpop.f32.mrf.mxu0
        %2577 = vdwg.mxu0
        %2579 = vrot.lane.b32.xlu0 %v2575, 120
        %v2580 = vpop.permute.xlu0 %2579
        %2582 = vrot.lane.b32.xlu0 %v2575, 112
        %v2583 = vpop.permute.xlu0 %2582
        %2585 = vrot.lane.b32.xlu0 %v2575, 104
        %v2586 = vpop.permute.xlu0 %2585
        %v2588 = vrot.slane %v2583, 4
        %v2589 = vsel %vm526, %v2588, %v2575
        %v2590 = vrot.slane %v2575, 4
        %v2591 = vsel %vm526, %v2583, %v2590
        %v2593 = vunpack.c.l.s4 1983009808
        %v2594 = vunpack.c.0.s8 %v2593
        %v2595 = vperm.slane %v2589, %v2594
        %v2597 = vunpack.c.l.s4 1983009808
        %v2598 = vunpack.c.0.s8 %v2597
        %v2599 = vperm.slane %v2591, %v2598
        %v2600 = vrot.slane %v2586, 4
        %v2601 = vsel %vm526, %v2600, %v2580
        %v2602 = vrot.slane %v2580, 4
        %v2603 = vsel %vm526, %v2586, %v2602
        %v2605 = vunpack.c.l.s4 1983009808
        %v2606 = vunpack.c.0.s8 %v2605
        %v2607 = vperm.slane %v2601, %v2606
        %v2609 = vunpack.c.l.s4 1983009808
        %v2610 = vunpack.c.0.s8 %v2609
        %v2611 = vperm.slane %v2603, %v2610
        %v2612 = vrot.slane %v2607, 4
        %v2613 = vsel %vm526, %v2612, %v2595
        %v2614 = vrot.slane %v2595, 4
        %v2615 = vsel %vm526, %v2607, %v2614
        %v2617 = vunpack.c.l.s4 1934713408
        %v2618 = vunpack.c.0.s8 %v2617
        %v2619 = vperm.slane %v2613, %v2618
        %v2621 = vunpack.c.l.s4 1934713408
        %v2622 = vunpack.c.0.s8 %v2621
        %v2623 = vperm.slane %v2615, %v2622
        %v2624 = vrot.slane %v2611, 4
        %v2625 = vsel %vm526, %v2624, %v2599
        %v2626 = vrot.slane %v2599, 4
        %v2627 = vsel %vm526, %v2611, %v2626
        %v2629 = vunpack.c.l.s4 1934713408
        %v2630 = vunpack.c.0.s8 %v2629
        %v2631 = vperm.slane %v2625, %v2630
        %v2633 = vunpack.c.l.s4 1934713408
        %v2634 = vunpack.c.0.s8 %v2633
        %v2635 = vperm.slane %v2627, %v2634
        %v2636 = vrot.slane %v2619, 4
        %v2637 = vsel %vm526, 0.0, %v2636
        %v2638 = vrot.slane %v2623, 4
        %v2639 = vsel %vm526, 0.0, %v2638
        %v2640 = vrot.slane %v2631, 4
        %v2641 = vsel %vm526, 0.0, %v2640
        %v2642 = vrot.slane %v2635, 4
        %v2643 = vsel %vm526, 0.0, %v2642
        %v2644 = vsel %vm526, %v2638, %v2619
        %v2646 = vunpack.c.l.s4 1983009808
        %v2647 = vunpack.c.0.s8 %v2646
        %v2648 = vperm.slane %v2644, %v2647
        %v2649 = vrot.slane %v2639, 4
        %v2650 = vsel %vm526, %v2649, %v2637
        %v2652 = vunpack.c.l.s4 1983009808
        %v2653 = vunpack.c.0.s8 %v2652
        %v2654 = vperm.slane %v2650, %v2653
        %v2655 = vsel %vm526, %v2642, %v2631
        %v2657 = vunpack.c.l.s4 1983009808
        %v2658 = vunpack.c.0.s8 %v2657
        %v2659 = vperm.slane %v2655, %v2658
        %v2660 = vrot.slane %v2643, 4
        %v2661 = vsel %vm526, %v2660, %v2641
        %v2663 = vunpack.c.l.s4 1983009808
        %v2664 = vunpack.c.0.s8 %v2663
        %v2665 = vperm.slane %v2661, %v2664
        %v2666 = vrot.slane %v2654, 4
        %v2667 = vsel %vm526, %v2666, %v2648
        %v2668 = vrot.slane %v2648, 4
        %v2669 = vsel %vm526, %v2654, %v2668
        %v2671 = vunpack.c.l.s4 1934713408
        %v2672 = vunpack.c.0.s8 %v2671
        %v2673 = vperm.slane %v2667, %v2672
        %v2675 = vunpack.c.l.s4 1934713408
        %v2676 = vunpack.c.0.s8 %v2675
        %v2677 = vperm.slane %v2669, %v2676
        %v2678 = vrot.slane %v2665, 4
        %v2679 = vsel %vm526, %v2678, %v2659
        %v2680 = vrot.slane %v2659, 4
        %v2681 = vsel %vm526, %v2665, %v2680
        %v2683 = vunpack.c.l.s4 1934713408
        %v2684 = vunpack.c.0.s8 %v2683
        %v2685 = vperm.slane %v2679, %v2684
        %v2687 = vunpack.c.l.s4 1934713408
        %v2688 = vunpack.c.0.s8 %v2687
        %v2689 = vperm.slane %v2681, %v2688
        %v2690 = vrot.slane %v2685, 4
        %v2691 = vsel %vm526, %v2690, %v2673
        %v2692 = vrot.slane %v2673, 4
        %v2693 = vsel %vm526, %v2685, %v2692
        %v2694 = vrot.slane %v2689, 4
        %v2695 = vsel %vm526, %v2694, %v2677
        %v2696 = vrot.slane %v2677, 4
        %v2697 = vsel %vm526, %v2689, %v2696
        %v2698 = vpack.c.bf16 %v2691, %v2691
        %v2699 = vpack.c.bf16 %v2693, %v2693
        %v2700 = vpack.c.bf16 %v2695, %v2695
        %v2701 = vpack.c.bf16 %v2697, %v2697
        %2702 = vrot.lane.b32.xlu0 %v2575, 96
        %v2703 = vpop.permute.xlu0 %2702
        %2704 = vrot.lane.b32.xlu0 %v2580, 96
        %v2705 = vpop.permute.xlu0 %2704
        %2706 = vrot.lane.b32.xlu0 %v2583, 96
        %v2707 = vpop.permute.xlu0 %2706
        %2708 = vrot.lane.b32.xlu0 %v2586, 96
        %v2709 = vpop.permute.xlu0 %2708
        %v2714 = vrot.slane %v2707, 4
        %v2715 = vsel %vm526, %v2714, %v2703
        %v2716 = vrot.slane %v2703, 4
        %v2717 = vsel %vm526, %v2707, %v2716
        %v2719 = vunpack.c.l.s4 1983009808
        %v2720 = vunpack.c.0.s8 %v2719
        %v2721 = vperm.slane %v2715, %v2720
        %v2723 = vunpack.c.l.s4 1983009808
        %v2724 = vunpack.c.0.s8 %v2723
        %v2725 = vperm.slane %v2717, %v2724
        %v2726 = vrot.slane %v2709, 4
        %v2727 = vsel %vm526, %v2726, %v2705
        %v2728 = vrot.slane %v2705, 4
        %v2729 = vsel %vm526, %v2709, %v2728
        %v2731 = vunpack.c.l.s4 1983009808
        %v2732 = vunpack.c.0.s8 %v2731
        %v2733 = vperm.slane %v2727, %v2732
        %v2735 = vunpack.c.l.s4 1983009808
        %v2736 = vunpack.c.0.s8 %v2735
        %v2737 = vperm.slane %v2729, %v2736
        %v2738 = vrot.slane %v2733, 4
        %v2739 = vsel %vm526, %v2738, %v2721
        %v2740 = vrot.slane %v2721, 4
        %v2741 = vsel %vm526, %v2733, %v2740
        %v2743 = vunpack.c.l.s4 1934713408
        %v2744 = vunpack.c.0.s8 %v2743
        %v2745 = vperm.slane %v2739, %v2744
        %v2747 = vunpack.c.l.s4 1934713408
        %v2748 = vunpack.c.0.s8 %v2747
        %v2749 = vperm.slane %v2741, %v2748
        %v2750 = vrot.slane %v2737, 4
        %v2751 = vsel %vm526, %v2750, %v2725
        %v2752 = vrot.slane %v2725, 4
        %v2753 = vsel %vm526, %v2737, %v2752
        %v2755 = vunpack.c.l.s4 1934713408
        %v2756 = vunpack.c.0.s8 %v2755
        %v2757 = vperm.slane %v2751, %v2756
        %v2759 = vunpack.c.l.s4 1934713408
        %v2760 = vunpack.c.0.s8 %v2759
        %v2761 = vperm.slane %v2753, %v2760
        %v2762 = vrot.slane %v2745, 4
        %v2763 = vsel %vm526, 0.0, %v2762
        %v2764 = vrot.slane %v2749, 4
        %v2765 = vsel %vm526, 0.0, %v2764
        %v2766 = vrot.slane %v2757, 4
        %v2767 = vsel %vm526, 0.0, %v2766
        %v2768 = vrot.slane %v2761, 4
        %v2769 = vsel %vm526, 0.0, %v2768
        %v2770 = vsel %vm526, %v2764, %v2745
        %v2772 = vunpack.c.l.s4 1983009808
        %v2773 = vunpack.c.0.s8 %v2772
        %v2774 = vperm.slane %v2770, %v2773
        %v2775 = vrot.slane %v2765, 4
        %v2776 = vsel %vm526, %v2775, %v2763
        %v2778 = vunpack.c.l.s4 1983009808
        %v2779 = vunpack.c.0.s8 %v2778
        %v2780 = vperm.slane %v2776, %v2779
        %v2781 = vsel %vm526, %v2768, %v2757
        %v2783 = vunpack.c.l.s4 1983009808
        %v2784 = vunpack.c.0.s8 %v2783
        %v2785 = vperm.slane %v2781, %v2784
        %v2786 = vrot.slane %v2769, 4
        %v2787 = vsel %vm526, %v2786, %v2767
        %v2789 = vunpack.c.l.s4 1983009808
        %v2790 = vunpack.c.0.s8 %v2789
        %v2791 = vperm.slane %v2787, %v2790
        %v2792 = vrot.slane %v2780, 4
        %v2793 = vsel %vm526, %v2792, %v2774
        %v2794 = vrot.slane %v2774, 4
        %v2795 = vsel %vm526, %v2780, %v2794
        %v2797 = vunpack.c.l.s4 1934713408
        %v2798 = vunpack.c.0.s8 %v2797
        %v2799 = vperm.slane %v2793, %v2798
        %v2801 = vunpack.c.l.s4 1934713408
        %v2802 = vunpack.c.0.s8 %v2801
        %v2803 = vperm.slane %v2795, %v2802
        %v2804 = vrot.slane %v2791, 4
        %v2805 = vsel %vm526, %v2804, %v2785
        %v2806 = vrot.slane %v2785, 4
        %v2807 = vsel %vm526, %v2791, %v2806
        %v2809 = vunpack.c.l.s4 1934713408
        %v2810 = vunpack.c.0.s8 %v2809
        %v2811 = vperm.slane %v2805, %v2810
        %v2813 = vunpack.c.l.s4 1934713408
        %v2814 = vunpack.c.0.s8 %v2813
        %v2815 = vperm.slane %v2807, %v2814
        %v2816 = vrot.slane %v2811, 4
        %v2817 = vsel %vm526, %v2816, %v2799
        %v2818 = vrot.slane %v2799, 4
        %v2819 = vsel %vm526, %v2811, %v2818
        %v2820 = vrot.slane %v2815, 4
        %v2821 = vsel %vm526, %v2820, %v2803
        %v2822 = vrot.slane %v2803, 4
        %v2823 = vsel %vm526, %v2815, %v2822
        %v2824 = vpack.c.bf16 %v2817, %v2817
        %v2825 = vpack.c.bf16 %v2819, %v2819
        %v2826 = vpack.c.bf16 %v2821, %v2821
        %v2827 = vpack.c.bf16 %v2823, %v2823
        %2828 = vrot.lane.b32.xlu0 %v2575, 64
        %v2829 = vpop.permute.xlu0 %2828
        %2830 = vrot.lane.b32.xlu0 %v2580, 64
        %v2831 = vpop.permute.xlu0 %2830
        %2832 = vrot.lane.b32.xlu0 %v2583, 64
        %v2833 = vpop.permute.xlu0 %2832
        %2834 = vrot.lane.b32.xlu0 %v2586, 64
        %v2835 = vpop.permute.xlu0 %2834
        %v2840 = vrot.slane %v2833, 4
        %v2841 = vsel %vm526, %v2840, %v2829
        %v2842 = vrot.slane %v2829, 4
        %v2843 = vsel %vm526, %v2833, %v2842
        %v2845 = vunpack.c.l.s4 1983009808
        %v2846 = vunpack.c.0.s8 %v2845
        %v2847 = vperm.slane %v2841, %v2846
        %v2849 = vunpack.c.l.s4 1983009808
        %v2850 = vunpack.c.0.s8 %v2849
        %v2851 = vperm.slane %v2843, %v2850
        %v2852 = vrot.slane %v2835, 4
        %v2853 = vsel %vm526, %v2852, %v2831
        %v2854 = vrot.slane %v2831, 4
        %v2855 = vsel %vm526, %v2835, %v2854
        %v2857 = vunpack.c.l.s4 1983009808
        %v2858 = vunpack.c.0.s8 %v2857
        %v2859 = vperm.slane %v2853, %v2858
        %v2861 = vunpack.c.l.s4 1983009808
        %v2862 = vunpack.c.0.s8 %v2861
        %v2863 = vperm.slane %v2855, %v2862
        %v2864 = vrot.slane %v2859, 4
        %v2865 = vsel %vm526, %v2864, %v2847
        %v2866 = vrot.slane %v2847, 4
        %v2867 = vsel %vm526, %v2859, %v2866
        %v2869 = vunpack.c.l.s4 1934713408
        %v2870 = vunpack.c.0.s8 %v2869
        %v2871 = vperm.slane %v2865, %v2870
        %v2873 = vunpack.c.l.s4 1934713408
        %v2874 = vunpack.c.0.s8 %v2873
        %v2875 = vperm.slane %v2867, %v2874
        %v2876 = vrot.slane %v2863, 4
        %v2877 = vsel %vm526, %v2876, %v2851
        %v2878 = vrot.slane %v2851, 4
        %v2879 = vsel %vm526, %v2863, %v2878
        %v2881 = vunpack.c.l.s4 1934713408
        %v2882 = vunpack.c.0.s8 %v2881
        %v2883 = vperm.slane %v2877, %v2882
        %v2885 = vunpack.c.l.s4 1934713408
        %v2886 = vunpack.c.0.s8 %v2885
        %v2887 = vperm.slane %v2879, %v2886
        %v2888 = vrot.slane %v2871, 4
        %v2889 = vsel %vm526, 0.0, %v2888
        %v2890 = vrot.slane %v2875, 4
        %v2891 = vsel %vm526, 0.0, %v2890
        %v2892 = vrot.slane %v2883, 4
        %v2893 = vsel %vm526, 0.0, %v2892
        %v2894 = vrot.slane %v2887, 4
        %v2895 = vsel %vm526, 0.0, %v2894
        %v2896 = vsel %vm526, %v2890, %v2871
        %v2898 = vunpack.c.l.s4 1983009808
        %v2899 = vunpack.c.0.s8 %v2898
        %v2900 = vperm.slane %v2896, %v2899
        %v2901 = vrot.slane %v2891, 4
        %v2902 = vsel %vm526, %v2901, %v2889
        %v2904 = vunpack.c.l.s4 1983009808
        %v2905 = vunpack.c.0.s8 %v2904
        %v2906 = vperm.slane %v2902, %v2905
        %v2907 = vsel %vm526, %v2894, %v2883
        %v2909 = vunpack.c.l.s4 1983009808
        %v2910 = vunpack.c.0.s8 %v2909
        %v2911 = vperm.slane %v2907, %v2910
        %v2912 = vrot.slane %v2895, 4
        %v2913 = vsel %vm526, %v2912, %v2893
        %v2915 = vunpack.c.l.s4 1983009808
        %v2916 = vunpack.c.0.s8 %v2915
        %v2917 = vperm.slane %v2913, %v2916
        %v2918 = vrot.slane %v2906, 4
        %v2919 = vsel %vm526, %v2918, %v2900
        %v2920 = vrot.slane %v2900, 4
        %v2921 = vsel %vm526, %v2906, %v2920
        %v2923 = vunpack.c.l.s4 1934713408
        %v2924 = vunpack.c.0.s8 %v2923
        %v2925 = vperm.slane %v2919, %v2924
        %v2927 = vunpack.c.l.s4 1934713408
        %v2928 = vunpack.c.0.s8 %v2927
        %v2929 = vperm.slane %v2921, %v2928
        %v2930 = vrot.slane %v2917, 4
        %v2931 = vsel %vm526, %v2930, %v2911
        %v2932 = vrot.slane %v2911, 4
        %v2933 = vsel %vm526, %v2917, %v2932
        %v2935 = vunpack.c.l.s4 1934713408
        %v2936 = vunpack.c.0.s8 %v2935
        %v2937 = vperm.slane %v2931, %v2936
        %v2939 = vunpack.c.l.s4 1934713408
        %v2940 = vunpack.c.0.s8 %v2939
        %v2941 = vperm.slane %v2933, %v2940
        %v2942 = vrot.slane %v2937, 4
        %v2943 = vsel %vm526, %v2942, %v2925
        %v2944 = vrot.slane %v2925, 4
        %v2945 = vsel %vm526, %v2937, %v2944
        %v2946 = vrot.slane %v2941, 4
        %v2947 = vsel %vm526, %v2946, %v2929
        %v2948 = vrot.slane %v2929, 4
        %v2949 = vsel %vm526, %v2941, %v2948
        %v2950 = vpack.c.bf16 %v2943, %v2943
        %v2951 = vpack.c.bf16 %v2945, %v2945
        %v2952 = vpack.c.bf16 %v2947, %v2947
        %v2953 = vpack.c.bf16 %v2949, %v2949
        %v2955 = vsel %vm892, %v2698, 0
        %v2958 = vsel %vm892, %v2824, 0
        %2960 = vmatpush.bf16.xpose.msra.mxu0 0
        %2961 = vmatpush.bf16.xpose.msra.mxu0 0
        %2962 = vmatpush.bf16.xpose.msra.mxu0 0
        %2963 = vmatpush.bf16.xpose.msra.mxu0 0
        %2964 = vmatpush.bf16.xpose.msra.mxu0 0
        %2965 = vmatpush.bf16.xpose.msra.mxu0 0
        %2966 = vmatpush.bf16.xpose.msra.mxu0 0
        %2967 = vmatpush.bf16.xpose.msra.mxu0 %v2958
        %2968 = vmatmul.bf16.gmra.mxu0 %v2955
        %v2969 = vpop.f32.mrf.mxu0
        %v2970 = vadd.f32 0.0, %v2969
        %v2971 = vpop.f32.mrf.mxu0
        %2972 = vdwg.mxu0
        %v2974 = vsel %vm892, %v2699, 0
        %v2977 = vsel %vm892, %v2825, 0
        %2979 = vmatpush.bf16.xpose.msra.mxu0 0
        %2980 = vmatpush.bf16.xpose.msra.mxu0 0
        %2981 = vmatpush.bf16.xpose.msra.mxu0 0
        %2982 = vmatpush.bf16.xpose.msra.mxu0 0
        %2983 = vmatpush.bf16.xpose.msra.mxu0 0
        %2984 = vmatpush.bf16.xpose.msra.mxu0 0
        %2985 = vmatpush.bf16.xpose.msra.mxu0 0
        %2986 = vmatpush.bf16.xpose.msra.mxu0 %v2977
        %2987 = vmatmul.bf16.gmra.mxu0 %v2974
        %v2988 = vpop.f32.mrf.mxu0
        %v2989 = vadd.f32 0.0, %v2988
        %v2990 = vpop.f32.mrf.mxu0
        %2991 = vdwg.mxu0
        %v2993 = vsel %vm892, %v2700, 0
        %v2996 = vsel %vm892, %v2826, 0
        %2998 = vmatpush.bf16.xpose.msra.mxu0 0
        %2999 = vmatpush.bf16.xpose.msra.mxu0 0
        %3000 = vmatpush.bf16.xpose.msra.mxu0 0
        %3001 = vmatpush.bf16.xpose.msra.mxu0 0
        %3002 = vmatpush.bf16.xpose.msra.mxu0 0
        %3003 = vmatpush.bf16.xpose.msra.mxu0 0
        %3004 = vmatpush.bf16.xpose.msra.mxu0 0
        %3005 = vmatpush.bf16.xpose.msra.mxu0 %v2996
        %3006 = vmatmul.bf16.gmra.mxu0 %v2993
        %v3007 = vpop.f32.mrf.mxu0
        %v3008 = vadd.f32 0.0, %v3007
        %v3009 = vpop.f32.mrf.mxu0
        %3010 = vdwg.mxu0
        %v3012 = vsel %vm892, %v2701, 0
        %v3015 = vsel %vm892, %v2827, 0
        %3017 = vmatpush.bf16.xpose.msra.mxu0 0
        %3018 = vmatpush.bf16.xpose.msra.mxu0 0
        %3019 = vmatpush.bf16.xpose.msra.mxu0 0
        %3020 = vmatpush.bf16.xpose.msra.mxu0 0
        %3021 = vmatpush.bf16.xpose.msra.mxu0 0
        %3022 = vmatpush.bf16.xpose.msra.mxu0 0
        %3023 = vmatpush.bf16.xpose.msra.mxu0 0
        %3024 = vmatpush.bf16.xpose.msra.mxu0 %v3015
        %3025 = vmatmul.bf16.gmra.mxu0 %v3012
        %v3026 = vpop.f32.mrf.mxu0
        %v3027 = vadd.f32 0.0, %v3026
        %v3028 = vpop.f32.mrf.mxu0
        %3029 = vdwg.mxu0
        %v3030 = vsel %vm892, %v2970, -inf
        %3031 = vmax.xlane.f32.xlu0 %v3030
        %v3032 = vpop.xlane.xlu0 %3031
        %v3033 = vsel %vm892, %v2989, -inf
        %3034 = vmax.xlane.f32.xlu0 %v3033
        %v3035 = vpop.xlane.xlu0 %3034
        %v3036 = vsel %vm892, %v3008, -inf
        %3037 = vmax.xlane.f32.xlu0 %v3036
        %v3038 = vpop.xlane.xlu0 %3037
        %v3039 = vsel %vm892, %v3027, -inf
        %3040 = vmax.xlane.f32.xlu0 %v3039
        %v3041 = vpop.xlane.xlu0 %3040
        %v3042 = vsub.f32 %v2970, %v3032
        %v3043 = vsub.f32 %v2989, %v3035
        %v3044 = vsub.f32 %v3008, %v3038
        %v3045 = vsub.f32 %v3027, %v3041
        %v3046 = vmul.f32 %v3042, 1.442695
        %v3047 = vpow.pop %v3046
        %v3048 = vmul.f32 %v3043, 1.442695
        %v3049 = vpow.pop %v3048
        %v3050 = vmul.f32 %v3044, 1.442695
        %v3051 = vpow.pop %v3050
        %v3052 = vmul.f32 %v3045, 1.442695
        %v3053 = vpow.pop %v3052
        %v3054 = vsel %vm892, %v3047, 0.0
        %3055 = vadd.xlane.f32.xlu0 %v3054
        %v3056 = vpop.xlane.xlu0 %3055
        %v3057 = vsel %vm892, %v3049, 0.0
        %3058 = vadd.xlane.f32.xlu0 %v3057
        %v3059 = vpop.xlane.xlu0 %3058
        %v3060 = vsel %vm892, %v3051, 0.0
        %3061 = vadd.xlane.f32.xlu0 %v3060
        %v3062 = vpop.xlane.xlu0 %3061
        %v3063 = vsel %vm892, %v3053, 0.0
        %3064 = vadd.xlane.f32.xlu0 %v3063
        %v3065 = vpop.xlane.xlu0 %3064
        %v3066 = vrcp.pop %v3056
        %v3067 = vmul.f32 %v3056, %v3066
        %v3068 = vsub.f32 1.0, %v3067
        %v3069 = vmul.f32 %v3066, %v3068
        %v3070 = vadd.f32 %v3066, %v3069
        %vm3071 = vweird.f32 %v3056
        %vm3072 = vweird.f32 %v3066
        %vm3073 = vmor %vm3071, %vm3072
        %v3074 = vsel %vm3073, %v3066, %v3070
        %v3075 = vand.u32 2147483647, %v3056
        %vm3076 = vcmp.eq.f32.partialorder %v3075, 8.507059e+37
        %v3077 = vand.u32 %v3056, 2147483648
        %v3078 = vor.u32 1.1754944e-38, %v3077
        %v3079 = vsel %vm3076, %v3078, %v3074
        %v3080 = vmul.f32 %v3047, %v3079
        %v3081 = vrcp.pop %v3059
        %v3082 = vmul.f32 %v3059, %v3081
        %v3083 = vsub.f32 1.0, %v3082
        %v3084 = vmul.f32 %v3081, %v3083
        %v3085 = vadd.f32 %v3081, %v3084
        %vm3086 = vweird.f32 %v3059
        %vm3087 = vweird.f32 %v3081
        %vm3088 = vmor %vm3086, %vm3087
        %v3089 = vsel %vm3088, %v3081, %v3085
        %v3090 = vand.u32 2147483647, %v3059
        %vm3091 = vcmp.eq.f32.partialorder %v3090, 8.507059e+37
        %v3092 = vand.u32 %v3059, 2147483648
        %v3093 = vor.u32 1.1754944e-38, %v3092
        %v3094 = vsel %vm3091, %v3093, %v3089
        %v3095 = vmul.f32 %v3049, %v3094
        %v3096 = vrcp.pop %v3062
        %v3097 = vmul.f32 %v3062, %v3096
        %v3098 = vsub.f32 1.0, %v3097
        %v3099 = vmul.f32 %v3096, %v3098
        %v3100 = vadd.f32 %v3096, %v3099
        %vm3101 = vweird.f32 %v3062
        %vm3102 = vweird.f32 %v3096
        %vm3103 = vmor %vm3101, %vm3102
        %v3104 = vsel %vm3103, %v3096, %v3100
        %v3105 = vand.u32 2147483647, %v3062
        %vm3106 = vcmp.eq.f32.partialorder %v3105, 8.507059e+37
        %v3107 = vand.u32 %v3062, 2147483648
        %v3108 = vor.u32 1.1754944e-38, %v3107
        %v3109 = vsel %vm3106, %v3108, %v3104
        %v3110 = vmul.f32 %v3051, %v3109
        %v3111 = vrcp.pop %v3065
        %v3112 = vmul.f32 %v3065, %v3111
        %v3113 = vsub.f32 1.0, %v3112
        %v3114 = vmul.f32 %v3111, %v3113
        %v3115 = vadd.f32 %v3111, %v3114
        %vm3116 = vweird.f32 %v3065
        %vm3117 = vweird.f32 %v3111
        %vm3118 = vmor %vm3116, %vm3117
        %v3119 = vsel %vm3118, %v3111, %v3115
        %v3120 = vand.u32 2147483647, %v3065
        %vm3121 = vcmp.eq.f32.partialorder %v3120, 8.507059e+37
        %v3122 = vand.u32 %v3065, 2147483648
        %v3123 = vor.u32 1.1754944e-38, %v3122
        %v3124 = vsel %vm3121, %v3123, %v3119
        %v3125 = vmul.f32 %v3053, %v3124
        %v3126 = vpack.c.bf16 %v3080, %v3080
        %v3127 = vpack.c.bf16 %v3095, %v3095
        %v3128 = vpack.c.bf16 %v3110, %v3110
        %v3129 = vpack.c.bf16 %v3125, %v3125
        %v3131 = vsel %vm892, %v3126, 0
        %v3134 = vsel %vm1072, %v2950, 0
        %3136 = vmatpush.bf16.msra.mxu0 0
        %3137 = vmatpush.bf16.msra.mxu0 0
        %3138 = vmatpush.bf16.msra.mxu0 0
        %3139 = vmatpush.bf16.msra.mxu0 0
        %3140 = vmatpush.bf16.msra.mxu0 0
        %3141 = vmatpush.bf16.msra.mxu0 0
        %3142 = vmatpush.bf16.msra.mxu0 0
        %3143 = vmatpush.bf16.msra.mxu0 %v3134
        %3144 = vmatmul.bf16.gmra.mxu0 %v3131
        %v3145 = vpop.f32.mrf.mxu0
        %v3146 = vadd.f32 0.0, %v3145
        %v3147 = vpop.f32.mrf.mxu0
        %3148 = vdwg.mxu0
        %v3150 = vsel %vm892, %v3127, 0
        %v3153 = vsel %vm1072, %v2951, 0
        %3155 = vmatpush.bf16.msra.mxu0 0
        %3156 = vmatpush.bf16.msra.mxu0 0
        %3157 = vmatpush.bf16.msra.mxu0 0
        %3158 = vmatpush.bf16.msra.mxu0 0
        %3159 = vmatpush.bf16.msra.mxu0 0
        %3160 = vmatpush.bf16.msra.mxu0 0
        %3161 = vmatpush.bf16.msra.mxu0 0
        %3162 = vmatpush.bf16.msra.mxu0 %v3153
        %3163 = vmatmul.bf16.gmra.mxu0 %v3150
        %v3164 = vpop.f32.mrf.mxu0
        %v3165 = vadd.f32 0.0, %v3164
        %v3166 = vpop.f32.mrf.mxu0
        %3167 = vdwg.mxu0
        %v3169 = vsel %vm892, %v3128, 0
        %v3172 = vsel %vm1072, %v2952, 0
        %3174 = vmatpush.bf16.msra.mxu0 0
        %3175 = vmatpush.bf16.msra.mxu0 0
        %3176 = vmatpush.bf16.msra.mxu0 0
        %3177 = vmatpush.bf16.msra.mxu0 0
        %3178 = vmatpush.bf16.msra.mxu0 0
        %3179 = vmatpush.bf16.msra.mxu0 0
        %3180 = vmatpush.bf16.msra.mxu0 0
        %3181 = vmatpush.bf16.msra.mxu0 %v3172
        %3182 = vmatmul.bf16.gmra.mxu0 %v3169
        %v3183 = vpop.f32.mrf.mxu0
        %v3184 = vadd.f32 0.0, %v3183
        %v3185 = vpop.f32.mrf.mxu0
        %3186 = vdwg.mxu0
        %v3188 = vsel %vm892, %v3129, 0
        %v3191 = vsel %vm1072, %v2953, 0
        %3193 = vmatpush.bf16.msra.mxu0 0
        %3194 = vmatpush.bf16.msra.mxu0 0
        %3195 = vmatpush.bf16.msra.mxu0 0
        %3196 = vmatpush.bf16.msra.mxu0 0
        %3197 = vmatpush.bf16.msra.mxu0 0
        %3198 = vmatpush.bf16.msra.mxu0 0
        %3199 = vmatpush.bf16.msra.mxu0 0
        %3200 = vmatpush.bf16.msra.mxu0 %v3191
        %3201 = vmatmul.bf16.gmra.mxu0 %v3188
        %v3202 = vpop.f32.mrf.mxu0
        %v3203 = vadd.f32 0.0, %v3202
        %v3204 = vpop.f32.mrf.mxu0
        %3205 = vdwg.mxu0
        %v3206 = vrot.slane %v3184, 4
        %v3207 = vsel %vm526, %v3206, %v3146
        %v3208 = vrot.slane %v3146, 4
        %v3209 = vsel %vm526, %v3184, %v3208
        %v3211 = vunpack.c.l.s4 1983009808
        %v3212 = vunpack.c.0.s8 %v3211
        %v3213 = vperm.slane %v3207, %v3212
        %v3215 = vunpack.c.l.s4 1983009808
        %v3216 = vunpack.c.0.s8 %v3215
        %v3217 = vperm.slane %v3209, %v3216
        %v3218 = vrot.slane %v3203, 4
        %v3219 = vsel %vm526, %v3218, %v3165
        %v3220 = vrot.slane %v3165, 4
        %v3221 = vsel %vm526, %v3203, %v3220
        %v3223 = vunpack.c.l.s4 1983009808
        %v3224 = vunpack.c.0.s8 %v3223
        %v3225 = vperm.slane %v3219, %v3224
        %v3227 = vunpack.c.l.s4 1983009808
        %v3228 = vunpack.c.0.s8 %v3227
        %v3229 = vperm.slane %v3221, %v3228
        %v3230 = vrot.slane %v3225, 4
        %v3231 = vsel %vm526, %v3230, %v3213
        %v3232 = vrot.slane %v3213, 4
        %v3233 = vsel %vm526, %v3225, %v3232
        %v3235 = vunpack.c.l.s4 1934713408
        %v3236 = vunpack.c.0.s8 %v3235
        %v3237 = vperm.slane %v3231, %v3236
        %v3239 = vunpack.c.l.s4 1934713408
        %v3240 = vunpack.c.0.s8 %v3239
        %v3241 = vperm.slane %v3233, %v3240
        %v3242 = vrot.slane %v3229, 4
        %v3243 = vsel %vm526, %v3242, %v3217
        %v3244 = vrot.slane %v3217, 4
        %v3245 = vsel %vm526, %v3229, %v3244
        %v3247 = vunpack.c.l.s4 1934713408
        %v3248 = vunpack.c.0.s8 %v3247
        %v3249 = vperm.slane %v3243, %v3248
        %v3251 = vunpack.c.l.s4 1934713408
        %v3252 = vunpack.c.0.s8 %v3251
        %v3253 = vperm.slane %v3245, %v3252
        %v3254 = vrot.slane %v3237, 4
        %v3255 = vsel %vm526, 0.0, %v3254
        %v3256 = vrot.slane %v3241, 4
        %v3257 = vsel %vm526, 0.0, %v3256
        %v3258 = vrot.slane %v3249, 4
        %v3259 = vsel %vm526, 0.0, %v3258
        %v3260 = vrot.slane %v3253, 4
        %v3261 = vsel %vm526, 0.0, %v3260
        %v3262 = vsel %vm526, %v3256, %v3237
        %v3264 = vunpack.c.l.s4 1983009808
        %v3265 = vunpack.c.0.s8 %v3264
        %v3266 = vperm.slane %v3262, %v3265
        %v3267 = vrot.slane %v3257, 4
        %v3268 = vsel %vm526, %v3267, %v3255
        %v3270 = vunpack.c.l.s4 1983009808
        %v3271 = vunpack.c.0.s8 %v3270
        %v3272 = vperm.slane %v3268, %v3271
        %v3273 = vsel %vm526, %v3260, %v3249
        %v3275 = vunpack.c.l.s4 1983009808
        %v3276 = vunpack.c.0.s8 %v3275
        %v3277 = vperm.slane %v3273, %v3276
        %v3278 = vrot.slane %v3261, 4
        %v3279 = vsel %vm526, %v3278, %v3259
        %v3281 = vunpack.c.l.s4 1983009808
        %v3282 = vunpack.c.0.s8 %v3281
        %v3283 = vperm.slane %v3279, %v3282
        %v3284 = vrot.slane %v3272, 4
        %v3285 = vsel %vm526, %v3284, %v3266
        %v3286 = vrot.slane %v3266, 4
        %v3287 = vsel %vm526, %v3272, %v3286
        %v3289 = vunpack.c.l.s4 1934713408
        %v3290 = vunpack.c.0.s8 %v3289
        %v3291 = vperm.slane %v3285, %v3290
        %v3293 = vunpack.c.l.s4 1934713408
        %v3294 = vunpack.c.0.s8 %v3293
        %v3295 = vperm.slane %v3287, %v3294
        %v3296 = vrot.slane %v3283, 4
        %v3297 = vsel %vm526, %v3296, %v3277
        %v3298 = vrot.slane %v3277, 4
        %v3299 = vsel %vm526, %v3283, %v3298
        %v3301 = vunpack.c.l.s4 1934713408
        %v3302 = vunpack.c.0.s8 %v3301
        %v3303 = vperm.slane %v3297, %v3302
        %v3305 = vunpack.c.l.s4 1934713408
        %v3306 = vunpack.c.0.s8 %v3305
        %v3307 = vperm.slane %v3299, %v3306
        %v3308 = vrot.slane %v3303, 4
        %v3309 = vsel %vm526, %v3308, %v3291
        %v3310 = vrot.slane %v3291, 4
        %v3311 = vsel %vm526, %v3303, %v3310
        %v3312 = vrot.slane %v3307, 4
        %v3313 = vsel %vm526, %v3312, %v3295
        %v3314 = vrot.slane %v3295, 4
        %v3315 = vsel %vm526, %v3307, %v3314
        %3317 = vrot.lane.b32.xlu0 %v3311, 8
        %v3318 = vpop.permute.xlu0 %3317
        %3321 = vrot.lane.b32.xlu0 %v3313, 16
        %v3322 = vpop.permute.xlu0 %3321
        %3325 = vrot.lane.b32.xlu0 %v3315, 24
        %v3326 = vpop.permute.xlu0 %3325
        %v3328 = vsel %vm892, %v3309, %v3318
        %v3329 = vsel %vm1269, %v3328, %v3322
        %v3330 = vsel %vm1271, %v3329, %v3326
        %v3331 = vpack.c.bf16 %v3330, %v3330
        %s3332 = scalar_lea.vmem %s5, 32
        %v3333 = vld [vmem:[%s3332] sm:$0xf]
        %v3334 = vld [vmem:[%s3332 + $0x4] sm:$0xf]
        %v3335 = vld [vmem:[%s3332 + $0x8] sm:$0xf]
        %v3336 = vld [vmem:[%s3332 + $0xc] sm:$0xf]
        %s3337 = scalar_lea.vmem %s6, 2
        %v3338 = vld [vmem:[%s3337] sm:$0x1]
        %v3340 = vperm.slane %v3338, 0
        %v3346 = vunpack.c.l.b16 %v3333
        %v3347 = vunpack.c.l.b16 %v3334
        %v3348 = vunpack.c.l.b16 %v3335
        %v3349 = vunpack.c.l.b16 %v3336
        %v3350 = vpack.c.b16 %v3347, %v3346
        %v3351 = vpack.c.b16 %v3349, %v3348
        %v3355 = vsel %vm440, %v3331, 0
        %3357 = vmatpush.bf16.msra.mxu0 0
        %3358 = vmatpush.bf16.msra.mxu0 0
        %3359 = vmatpush.bf16.msra.mxu0 0
        %3360 = vmatpush.bf16.msra.mxu0 0
        %3361 = vmatpush.bf16.msra.mxu0 0
        %3362 = vmatpush.bf16.msra.mxu0 0
        %3363 = vmatpush.bf16.msra.mxu0 %v3351
        %3364 = vmatpush.bf16.msra.mxu0 %v3350
        %3365 = vmatmul.bf16.gmra.mxu0 %v3355
        %v3366 = vpop.f32.mrf.mxu0
        %v3367 = vadd.f32 %v3340, %v3366
        %v3368 = vpop.f32.mrf.mxu0
        %3369 = vdwg.mxu0
        %v3370 = vadd.f32 %v2504, %v3367
        %s3371 = scalar_lea.vmem %s7, 2
        %v3372 = vld [vmem:[%s3371] sm:$0x1]
        %s3373 = scalar_lea.vmem %s8, 2
        %v3374 = vld [vmem:[%s3373] sm:$0x1]
        %v3375 = vsel %vm440, %v3370, 0.0
        %3376 = vadd.xlane.f32.xlu0 %v3375
        %v3377 = vpop.xlane.xlu0 %3376
        %v3378 = vmul.f32 %v3377, %v450
        %v3379 = vsub.f32 %v3370, %v3378
        %v3380 = vmul.f32 %v3379, %v3379
        %v3381 = vsel %vm440, %v3380, 0.0
        %3382 = vadd.xlane.f32.xlu0 %v3381
        %v3383 = vpop.xlane.xlu0 %3382
        %v3384 = vmul.f32 %v3383, %v450
        %v3385 = vadd.f32 %v3384, 1e-06
        %v3386 = vrsqrt.pop %v3385
        %v3387 = vmul.f32 %v3386, %v3385
        %v3388 = vmul.f32 %v3387, %v3386
        %v3389 = vmul.f32 0.5, %v3388
        %v3390 = vsub.f32 1.5, %v3389
        %v3391 = vmul.f32 %v3386, %v3390
        %vm3392 = vweird.f32 %v3385
        %vm3393 = vweird.f32 %v3386
        %vm3394 = vmor %vm3392, %vm3393
        %v3395 = vsel %vm3394, %v3386, %v3391
        %v3396 = vmul.f32 %v3379, %v3395
        %v3398 = vperm.slane %v3372, 0
        %v3400 = vmul.f32 %v3396, %v3398
        %v3402 = vperm.slane %v3374, 0
        %v3404 = vadd.f32 %v3400, %v3402
        %v3405 = vpack.c.bf16 %v3404, %v3404
        %s3406 = scalar_lea.vmem %s9, 32
        %v3407 = vld [vmem:[%s3406] sm:$0xf]
        %v3408 = vld [vmem:[%s3406 + $0x4] sm:$0xf]
        %v3409 = vld [vmem:[%s3406 + $0x8] sm:$0xf]
        %v3410 = vld [vmem:[%s3406 + $0xc] sm:$0xf]
        %s3411 = scalar_lea.vmem %s10, 2
        %v3412 = vld [vmem:[%s3411] sm:$0x1]
        %v3414 = vperm.slane %v3412, 0
        %v3420 = vunpack.c.l.b16 %v3407
        %v3421 = vunpack.c.l.b16 %v3408
        %v3422 = vunpack.c.l.b16 %v3409
        %v3423 = vunpack.c.l.b16 %v3410
        %v3424 = vpack.c.b16 %v3421, %v3420
        %v3425 = vpack.c.b16 %v3423, %v3422
        %v3429 = vsel %vm440, %v3405, 0
        %3431 = vmatpush.bf16.msra.mxu0 0
        %3432 = vmatpush.bf16.msra.mxu0 0
        %3433 = vmatpush.bf16.msra.mxu0 0
        %3434 = vmatpush.bf16.msra.mxu0 0
        %3435 = vmatpush.bf16.msra.mxu0 0
        %3436 = vmatpush.bf16.msra.mxu0 0
        %3437 = vmatpush.bf16.msra.mxu0 %v3425
        %3438 = vmatpush.bf16.msra.mxu0 %v3424
        %3439 = vmatmul.bf16.gmra.mxu0 %v3429
        %v3440 = vpop.f32.mrf.mxu0
        %v3441 = vadd.f32 %v3414, %v3440
        %v3442 = vpop.f32.mrf.mxu0
        %3443 = vdwg.mxu0
        %v3444 = vmul.f32 %v3441, 0.5
        %v3445 = vmul.f32 %v3441, 0.044715
        %v3446 = vmul.f32 %v3445, %v3441
        %v3447 = vmul.f32 %v3446, %v3441
        %v3448 = vadd.f32 %v3441, %v3447
        %v3449 = vmul.f32 %v3448, 0.7978846
        %v3450 = vtanh.pop %v3449
        %v3451 = vadd.f32 %v3450, 1.0
        %v3452 = vmul.f32 %v3444, %v3451
        %v3453 = vpack.c.bf16 %v3452, %v3452
        %s3454 = scalar_lea.vmem %s11, 128
        %v3455 = vld [vmem:[%s3454] sm:$0xf]
        %v3456 = vld [vmem:[%s3454 + $0x4] sm:$0xf]
        %v3457 = vld [vmem:[%s3454 + $0x8] sm:$0xf]
        %v3458 = vld [vmem:[%s3454 + $0xc] sm:$0xf]
        %v3459 = vld [vmem:[%s3454 + $0x10] sm:$0xf]
        %v3460 = vld [vmem:[%s3454 + $0x14] sm:$0xf]
        %v3461 = vld [vmem:[%s3454 + $0x18] sm:$0xf]
        %v3462 = vld [vmem:[%s3454 + $0x1c] sm:$0xf]
        %v3463 = vld [vmem:[%s3454 + $0x20] sm:$0xf]
        %v3464 = vld [vmem:[%s3454 + $0x24] sm:$0xf]
        %v3465 = vld [vmem:[%s3454 + $0x28] sm:$0xf]
        %v3466 = vld [vmem:[%s3454 + $0x2c] sm:$0xf]
        %v3467 = vld [vmem:[%s3454 + $0x30] sm:$0xf]
        %v3468 = vld [vmem:[%s3454 + $0x34] sm:$0xf]
        %v3469 = vld [vmem:[%s3454 + $0x38] sm:$0xf]
        %v3470 = vld [vmem:[%s3454 + $0x3c] sm:$0xf]
        %s3471 = scalar_lea.vmem %s12, 2
        %v3472 = vld [vmem:[%s3471] sm:$0x1]
        %v3474 = vperm.slane %v3472, 0
        %v3492 = vunpack.c.l.b16 %v3455
        %v3493 = vunpack.c.l.b16 %v3456
        %v3494 = vunpack.c.l.b16 %v3457
        %v3495 = vunpack.c.l.b16 %v3458
        %v3496 = vunpack.c.l.b16 %v3459
        %v3497 = vunpack.c.l.b16 %v3460
        %v3498 = vunpack.c.l.b16 %v3461
        %v3499 = vunpack.c.l.b16 %v3462
        %v3500 = vunpack.c.l.b16 %v3463
        %v3501 = vunpack.c.l.b16 %v3464
        %v3502 = vunpack.c.l.b16 %v3465
        %v3503 = vunpack.c.l.b16 %v3466
        %v3504 = vunpack.c.l.b16 %v3467
        %v3505 = vunpack.c.l.b16 %v3468
        %v3506 = vunpack.c.l.b16 %v3469
        %v3507 = vunpack.c.l.b16 %v3470
        %v3508 = vpack.c.b16 %v3493, %v3492
        %v3509 = vpack.c.b16 %v3495, %v3494
        %v3510 = vpack.c.b16 %v3497, %v3496
        %v3511 = vpack.c.b16 %v3499, %v3498
        %v3512 = vpack.c.b16 %v3501, %v3500
        %v3513 = vpack.c.b16 %v3503, %v3502
        %v3514 = vpack.c.b16 %v3505, %v3504
        %v3515 = vpack.c.b16 %v3507, %v3506
        %3524 = vmatpush.bf16.msra.mxu0 %v3515
        %3525 = vmatpush.bf16.msra.mxu0 %v3514
        %3526 = vmatpush.bf16.msra.mxu0 %v3513
        %3527 = vmatpush.bf16.msra.mxu0 %v3512
        %3528 = vmatpush.bf16.msra.mxu0 %v3511
        %3529 = vmatpush.bf16.msra.mxu0 %v3510
        %3530 = vmatpush.bf16.msra.mxu0 %v3509
        %3531 = vmatpush.bf16.msra.mxu0 %v3508
        %3532 = vmatmul.bf16.gmra.mxu0 %v3453
        %v3533 = vpop.f32.mrf.mxu0
        %v3534 = vadd.f32 %v3474, %v3533
        %v3535 = vpop.f32.mrf.mxu0
        %3536 = vdwg.mxu0
        %v3537 = vadd.f32 %v3370, %v3534
        %3538 = vst.msk [vmem:[%s431] sm:$0xff] %vm440, %v3537
        %s3539 = sand.u32 %s313, 1
        %s3540 = scalar_lea.sflag [#allocation3], %s3539
        %s3541 = sand.u32 %s313, 1
        %s3542 = smul.addr %s3541, 8
        %s3543 = scalar_lea.vmem [#allocation2], %s3542
        // Predicated region
        $region73: #{tpu_custom_call.1} parent=71 // pred_check
          %p3544 = pneg %p323
        $region74: #{tpu_custom_call.1} parent=71 // pred_check_branch
          %3546 = sbr.rel (%p3544) target = $region76
        $region75: #{tpu_custom_call.1} parent=71 // pred_region
          %3548 = vsyncadd %s3540, 0
          %s3549 = smul.addr %s27, 8
          %s3550 = scalar_lea.hbm %s13, %s3549
          %s3552 = sshll.u32 %s3543, 4
          %s3553 = int_to_ptr.vmem [resolvable:$true] %s3552
          %s3554 = sshll.u32 %s3550, 4
          %s3555 = int_to_ptr.hbm [resolvable:$true] %s3554
          %3557 = dma.vmem_to_hbm [thread:$0]  %s3553, 128, %s3555, %s3540
        $region76: #{tpu_custom_call.1} parent=71 // pred_fallthru
          _
      $region72: #{tpu_custom_call.1} parent=5 // pred_fallthru
        _
      %p3558 = scmp.le.s32.totalorder 2, %s22
      // Predicated region
      $region77: #{tpu_custom_call.1} parent=5 // pred_check
        %p3559 = pneg %p3558
      $region78: #{tpu_custom_call.1} parent=5 // pred_check_branch
        %3561 = sbr.rel (%p3559) target = $region80
      $region79: #{tpu_custom_call.1} parent=5 // pred_region
        %s3562 = ssub.s32 %s22, 2
        // Predicated region
        $region81: #{tpu_custom_call.1} parent=79 // pred_check
          %p3563 = pneg %p329
        $region82: #{tpu_custom_call.1} parent=79 // pred_check_branch
          %3565 = sbr.rel (%p3563) target = $region84
        $region83: #{tpu_custom_call.1} parent=79 // pred_region
          %s3566 = sand.u32 %s314, 1
          %s3567 = scalar_lea.sflag [#allocation3], %s3566
          %s3568 = sand.u32 %s314, 1
          %s3569 = smul.addr %s3568, 8
          %s3570 = scalar_lea.vmem [#allocation2], %s3569
          %3572 = dma.done %s3567, 128
        $region84: #{tpu_custom_call.1} parent=79 // pred_fallthru
          _
      $region80: #{tpu_custom_call.1} parent=5 // pred_fallthru
        _
    $region6: #{tpu_custom_call.1} parent=1 // loop_footer
      %s26 = sadd.s32 1, %s22
    $region7: #{tpu_custom_call.1} parent=1 // loop_footer_branch
      %21 = sbr.rel target = $region3
    $region8: #{tpu_custom_call.1} parent=1 // loop_exit
      _
    %3573 = vsyncpa [#allocation3], 1
    %s3574 = scalar_lea.sflag [#allocation3], 1
    %3575 = vsyncpa %s3574, 1

</llo_original>
